<compile_context>
chip_gen: v6e
topology: v6e:2x2x1
jax: 0.10.0
libtpu: 0.0.40
codegen_flags: <defaults>
</compile_context>

<pallas_src>
import numpy as np
import jax
import jax.numpy as jnp
from jax.experimental import pallas as pl
from jax.experimental.pallas import tpu as pltpu

# ------------------------------------------------------------------ geometry (fixed by the 16*5*5 flatten)
S_IN, C_IN = 32, 3          # input spatial / channels
KSZ = 5                     # conv kernel size
S_C1, C_C1 = 28, 6          # conv1 output spatial / channels
S_C2, C_C2 = 10, 16         # conv2 output spatial / channels
S_P2 = 5                    # pool2 output spatial
N_FC1, N_FC2, N_CLS = 120, 84, 10
IN_LANES = S_IN * C_IN      # 96  (input row width; NOT padded to 128)
LANES = 128                 # lane width for all other packed matrices / outputs
ROWS_PER_IMG = S_IN         # 32 flat VMEM rows per image

MXU_DTYPE = jnp.float32     # jnp.bfloat16 on v5e/v6e/v7x for higher MXU throughput
B_TILE_DEFAULT = 32         # images per grid step (keep >=2 grid steps for megacore/v7x)


# ------------------------------------------------------------------ synthetic parameter init
def init_params(key):
    """Deterministic PyTorch-default-style uniform init (synthetic weights)."""
    keys = jax.random.split(key, 10)

    def u(k, shape, fan_in):
        bound = 1.0 / (fan_in ** 0.5)
        return jax.random.uniform(k, shape, jnp.float32, -bound, bound)

    return {
        "conv1_w": u(keys[0], (C_C1, C_IN, KSZ, KSZ), C_IN * KSZ * KSZ),
        "conv1_b": u(keys[1], (C_C1,), C_IN * KSZ * KSZ),
        "conv2_w": u(keys[2], (C_C2, C_C1, KSZ, KSZ), C_C1 * KSZ * KSZ),
        "conv2_b": u(keys[3], (C_C2,), C_C1 * KSZ * KSZ),
        "fc1_w": u(keys[4], (N_FC1, C_C2 * S_P2 * S_P2), C_C2 * S_P2 * S_P2),
        "fc1_b": u(keys[5], (N_FC1,), C_C2 * S_P2 * S_P2),
        "fc2_w": u(keys[6], (N_FC2, N_FC1), N_FC1),
        "fc2_b": u(keys[7], (N_FC2,), N_FC1),
        "fc3_w": u(keys[8], (N_CLS, N_FC2), N_FC2),
        "fc3_b": u(keys[9], (N_CLS,), N_FC2),
    }


# ------------------------------------------------------------------ one-time weight packing
def _conv_toeplitz(w, out_w, in_lanes):
    """Banded block-Toeplitz conv weights for the channels-last row layout.

    Activations: (row = h, lane = w*Cin + ci).  For each vertical offset ki,
        B[ki][(j+kj)*Cin + ci, j*Cout + co] = w[co, ci, ki, kj]
    so that    conv_out[h, :] = sum_ki  act_row[h+ki, :in_lanes] @ B[ki].
    """
    w = np.asarray(w, np.float32)
    cout, cin, k, _ = w.shape
    B = np.zeros((k, in_lanes, out_w * cout), np.float32)
    for ki in range(k):
        for kj in range(k):
            blk = w[:, :, ki, kj].T                      # (cin, cout)
            for j in range(out_w):
                B[ki, (j + kj) * cin:(j + kj) * cin + cin,
                  j * cout:j * cout + cout] = blk
    return B


def _pool_sel(in_w, c, out_lanes):
    """0/1 lane-selection matrices implementing the WIDTH half of 2x2/stride-2 maxpool.

    S[d] (in_w*c, out_lanes): lane (2*pj+d)*c+ch -> lane pj*c+ch
    width_pooled = max(x @ S[0], x @ S[1]);  the height half is a VPU max of
    two row-shifted reads inside the kernel (no matmul).
    """
    half = in_w // 2
    S = np.zeros((2, in_w * c, out_lanes), np.float32)
    for d in range(2):
        for pj in range(half):
            for ch in range(c):
                S[d, (2 * pj + d) * c + ch, pj * c + ch] = 1.0
    return S


def prepare_params(params, mxu_dtype=MXU_DTYPE):
    """Pack PyTorch-layout weights into lane-dense, MXU-ready matrices (done once)."""
    B1 = _conv_toeplitz(params["conv1_w"], S_C1, IN_LANES)           # (5,  96, 168)
    B2 = _conv_toeplitz(params["conv2_w"], S_C2, LANES)              # (5, 128, 160)
    S1 = _pool_sel(S_C1, C_C1, LANES)                                # (2, 168, 128)
    S2 = _pool_sel(S_C2, C_C2, LANES)                                # (2, 160, 128)

    b1 = np.tile(np.asarray(params["conv1_b"], np.float32), S_C1)[None]   # (1, 168)
    b2 = np.tile(np.asarray(params["conv2_b"], np.float32), S_C2)[None]   # (1, 160)

    # fc1: torch flattens pool2 in (C, H, W) order; our layout is row=h, lane=w*C+c.
    w1 = np.asarray(params["fc1_w"], np.float32).reshape(N_FC1, C_C2, S_P2, S_P2)
    w1 = w1.transpose(2, 3, 1, 0).reshape(S_P2, S_P2 * C_C2, N_FC1)       # (5, 80, 120)
    W1 = np.zeros((S_P2, LANES, LANES), np.float32)
    W1[:, :S_P2 * C_C2, :N_FC1] = w1
    bf1 = np.zeros((1, LANES), np.float32)
    bf1[0, :N_FC1] = np.asarray(params["fc1_b"], np.float32)

    W2 = np.zeros((LANES, LANES), np.float32)
    W2[:N_FC1, :N_FC2] = np.asarray(params["fc2_w"], np.float32).T
    bf2 = np.zeros((1, LANES), np.float32)
    bf2[0, :N_FC2] = np.asarray(params["fc2_b"], np.float32)

    # fc3 padded to 128 output lanes -> lane-dense output block (classes in lanes 0..9).
    W3 = np.zeros((LANES, LANES), np.float32)
    W3[:N_FC2, :N_CLS] = np.asarray(params["fc3_w"], np.float32).T
    bf3 = np.zeros((1, LANES), np.float32)
    bf3[0, :N_CLS] = np.asarray(params["fc3_b"], np.float32)

    f32 = jnp.float32
    return {
        "B1": jnp.asarray(B1, mxu_dtype), "b1": jnp.asarray(b1, f32),
        "S1": jnp.asarray(S1, mxu_dtype),
        "B2": jnp.asarray(B2, mxu_dtype), "b2": jnp.asarray(b2, f32),
        "S2": jnp.asarray(S2, mxu_dtype),
        "W1": jnp.asarray(W1, mxu_dtype), "bf1": jnp.asarray(bf1, f32),
        "W2": jnp.asarray(W2, mxu_dtype), "bf2": jnp.asarray(bf2, f32),
        "W3": jnp.asarray(W3, mxu_dtype), "bf3": jnp.asarray(bf3, f32),
    }


_WEIGHT_KEYS = ("B1", "b1", "S1", "B2", "b2", "S2",
                "W1", "bf1", "W2", "bf2", "W3", "bf3")


# ------------------------------------------------------------------ fused, batch-tiled forward
def fedavg_cnn_forward(prepped, x, b_tile=B_TILE_DEFAULT):
    """x: (N, 3, 32, 32) NCHW float32  ->  logits (N, 10) float32."""
    n = x.shape[0]
    bt = int(max(1, min(b_tile, n)))
    n_pad = ((n + bt - 1) // bt) * bt
    num_tiles = n_pad // bt

    # Flat layout: 32 VMEM rows per image.  Per-image row offsets:
    #   conv1 output row h            -> offset h        (valid h: 0..27)
    #   width-pooled conv1 (s1)       -> offset h        (pooled1 row p = max of offsets 2p, 2p+1)
    #   conv2 output row h            -> offset 2h       (valid h: 0..9, double spacing)
    #   width-pooled conv2 (s2)       -> offset 2h       (pooled2 row q = max of offsets 4q, 4q+2)
    # Rows between/after the valid ones hold harmless finite garbage and are never selected.
    F = bt * ROWS_PER_IMG                  # flat rows per grid step
    SZ1 = F - (KSZ - 1)                    # conv1 rows     (= F - 4)
    SZ2 = SZ1 - (2 * (KSZ - 1) + 1)        # conv2 rows     (= F - 13)
    SZ3 = SZ2 - (4 * (S_P2 - 1) + 2)       # fc1 row window (= F - 31)

    mxu_dtype = prepped["B1"].dtype

    # One-hot row-compaction matrix: picks flat row i*32 (image i) -> dense M = bt rows.
    sel_np = np.zeros((bt, SZ3), np.float32)
    sel_np[np.arange(bt), np.arange(bt) * ROWS_PER_IMG] = 1.0
    sel = jnp.asarray(sel_np, mxu_dtype)

    # NCHW -> flat channels-last rows: row = (img, h), lane = w*3 + c  (single wrapper pass, no lane pad).
    xr = jnp.transpose(x, (0, 2, 3, 1)).reshape(n, S_IN, IN_LANES)
    if n_pad != n:
        xr = jnp.pad(xr, ((0, n_pad - n), (0, 0), (0, 0)))
    xr = xr.reshape(n_pad * ROWS_PER_IMG, IN_LANES).astype(mxu_dtype)

    weights = [prepped[k] for k in _WEIGHT_KEYS] + [sel]

    def kernel(x_ref, B1_ref, b1_ref, S1_ref, B2_ref, b2_ref, S2_ref,
               W1_ref, bf1_ref, W2_ref, bf2_ref, W3_ref, bf3_ref, sel_ref,
               out_ref, s1, s2):
        # ---- conv1 + bias + ReLU (valid rows: per-image offsets 0..27) --------------
        acc = jnp.dot(x_ref[pl.ds(0, SZ1), :], B1_ref[0],
                      preferred_element_type=jnp.float32)
        for ki in range(1, KSZ):
            acc = acc + jnp.dot(x_ref[pl.ds(ki, SZ1), :], B1_ref[ki],
                                preferred_element_type=jnp.float32)
        a1 = jnp.maximum(acc + b1_ref[...], 0.0).astype(mxu_dtype)     # (SZ1, 168)

        # width half of maxpool1 (lane-selection matmuls); height half is deferred.
        mw1 = jnp.maximum(
            jnp.dot(a1, S1_ref[0], preferred_element_type=jnp.float32),
            jnp.dot(a1, S1_ref[1], preferred_element_type=jnp.float32))
        s1[...] = mw1.astype(s1.dtype)                                  # (SZ1, 128)

        # ---- conv2 + bias + ReLU; pooled1 row (h+ki) is read on the fly as a VPU max
        #      of two shifted scratch reads (height half of maxpool1). -----------------
        acc2 = None
        for ki in range(KSZ):
            hp = jnp.maximum(s1[pl.ds(2 * ki, SZ2), :],
                             s1[pl.ds(2 * ki + 1, SZ2), :])
            t = jnp.dot(hp, B2_ref[ki], preferred_element_type=jnp.float32)
            acc2 = t if acc2 is None else acc2 + t
        a2 = jnp.maximum(acc2 + b2_ref[...], 0.0).astype(mxu_dtype)     # (SZ2, 160)

        mw2 = jnp.maximum(
            jnp.dot(a2, S2_ref[0], preferred_element_type=jnp.float32),
            jnp.dot(a2, S2_ref[1], preferred_element_type=jnp.float32))
        s2[...] = mw2.astype(s2.dtype)                                  # (SZ2, 128)

        # ---- fc1: pooled2 row q of image i = max(s2[i*32+4q], s2[i*32+4q+2]);
        #      one-hot sel matmul compacts to one dense row per image. ----------------
        h1 = bf1_ref[...]                                               # (1, 128) -> broadcast
        for q in range(S_P2):
            hp = jnp.maximum(s2[pl.ds(4 * q, SZ3), :],
                             s2[pl.ds(4 * q + 2, SZ3), :])
            row = jnp.dot(sel_ref[...], hp,
                          preferred_element_type=jnp.float32)           # (bt, 128)
            h1 = h1 + jnp.dot(row.astype(mxu_dtype), W1_ref[q],
                              preferred_element_type=jnp.float32)
        h1 = jnp.maximum(h1, 0.0).astype(mxu_dtype)                     # (bt, 128)

        # ---- fc2 + ReLU, fc3 (lane-dense 128-wide output; classes in lanes 0..9) ----
        h2 = jnp.maximum(jnp.dot(h1, W2_ref[...],
                                 preferred_element_type=jnp.float32) + bf2_ref[...],
                         0.0).astype(mxu_dtype)
        out_ref[...] = (jnp.dot(h2, W3_ref[...],
                                preferred_element_type=jnp.float32)
                        + bf3_ref[...]).astype(out_ref.dtype)           # (bt, 128)

    def _resident(a):
        # Whole array resident in VMEM for the entire grid (constant block index).
        nd = a.ndim
        return pl.BlockSpec(a.shape, lambda i, _nd=nd: (0,) * _nd)

    out = pl.pallas_call(
        kernel,
        out_shape=jax.ShapeDtypeStruct((num_tiles, bt, LANES), jnp.float32),
        grid_spec=pltpu.PrefetchScalarGridSpec(
            num_scalar_prefetch=0,
            grid=(num_tiles,),
            in_specs=[pl.BlockSpec((F, IN_LANES), lambda i: (i, 0))]
                     + [_resident(w) for w in weights],
            out_specs=pl.BlockSpec((None, bt, LANES), lambda i: (i, 0, 0)),
            scratch_shapes=[pltpu.VMEM((SZ1, LANES), mxu_dtype),   # width-pooled conv1
                            pltpu.VMEM((SZ2, LANES), mxu_dtype)],  # width-pooled conv2
        ),
        compiler_params=pltpu.CompilerParams(
            dimension_semantics=("parallel",),        # batch tiles independent -> megacore / 2 TCs
            vmem_limit_bytes=32 * 1024 * 1024,
        ),
    )(xr, *weights)

    return out.reshape(n_pad, LANES)[:n, :N_CLS]


# ------------------------------------------------------------------ pure-JAX reference (sanity check)
def _reference_forward(params, x):
    hp = jax.lax.Precision.HIGHEST
    y = jax.lax.conv_general_dilated(
        x, params["conv1_w"], (1, 1), "VALID",
        dimension_numbers=("NCHW", "OIHW", "NCHW"), precision=hp)
    y = jax.nn.relu(y + params["conv1_b"][None, :, None, None])
    y = jax.lax.reduce_window(y, -jnp.inf, jax.lax.max, (1, 1, 2, 2), (1, 1, 2, 2), "VALID")
    y = jax.lax.conv_general_dilated(
        y, params["conv2_w"], (1, 1), "VALID",
        dimension_numbers=("NCHW", "OIHW", "NCHW"), precision=hp)
    y = jax.nn.relu(y + params["conv2_b"][None, :, None, None])
    y = jax.lax.reduce_window(y, -jnp.inf, jax.lax.max, (1, 1, 2, 2), (1, 1, 2, 2), "VALID")
    y = y.reshape(y.shape[0], -1)                                   # torch .view(-1, 400) order
    y = jax.nn.relu(jnp.dot(y, params["fc1_w"].T, precision=hp) + params["fc1_b"])
    y = jax.nn.relu(jnp.dot(y, params["fc2_w"].T, precision=hp) + params["fc2_b"])
    return jnp.dot(y, params["fc3_w"].T, precision=hp) + params["fc3_b"]


if __name__ == "__main__":
    key = jax.random.PRNGKey(0)
    pkey, xkey = jax.random.split(key)
    params = init_params(pkey)
    prepped = prepare_params(params)          # one-time weight packing

    is_f32 = (prepped["B1"].dtype == jnp.float32)
    tol = 2e-2 if is_f32 else 0.5

    fwd = jax.jit(fedavg_cnn_forward, static_argnames=("b_tile",))

    # Spatial size 32x32 / 3 channels is forced by the 16*5*5 flatten in the module.
    x = jax.random.normal(xkey, (2, 3, 32, 32), jnp.float32)
    out = jax.block_until_ready(fwd(prepped, x))
    assert out.shape == (2, N_CLS) and out.dtype == jnp.float32
    ref = jax.block_until_ready(_reference_forward(params, x))
    err = float(jnp.max(jnp.abs(out - ref)))
    if is_f32:
        assert err < tol, f"max |pallas - reference| = {err}"
    else:
        assert err < tol and bool(jnp.all(jnp.argmax(out, -1) == jnp.argmax(ref, -1)))

    # Multi-step grid + batch-padding path: n=5 with b_tile=2 -> padded to 6 images, 3 grid steps.
    x2 = jax.random.normal(jax.random.fold_in(xkey, 1), (5, 3, 32, 32), jnp.float32)
    out2 = jax.block_until_ready(fwd(prepped, x2, b_tile=2))
    ref2 = jax.block_until_ready(_reference_forward(params, x2))
    err2 = float(jnp.max(jnp.abs(out2 - ref2)))
    if is_f32:
        assert err2 < tol, f"max |pallas - reference| = {err2}"
    else:
        assert err2 < tol and bool(jnp.all(jnp.argmax(out2, -1) == jnp.argmax(ref2, -1)))

    print("KERNEL_OK")
</pallas_src>

<mosaic_0001>
module attributes {stable_mosaic.version = 11 : i64} {
  func.func @kernel(%arg0: i32, %arg1: memref<64x96xf32, #tpu.memory_space<vmem>>, %arg2: memref<5x96x168xf32, #tpu.memory_space<vmem>>, %arg3: memref<1x168xf32, #tpu.memory_space<vmem>>, %arg4: memref<2x168x128xf32, #tpu.memory_space<vmem>>, %arg5: memref<5x128x160xf32, #tpu.memory_space<vmem>>, %arg6: memref<1x160xf32, #tpu.memory_space<vmem>>, %arg7: memref<2x160x128xf32, #tpu.memory_space<vmem>>, %arg8: memref<5x128x128xf32, #tpu.memory_space<vmem>>, %arg9: memref<1x128xf32, #tpu.memory_space<vmem>>, %arg10: memref<128x128xf32, #tpu.memory_space<vmem>>, %arg11: memref<1x128xf32, #tpu.memory_space<vmem>>, %arg12: memref<128x128xf32, #tpu.memory_space<vmem>>, %arg13: memref<1x128xf32, #tpu.memory_space<vmem>>, %arg14: memref<2x33xf32, #tpu.memory_space<vmem>>, %arg15: memref<1x2x128xf32, #tpu.memory_space<vmem>>, %arg16: memref<60x128xf32, #tpu.memory_space<vmem>>, %arg17: memref<51x128xf32, #tpu.memory_space<vmem>>) attributes {dimension_semantics = [#tpu.dimension_semantics<parallel>], iteration_bounds = array<i64: 1>, scalar_prefetch = 0 : i64, scratch_operands = 2 : i64, tpu.core_type = #tpu.core_type<tc>, window_params = [{transform_indices = @transform_0, window_bounds = array<i64: 64, 96>}, {pipeline_mode = #tpu.pipeline_mode<synchronous>, transform_indices = @transform_1, window_bounds = array<i64: 5, 96, 168>}, {pipeline_mode = #tpu.pipeline_mode<synchronous>, transform_indices = @transform_2, window_bounds = array<i64: 1, 168>}, {pipeline_mode = #tpu.pipeline_mode<synchronous>, transform_indices = @transform_3, window_bounds = array<i64: 2, 168, 128>}, {pipeline_mode = #tpu.pipeline_mode<synchronous>, transform_indices = @transform_4, window_bounds = array<i64: 5, 128, 160>}, {pipeline_mode = #tpu.pipeline_mode<synchronous>, transform_indices = @transform_5, window_bounds = array<i64: 1, 160>}, {pipeline_mode = #tpu.pipeline_mode<synchronous>, transform_indices = @transform_6, window_bounds = array<i64: 2, 160, 128>}, {pipeline_mode = #tpu.pipeline_mode<synchronous>, transform_indices = @transform_7, window_bounds = array<i64: 5, 128, 128>}, {pipeline_mode = #tpu.pipeline_mode<synchronous>, transform_indices = @transform_8, window_bounds = array<i64: 1, 128>}, {pipeline_mode = #tpu.pipeline_mode<synchronous>, transform_indices = @transform_9, window_bounds = array<i64: 128, 128>}, {pipeline_mode = #tpu.pipeline_mode<synchronous>, transform_indices = @transform_10, window_bounds = array<i64: 1, 128>}, {pipeline_mode = #tpu.pipeline_mode<synchronous>, transform_indices = @transform_11, window_bounds = array<i64: 128, 128>}, {pipeline_mode = #tpu.pipeline_mode<synchronous>, transform_indices = @transform_12, window_bounds = array<i64: 1, 128>}, {pipeline_mode = #tpu.pipeline_mode<synchronous>, transform_indices = @transform_13, window_bounds = array<i64: 2, 33>}, {transform_indices = @transform_14, window_bounds = array<i64: 1, 2, 128>}]} {
    %c0 = arith.constant 0 : index
    %c0_0 = arith.constant 0 : index
    %0 = vector.load %arg1[%c0, %c0_0] : memref<64x96xf32, #tpu.memory_space<vmem>>, vector<60x96xf32>
    %c0_1 = arith.constant 0 : index
    %c0_2 = arith.constant 0 : index
    %c0_3 = arith.constant 0 : index
    %1 = vector.load %arg2[%c0_1, %c0_2, %c0_3] : memref<5x96x168xf32, #tpu.memory_space<vmem>>, vector<1x96x168xf32>
    %2 = vector.shape_cast %1 : vector<1x96x168xf32> to vector<96x168xf32>
    %cst = arith.constant dense<0.000000e+00> : vector<60x168xf32>
    %3 = tpu.matmul %0, %2, %cst {dimension_numbers = #tpu.dot_dimension_numbers<[1], [0], [0], [1], [0, 0, 1, 1], [], []>} : vector<60x96xf32>, vector<96x168xf32>, vector<60x168xf32> -> vector<60x168xf32>
    %c1 = arith.constant 1 : index
    %c0_4 = arith.constant 0 : index
    %4 = vector.load %arg1[%c1, %c0_4] : memref<64x96xf32, #tpu.memory_space<vmem>>, vector<60x96xf32>
    %c1_5 = arith.constant 1 : index
    %c0_6 = arith.constant 0 : index
    %c0_7 = arith.constant 0 : index
    %5 = vector.load %arg2[%c1_5, %c0_6, %c0_7] : memref<5x96x168xf32, #tpu.memory_space<vmem>>, vector<1x96x168xf32>
    %6 = vector.shape_cast %5 : vector<1x96x168xf32> to vector<96x168xf32>
    %cst_8 = arith.constant dense<0.000000e+00> : vector<60x168xf32>
    %7 = tpu.matmul %4, %6, %cst_8 {dimension_numbers = #tpu.dot_dimension_numbers<[1], [0], [0], [1], [0, 0, 1, 1], [], []>} : vector<60x96xf32>, vector<96x168xf32>, vector<60x168xf32> -> vector<60x168xf32>
    %8 = arith.addf %3, %7 : vector<60x168xf32>
    %c2 = arith.constant 2 : index
    %c0_9 = arith.constant 0 : index
    %9 = vector.load %arg1[%c2, %c0_9] : memref<64x96xf32, #tpu.memory_space<vmem>>, vector<60x96xf32>
    %c2_10 = arith.constant 2 : index
    %c0_11 = arith.constant 0 : index
    %c0_12 = arith.constant 0 : index
    %10 = vector.load %arg2[%c2_10, %c0_11, %c0_12] : memref<5x96x168xf32, #tpu.memory_space<vmem>>, vector<1x96x168xf32>
    %11 = vector.shape_cast %10 : vector<1x96x168xf32> to vector<96x168xf32>
    %cst_13 = arith.constant dense<0.000000e+00> : vector<60x168xf32>
    %12 = tpu.matmul %9, %11, %cst_13 {dimension_numbers = #tpu.dot_dimension_numbers<[1], [0], [0], [1], [0, 0, 1, 1], [], []>} : vector<60x96xf32>, vector<96x168xf32>, vector<60x168xf32> -> vector<60x168xf32>
    %13 = arith.addf %8, %12 : vector<60x168xf32>
    %c3 = arith.constant 3 : index
    %c0_14 = arith.constant 0 : index
    %14 = vector.load %arg1[%c3, %c0_14] : memref<64x96xf32, #tpu.memory_space<vmem>>, vector<60x96xf32>
    %c3_15 = arith.constant 3 : index
    %c0_16 = arith.constant 0 : index
    %c0_17 = arith.constant 0 : index
    %15 = vector.load %arg2[%c3_15, %c0_16, %c0_17] : memref<5x96x168xf32, #tpu.memory_space<vmem>>, vector<1x96x168xf32>
    %16 = vector.shape_cast %15 : vector<1x96x168xf32> to vector<96x168xf32>
    %cst_18 = arith.constant dense<0.000000e+00> : vector<60x168xf32>
    %17 = tpu.matmul %14, %16, %cst_18 {dimension_numbers = #tpu.dot_dimension_numbers<[1], [0], [0], [1], [0, 0, 1, 1], [], []>} : vector<60x96xf32>, vector<96x168xf32>, vector<60x168xf32> -> vector<60x168xf32>
    %18 = arith.addf %13, %17 : vector<60x168xf32>
    %c4 = arith.constant 4 : index
    %c0_19 = arith.constant 0 : index
    %19 = vector.load %arg1[%c4, %c0_19] : memref<64x96xf32, #tpu.memory_space<vmem>>, vector<60x96xf32>
    %c4_20 = arith.constant 4 : index
    %c0_21 = arith.constant 0 : index
    %c0_22 = arith.constant 0 : index
    %20 = vector.load %arg2[%c4_20, %c0_21, %c0_22] : memref<5x96x168xf32, #tpu.memory_space<vmem>>, vector<1x96x168xf32>
    %21 = vector.shape_cast %20 : vector<1x96x168xf32> to vector<96x168xf32>
    %cst_23 = arith.constant dense<0.000000e+00> : vector<60x168xf32>
    %22 = tpu.matmul %19, %21, %cst_23 {dimension_numbers = #tpu.dot_dimension_numbers<[1], [0], [0], [1], [0, 0, 1, 1], [], []>} : vector<60x96xf32>, vector<96x168xf32>, vector<60x168xf32> -> vector<60x168xf32>
    %23 = arith.addf %18, %22 : vector<60x168xf32>
    %c0_24 = arith.constant 0 : index
    %c0_25 = arith.constant 0 : index
    %24 = vector.load %arg3[%c0_24, %c0_25] : memref<1x168xf32, #tpu.memory_space<vmem>>, vector<1x168xf32>
    %25 = vector.broadcast %24 : vector<1x168xf32> to vector<60x168xf32>
    %26 = arith.addf %23, %25 : vector<60x168xf32>
    %cst_26 = arith.constant 0.000000e+00 : f32
    %27 = vector.broadcast %cst_26 : f32 to vector<60x168xf32>
    %28 = arith.maximumf %26, %27 : vector<60x168xf32>
    %c0_27 = arith.constant 0 : index
    %c0_28 = arith.constant 0 : index
    %c0_29 = arith.constant 0 : index
    %29 = vector.load %arg4[%c0_27, %c0_28, %c0_29] : memref<2x168x128xf32, #tpu.memory_space<vmem>>, vector<1x168x128xf32>
    %30 = vector.shape_cast %29 : vector<1x168x128xf32> to vector<168x128xf32>
    %cst_30 = arith.constant dense<0.000000e+00> : vector<60x128xf32>
    %31 = tpu.matmul %28, %30, %cst_30 {dimension_numbers = #tpu.dot_dimension_numbers<[1], [0], [0], [1], [0, 0, 1, 1], [], []>} : vector<60x168xf32>, vector<168x128xf32>, vector<60x128xf32> -> vector<60x128xf32>
    %c1_31 = arith.constant 1 : index
    %c0_32 = arith.constant 0 : index
    %c0_33 = arith.constant 0 : index
    %32 = vector.load %arg4[%c1_31, %c0_32, %c0_33] : memref<2x168x128xf32, #tpu.memory_space<vmem>>, vector<1x168x128xf32>
    %33 = vector.shape_cast %32 : vector<1x168x128xf32> to vector<168x128xf32>
    %cst_34 = arith.constant dense<0.000000e+00> : vector<60x128xf32>
    %34 = tpu.matmul %28, %33, %cst_34 {dimension_numbers = #tpu.dot_dimension_numbers<[1], [0], [0], [1], [0, 0, 1, 1], [], []>} : vector<60x168xf32>, vector<168x128xf32>, vector<60x128xf32> -> vector<60x128xf32>
    %35 = arith.maximumf %31, %34 : vector<60x128xf32>
    %c0_35 = arith.constant 0 : index
    %c0_36 = arith.constant 0 : index
    %36 = vector.load %arg16[%c0_35, %c0_36] : memref<60x128xf32, #tpu.memory_space<vmem>>, vector<60x128xf32>
    tpu.vector_store %arg16[%c0_35, %c0_36], %35 {strides = array<i32>} : memref<60x128xf32, #tpu.memory_space<vmem>>, vector<60x128xf32>,
    %c0_37 = arith.constant 0 : index
    %c0_38 = arith.constant 0 : index
    %37 = vector.load %arg16[%c0_37, %c0_38] : memref<60x128xf32, #tpu.memory_space<vmem>>, vector<51x128xf32>
    %c1_39 = arith.constant 1 : index
    %c0_40 = arith.constant 0 : index
    %38 = vector.load %arg16[%c1_39, %c0_40] : memref<60x128xf32, #tpu.memory_space<vmem>>, vector<51x128xf32>
    %39 = arith.maximumf %37, %38 : vector<51x128xf32>
    %c0_41 = arith.constant 0 : index
    %c0_42 = arith.constant 0 : index
    %c0_43 = arith.constant 0 : index
    %40 = vector.load %arg5[%c0_41, %c0_42, %c0_43] : memref<5x128x160xf32, #tpu.memory_space<vmem>>, vector<1x128x160xf32>
    %41 = vector.shape_cast %40 : vector<1x128x160xf32> to vector<128x160xf32>
    %cst_44 = arith.constant dense<0.000000e+00> : vector<51x160xf32>
    %42 = tpu.matmul %39, %41, %cst_44 {dimension_numbers = #tpu.dot_dimension_numbers<[1], [0], [0], [1], [0, 0, 1, 1], [], []>} : vector<51x128xf32>, vector<128x160xf32>, vector<51x160xf32> -> vector<51x160xf32>
    %c2_45 = arith.constant 2 : index
    %c0_46 = arith.constant 0 : index
    %43 = vector.load %arg16[%c2_45, %c0_46] : memref<60x128xf32, #tpu.memory_space<vmem>>, vector<51x128xf32>
    %c3_47 = arith.constant 3 : index
    %c0_48 = arith.constant 0 : index
    %44 = vector.load %arg16[%c3_47, %c0_48] : memref<60x128xf32, #tpu.memory_space<vmem>>, vector<51x128xf32>
    %45 = arith.maximumf %43, %44 : vector<51x128xf32>
    %c1_49 = arith.constant 1 : index
    %c0_50 = arith.constant 0 : index
    %c0_51 = arith.constant 0 : index
    %46 = vector.load %arg5[%c1_49, %c0_50, %c0_51] : memref<5x128x160xf32, #tpu.memory_space<vmem>>, vector<1x128x160xf32>
    %47 = vector.shape_cast %46 : vector<1x128x160xf32> to vector<128x160xf32>
    %cst_52 = arith.constant dense<0.000000e+00> : vector<51x160xf32>
    %48 = tpu.matmul %45, %47, %cst_52 {dimension_numbers = #tpu.dot_dimension_numbers<[1], [0], [0], [1], [0, 0, 1, 1], [], []>} : vector<51x128xf32>, vector<128x160xf32>, vector<51x160xf32> -> vector<51x160xf32>
    %49 = arith.addf %42, %48 : vector<51x160xf32>
    %c4_53 = arith.constant 4 : index
    %c0_54 = arith.constant 0 : index
    %50 = vector.load %arg16[%c4_53, %c0_54] : memref<60x128xf32, #tpu.memory_space<vmem>>, vector<51x128xf32>
    %c5 = arith.constant 5 : index
    %c0_55 = arith.constant 0 : index
    %51 = vector.load %arg16[%c5, %c0_55] : memref<60x128xf32, #tpu.memory_space<vmem>>, vector<51x128xf32>
    %52 = arith.maximumf %50, %51 : vector<51x128xf32>
    %c2_56 = arith.constant 2 : index
    %c0_57 = arith.constant 0 : index
    %c0_58 = arith.constant 0 : index
    %53 = vector.load %arg5[%c2_56, %c0_57, %c0_58] : memref<5x128x160xf32, #tpu.memory_space<vmem>>, vector<1x128x160xf32>
    %54 = vector.shape_cast %53 : vector<1x128x160xf32> to vector<128x160xf32>
    %cst_59 = arith.constant dense<0.000000e+00> : vector<51x160xf32>
    %55 = tpu.matmul %52, %54, %cst_59 {dimension_numbers = #tpu.dot_dimension_numbers<[1], [0], [0], [1], [0, 0, 1, 1], [], []>} : vector<51x128xf32>, vector<128x160xf32>, vector<51x160xf32> -> vector<51x160xf32>
    %56 = arith.addf %49, %55 : vector<51x160xf32>
    %c6 = arith.constant 6 : index
    %c0_60 = arith.constant 0 : index
    %57 = vector.load %arg16[%c6, %c0_60] : memref<60x128xf32, #tpu.memory_space<vmem>>, vector<51x128xf32>
    %c7 = arith.constant 7 : index
    %c0_61 = arith.constant 0 : index
    %58 = vector.load %arg16[%c7, %c0_61] : memref<60x128xf32, #tpu.memory_space<vmem>>, vector<51x128xf32>
    %59 = arith.maximumf %57, %58 : vector<51x128xf32>
    %c3_62 = arith.constant 3 : index
    %c0_63 = arith.constant 0 : index
    %c0_64 = arith.constant 0 : index
    %60 = vector.load %arg5[%c3_62, %c0_63, %c0_64] : memref<5x128x160xf32, #tpu.memory_space<vmem>>, vector<1x128x160xf32>
    %61 = vector.shape_cast %60 : vector<1x128x160xf32> to vector<128x160xf32>
    %cst_65 = arith.constant dense<0.000000e+00> : vector<51x160xf32>
    %62 = tpu.matmul %59, %61, %cst_65 {dimension_numbers = #tpu.dot_dimension_numbers<[1], [0], [0], [1], [0, 0, 1, 1], [], []>} : vector<51x128xf32>, vector<128x160xf32>, vector<51x160xf32> -> vector<51x160xf32>
    %63 = arith.addf %56, %62 : vector<51x160xf32>
    %c8 = arith.constant 8 : index
    %c0_66 = arith.constant 0 : index
    %64 = vector.load %arg16[%c8, %c0_66] : memref<60x128xf32, #tpu.memory_space<vmem>>, vector<51x128xf32>
    %c9 = arith.constant 9 : index
    %c0_67 = arith.constant 0 : index
    %65 = vector.load %arg16[%c9, %c0_67] : memref<60x128xf32, #tpu.memory_space<vmem>>, vector<51x128xf32>
    %66 = arith.maximumf %64, %65 : vector<51x128xf32>
    %c4_68 = arith.constant 4 : index
    %c0_69 = arith.constant 0 : index
    %c0_70 = arith.constant 0 : index
    %67 = vector.load %arg5[%c4_68, %c0_69, %c0_70] : memref<5x128x160xf32, #tpu.memory_space<vmem>>, vector<1x128x160xf32>
    %68 = vector.shape_cast %67 : vector<1x128x160xf32> to vector<128x160xf32>
    %cst_71 = arith.constant dense<0.000000e+00> : vector<51x160xf32>
    %69 = tpu.matmul %66, %68, %cst_71 {dimension_numbers = #tpu.dot_dimension_numbers<[1], [0], [0], [1], [0, 0, 1, 1], [], []>} : vector<51x128xf32>, vector<128x160xf32>, vector<51x160xf32> -> vector<51x160xf32>
    %70 = arith.addf %63, %69 : vector<51x160xf32>
    %c0_72 = arith.constant 0 : index
    %c0_73 = arith.constant 0 : index
    %71 = vector.load %arg6[%c0_72, %c0_73] : memref<1x160xf32, #tpu.memory_space<vmem>>, vector<1x160xf32>
    %72 = vector.broadcast %71 : vector<1x160xf32> to vector<51x160xf32>
    %73 = arith.addf %70, %72 : vector<51x160xf32>
    %cst_74 = arith.constant 0.000000e+00 : f32
    %74 = vector.broadcast %cst_74 : f32 to vector<51x160xf32>
    %75 = arith.maximumf %73, %74 : vector<51x160xf32>
    %c0_75 = arith.constant 0 : index
    %c0_76 = arith.constant 0 : index
    %c0_77 = arith.constant 0 : index
    %76 = vector.load %arg7[%c0_75, %c0_76, %c0_77] : memref<2x160x128xf32, #tpu.memory_space<vmem>>, vector<1x160x128xf32>
    %77 = vector.shape_cast %76 : vector<1x160x128xf32> to vector<160x128xf32>
    %cst_78 = arith.constant dense<0.000000e+00> : vector<51x128xf32>
    %78 = tpu.matmul %75, %77, %cst_78 {dimension_numbers = #tpu.dot_dimension_numbers<[1], [0], [0], [1], [0, 0, 1, 1], [], []>} : vector<51x160xf32>, vector<160x128xf32>, vector<51x128xf32> -> vector<51x128xf32>
    %c1_79 = arith.constant 1 : index
    %c0_80 = arith.constant 0 : index
    %c0_81 = arith.constant 0 : index
    %79 = vector.load %arg7[%c1_79, %c0_80, %c0_81] : memref<2x160x128xf32, #tpu.memory_space<vmem>>, vector<1x160x128xf32>
    %80 = vector.shape_cast %79 : vector<1x160x128xf32> to vector<160x128xf32>
    %cst_82 = arith.constant dense<0.000000e+00> : vector<51x128xf32>
    %81 = tpu.matmul %75, %80, %cst_82 {dimension_numbers = #tpu.dot_dimension_numbers<[1], [0], [0], [1], [0, 0, 1, 1], [], []>} : vector<51x160xf32>, vector<160x128xf32>, vector<51x128xf32> -> vector<51x128xf32>
    %82 = arith.maximumf %78, %81 : vector<51x128xf32>
    %c0_83 = arith.constant 0 : index
    %c0_84 = arith.constant 0 : index
    %83 = vector.load %arg17[%c0_83, %c0_84] : memref<51x128xf32, #tpu.memory_space<vmem>>, vector<51x128xf32>
    tpu.vector_store %arg17[%c0_83, %c0_84], %82 {strides = array<i32>} : memref<51x128xf32, #tpu.memory_space<vmem>>, vector<51x128xf32>,
    %c0_85 = arith.constant 0 : index
    %c0_86 = arith.constant 0 : index
    %84 = vector.load %arg9[%c0_85, %c0_86] : memref<1x128xf32, #tpu.memory_space<vmem>>, vector<1x128xf32>
    %c0_87 = arith.constant 0 : index
    %c0_88 = arith.constant 0 : index
    %85 = vector.load %arg17[%c0_87, %c0_88] : memref<51x128xf32, #tpu.memory_space<vmem>>, vector<33x128xf32>
    %c2_89 = arith.constant 2 : index
    %c0_90 = arith.constant 0 : index
    %86 = vector.load %arg17[%c2_89, %c0_90] : memref<51x128xf32, #tpu.memory_space<vmem>>, vector<33x128xf32>
    %87 = arith.maximumf %85, %86 : vector<33x128xf32>
    %c0_91 = arith.constant 0 : index
    %c0_92 = arith.constant 0 : index
    %88 = vector.load %arg14[%c0_91, %c0_92] : memref<2x33xf32, #tpu.memory_space<vmem>>, vector<2x33xf32>
    %cst_93 = arith.constant dense<0.000000e+00> : vector<2x128xf32>
    %89 = tpu.matmul %88, %87, %cst_93 {dimension_numbers = #tpu.dot_dimension_numbers<[1], [0], [0], [1], [0, 0, 1, 1], [], []>} : vector<2x33xf32>, vector<33x128xf32>, vector<2x128xf32> -> vector<2x128xf32>
    %c0_94 = arith.constant 0 : index
    %c0_95 = arith.constant 0 : index
    %c0_96 = arith.constant 0 : index
    %90 = vector.load %arg8[%c0_94, %c0_95, %c0_96] : memref<5x128x128xf32, #tpu.memory_space<vmem>>, vector<1x128x128xf32>
    %91 = vector.shape_cast %90 : vector<1x128x128xf32> to vector<128x128xf32>
    %cst_97 = arith.constant dense<0.000000e+00> : vector<2x128xf32>
    %92 = tpu.matmul %89, %91, %cst_97 {dimension_numbers = #tpu.dot_dimension_numbers<[1], [0], [0], [1], [0, 0, 1, 1], [], []>} : vector<2x128xf32>, vector<128x128xf32>, vector<2x128xf32> -> vector<2x128xf32>
    %93 = vector.broadcast %84 : vector<1x128xf32> to vector<2x128xf32>
    %94 = arith.addf %93, %92 : vector<2x128xf32>
    %c4_98 = arith.constant 4 : index
    %c0_99 = arith.constant 0 : index
    %95 = vector.load %arg17[%c4_98, %c0_99] : memref<51x128xf32, #tpu.memory_space<vmem>>, vector<33x128xf32>
    %c6_100 = arith.constant 6 : index
    %c0_101 = arith.constant 0 : index
    %96 = vector.load %arg17[%c6_100, %c0_101] : memref<51x128xf32, #tpu.memory_space<vmem>>, vector<33x128xf32>
    %97 = arith.maximumf %95, %96 : vector<33x128xf32>
    %c0_102 = arith.constant 0 : index
    %c0_103 = arith.constant 0 : index
    %98 = vector.load %arg14[%c0_102, %c0_103] : memref<2x33xf32, #tpu.memory_space<vmem>>, vector<2x33xf32>
    %cst_104 = arith.constant dense<0.000000e+00> : vector<2x128xf32>
    %99 = tpu.matmul %98, %97, %cst_104 {dimension_numbers = #tpu.dot_dimension_numbers<[1], [0], [0], [1], [0, 0, 1, 1], [], []>} : vector<2x33xf32>, vector<33x128xf32>, vector<2x128xf32> -> vector<2x128xf32>
    %c1_105 = arith.constant 1 : index
    %c0_106 = arith.constant 0 : index
    %c0_107 = arith.constant 0 : index
    %100 = vector.load %arg8[%c1_105, %c0_106, %c0_107] : memref<5x128x128xf32, #tpu.memory_space<vmem>>, vector<1x128x128xf32>
    %101 = vector.shape_cast %100 : vector<1x128x128xf32> to vector<128x128xf32>
    %cst_108 = arith.constant dense<0.000000e+00> : vector<2x128xf32>
    %102 = tpu.matmul %99, %101, %cst_108 {dimension_numbers = #tpu.dot_dimension_numbers<[1], [0], [0], [1], [0, 0, 1, 1], [], []>} : vector<2x128xf32>, vector<128x128xf32>, vector<2x128xf32> -> vector<2x128xf32>
    %103 = arith.addf %94, %102 : vector<2x128xf32>
    %c8_109 = arith.constant 8 : index
    %c0_110 = arith.constant 0 : index
    %104 = vector.load %arg17[%c8_109, %c0_110] : memref<51x128xf32, #tpu.memory_space<vmem>>, vector<33x128xf32>
    %c10 = arith.constant 10 : index
    %c0_111 = arith.constant 0 : index
    %105 = vector.load %arg17[%c10, %c0_111] : memref<51x128xf32, #tpu.memory_space<vmem>>, vector<33x128xf32>
    %106 = arith.maximumf %104, %105 : vector<33x128xf32>
    %c0_112 = arith.constant 0 : index
    %c0_113 = arith.constant 0 : index
    %107 = vector.load %arg14[%c0_112, %c0_113] : memref<2x33xf32, #tpu.memory_space<vmem>>, vector<2x33xf32>
    %cst_114 = arith.constant dense<0.000000e+00> : vector<2x128xf32>
    %108 = tpu.matmul %107, %106, %cst_114 {dimension_numbers = #tpu.dot_dimension_numbers<[1], [0], [0], [1], [0, 0, 1, 1], [], []>} : vector<2x33xf32>, vector<33x128xf32>, vector<2x128xf32> -> vector<2x128xf32>
    %c2_115 = arith.constant 2 : index
    %c0_116 = arith.constant 0 : index
    %c0_117 = arith.constant 0 : index
    %109 = vector.load %arg8[%c2_115, %c0_116, %c0_117] : memref<5x128x128xf32, #tpu.memory_space<vmem>>, vector<1x128x128xf32>
    %110 = vector.shape_cast %109 : vector<1x128x128xf32> to vector<128x128xf32>
    %cst_118 = arith.constant dense<0.000000e+00> : vector<2x128xf32>
    %111 = tpu.matmul %108, %110, %cst_118 {dimension_numbers = #tpu.dot_dimension_numbers<[1], [0], [0], [1], [0, 0, 1, 1], [], []>} : vector<2x128xf32>, vector<128x128xf32>, vector<2x128xf32> -> vector<2x128xf32>
    %112 = arith.addf %103, %111 : vector<2x128xf32>
    %c12 = arith.constant 12 : index
    %c0_119 = arith.constant 0 : index
    %113 = vector.load %arg17[%c12, %c0_119] : memref<51x128xf32, #tpu.memory_space<vmem>>, vector<33x128xf32>
    %c14 = arith.constant 14 : index
    %c0_120 = arith.constant 0 : index
    %114 = vector.load %arg17[%c14, %c0_120] : memref<51x128xf32, #tpu.memory_space<vmem>>, vector<33x128xf32>
    %115 = arith.maximumf %113, %114 : vector<33x128xf32>
    %c0_121 = arith.constant 0 : index
    %c0_122 = arith.constant 0 : index
    %116 = vector.load %arg14[%c0_121, %c0_122] : memref<2x33xf32, #tpu.memory_space<vmem>>, vector<2x33xf32>
    %cst_123 = arith.constant dense<0.000000e+00> : vector<2x128xf32>
    %117 = tpu.matmul %116, %115, %cst_123 {dimension_numbers = #tpu.dot_dimension_numbers<[1], [0], [0], [1], [0, 0, 1, 1], [], []>} : vector<2x33xf32>, vector<33x128xf32>, vector<2x128xf32> -> vector<2x128xf32>
    %c3_124 = arith.constant 3 : index
    %c0_125 = arith.constant 0 : index
    %c0_126 = arith.constant 0 : index
    %118 = vector.load %arg8[%c3_124, %c0_125, %c0_126] : memref<5x128x128xf32, #tpu.memory_space<vmem>>, vector<1x128x128xf32>
    %119 = vector.shape_cast %118 : vector<1x128x128xf32> to vector<128x128xf32>
    %cst_127 = arith.constant dense<0.000000e+00> : vector<2x128xf32>
    %120 = tpu.matmul %117, %119, %cst_127 {dimension_numbers = #tpu.dot_dimension_numbers<[1], [0], [0], [1], [0, 0, 1, 1], [], []>} : vector<2x128xf32>, vector<128x128xf32>, vector<2x128xf32> -> vector<2x128xf32>
    %121 = arith.addf %112, %120 : vector<2x128xf32>
    %c16 = arith.constant 16 : index
    %c0_128 = arith.constant 0 : index
    %122 = vector.load %arg17[%c16, %c0_128] : memref<51x128xf32, #tpu.memory_space<vmem>>, vector<33x128xf32>
    %c18 = arith.constant 18 : index
    %c0_129 = arith.constant 0 : index
    %123 = vector.load %arg17[%c18, %c0_129] : memref<51x128xf32, #tpu.memory_space<vmem>>, vector<33x128xf32>
    %124 = arith.maximumf %122, %123 : vector<33x128xf32>
    %c0_130 = arith.constant 0 : index
    %c0_131 = arith.constant 0 : index
    %125 = vector.load %arg14[%c0_130, %c0_131] : memref<2x33xf32, #tpu.memory_space<vmem>>, vector<2x33xf32>
    %cst_132 = arith.constant dense<0.000000e+00> : vector<2x128xf32>
    %126 = tpu.matmul %125, %124, %cst_132 {dimension_numbers = #tpu.dot_dimension_numbers<[1], [0], [0], [1], [0, 0, 1, 1], [], []>} : vector<2x33xf32>, vector<33x128xf32>, vector<2x128xf32> -> vector<2x128xf32>
    %c4_133 = arith.constant 4 : index
    %c0_134 = arith.constant 0 : index
    %c0_135 = arith.constant 0 : index
    %127 = vector.load %arg8[%c4_133, %c0_134, %c0_135] : memref<5x128x128xf32, #tpu.memory_space<vmem>>, vector<1x128x128xf32>
    %128 = vector.shape_cast %127 : vector<1x128x128xf32> to vector<128x128xf32>
    %cst_136 = arith.constant dense<0.000000e+00> : vector<2x128xf32>
    %129 = tpu.matmul %126, %128, %cst_136 {dimension_numbers = #tpu.dot_dimension_numbers<[1], [0], [0], [1], [0, 0, 1, 1], [], []>} : vector<2x128xf32>, vector<128x128xf32>, vector<2x128xf32> -> vector<2x128xf32>
    %130 = arith.addf %121, %129 : vector<2x128xf32>
    %cst_137 = arith.constant 0.000000e+00 : f32
    %131 = vector.broadcast %cst_137 : f32 to vector<2x128xf32>
    %132 = arith.maximumf %130, %131 : vector<2x128xf32>
    %c0_138 = arith.constant 0 : index
    %c0_139 = arith.constant 0 : index
    %133 = vector.load %arg10[%c0_138, %c0_139] : memref<128x128xf32, #tpu.memory_space<vmem>>, vector<128x128xf32>
    %cst_140 = arith.constant dense<0.000000e+00> : vector<2x128xf32>
    %134 = tpu.matmul %132, %133, %cst_140 {dimension_numbers = #tpu.dot_dimension_numbers<[1], [0], [0], [1], [0, 0, 1, 1], [], []>} : vector<2x128xf32>, vector<128x128xf32>, vector<2x128xf32> -> vector<2x128xf32>
    %c0_141 = arith.constant 0 : index
    %c0_142 = arith.constant 0 : index
    %135 = vector.load %arg11[%c0_141, %c0_142] : memref<1x128xf32, #tpu.memory_space<vmem>>, vector<1x128xf32>
    %136 = vector.broadcast %135 : vector<1x128xf32> to vector<2x128xf32>
    %137 = arith.addf %134, %136 : vector<2x128xf32>
    %cst_143 = arith.constant 0.000000e+00 : f32
    %138 = vector.broadcast %cst_143 : f32 to vector<2x128xf32>
    %139 = arith.maximumf %137, %138 : vector<2x128xf32>
    %c0_144 = arith.constant 0 : index
    %c0_145 = arith.constant 0 : index
    %140 = vector.load %arg12[%c0_144, %c0_145] : memref<128x128xf32, #tpu.memory_space<vmem>>, vector<128x128xf32>
    %cst_146 = arith.constant dense<0.000000e+00> : vector<2x128xf32>
    %141 = tpu.matmul %139, %140, %cst_146 {dimension_numbers = #tpu.dot_dimension_numbers<[1], [0], [0], [1], [0, 0, 1, 1], [], []>} : vector<2x128xf32>, vector<128x128xf32>, vector<2x128xf32> -> vector<2x128xf32>
    %c0_147 = arith.constant 0 : index
    %c0_148 = arith.constant 0 : index
    %142 = vector.load %arg13[%c0_147, %c0_148] : memref<1x128xf32, #tpu.memory_space<vmem>>, vector<1x128xf32>
    %143 = vector.broadcast %142 : vector<1x128xf32> to vector<2x128xf32>
    %144 = arith.addf %141, %143 : vector<2x128xf32>
    %c0_149 = arith.constant 0 : index
    %c0_150 = arith.constant 0 : index
    %c0_151 = arith.constant 0 : index
    %145 = vector.load %arg15[%c0_149, %c0_150, %c0_151] : memref<1x2x128xf32, #tpu.memory_space<vmem>>, vector<1x2x128xf32>
    %146 = vector.shape_cast %145 : vector<1x2x128xf32> to vector<2x128xf32>
    %147 = vector.shape_cast %144 : vector<2x128xf32> to vector<1x2x128xf32>
    tpu.vector_store %arg15[%c0_149, %c0_150, %c0_151], %147 {strides = array<i32>} : memref<1x2x128xf32, #tpu.memory_space<vmem>>, vector<1x2x128xf32>,
    return
  }
  func.func @transform_0(%arg0: i32) -> (i32, i32) {
    %c0_i32 = arith.constant 0 : i32
    %c0_i32_0 = arith.constant 0 : i32
    return %arg0, %c0_i32 : i32, i32
  }
  func.func @transform_1(%arg0: i32) -> (i32, i32, i32) {
    %c0_i32 = arith.constant 0 : i32
    %c0_i32_0 = arith.constant 0 : i32
    %c0_i32_1 = arith.constant 0 : i32
    %c0_i32_2 = arith.constant 0 : i32
    return %c0_i32, %c0_i32_0, %c0_i32_1 : i32, i32, i32
  }
  func.func @transform_2(%arg0: i32) -> (i32, i32) {
    %c0_i32 = arith.constant 0 : i32
    %c0_i32_0 = arith.constant 0 : i32
    %c0_i32_1 = arith.constant 0 : i32
    return %c0_i32, %c0_i32_0 : i32, i32
  }
  func.func @transform_3(%arg0: i32) -> (i32, i32, i32) {
    %c0_i32 = arith.constant 0 : i32
    %c0_i32_0 = arith.constant 0 : i32
    %c0_i32_1 = arith.constant 0 : i32
    %c0_i32_2 = arith.constant 0 : i32
    return %c0_i32, %c0_i32_0, %c0_i32_1 : i32, i32, i32
  }
  func.func @transform_4(%arg0: i32) -> (i32, i32, i32) {
    %c0_i32 = arith.constant 0 : i32
    %c0_i32_0 = arith.constant 0 : i32
    %c0_i32_1 = arith.constant 0 : i32
    %c0_i32_2 = arith.constant 0 : i32
    return %c0_i32, %c0_i32_0, %c0_i32_1 : i32, i32, i32
  }
  func.func @transform_5(%arg0: i32) -> (i32, i32) {
    %c0_i32 = arith.constant 0 : i32
    %c0_i32_0 = arith.constant 0 : i32
    %c0_i32_1 = arith.constant 0 : i32
    return %c0_i32, %c0_i32_0 : i32, i32
  }
  func.func @transform_6(%arg0: i32) -> (i32, i32, i32) {
    %c0_i32 = arith.constant 0 : i32
    %c0_i32_0 = arith.constant 0 : i32
    %c0_i32_1 = arith.constant 0 : i32
    %c0_i32_2 = arith.constant 0 : i32
    return %c0_i32, %c0_i32_0, %c0_i32_1 : i32, i32, i32
  }
  func.func @transform_7(%arg0: i32) -> (i32, i32, i32) {
    %c0_i32 = arith.constant 0 : i32
    %c0_i32_0 = arith.constant 0 : i32
    %c0_i32_1 = arith.constant 0 : i32
    %c0_i32_2 = arith.constant 0 : i32
    return %c0_i32, %c0_i32_0, %c0_i32_1 : i32, i32, i32
  }
  func.func @transform_8(%arg0: i32) -> (i32, i32) {
    %c0_i32 = arith.constant 0 : i32
    %c0_i32_0 = arith.constant 0 : i32
    %c0_i32_1 = arith.constant 0 : i32
    return %c0_i32, %c0_i32_0 : i32, i32
  }
  func.func @transform_9(%arg0: i32) -> (i32, i32) {
    %c0_i32 = arith.constant 0 : i32
    %c0_i32_0 = arith.constant 0 : i32
    %c0_i32_1 = arith.constant 0 : i32
    return %c0_i32, %c0_i32_0 : i32, i32
  }
  func.func @transform_10(%arg0: i32) -> (i32, i32) {
    %c0_i32 = arith.constant 0 : i32
    %c0_i32_0 = arith.constant 0 : i32
    %c0_i32_1 = arith.constant 0 : i32
    return %c0_i32, %c0_i32_0 : i32, i32
  }
  func.func @transform_11(%arg0: i32) -> (i32, i32) {
    %c0_i32 = arith.constant 0 : i32
    %c0_i32_0 = arith.constant 0 : i32
    %c0_i32_1 = arith.constant 0 : i32
    return %c0_i32, %c0_i32_0 : i32, i32
  }
  func.func @transform_12(%arg0: i32) -> (i32, i32) {
    %c0_i32 = arith.constant 0 : i32
    %c0_i32_0 = arith.constant 0 : i32
    %c0_i32_1 = arith.constant 0 : i32
    return %c0_i32, %c0_i32_0 : i32, i32
  }
  func.func @transform_13(%arg0: i32) -> (i32, i32) {
    %c0_i32 = arith.constant 0 : i32
    %c0_i32_0 = arith.constant 0 : i32
    %c0_i32_1 = arith.constant 0 : i32
    return %c0_i32, %c0_i32_0 : i32, i32
  }
  func.func @transform_14(%arg0: i32) -> (i32, i32, i32) {
    %c0_i32 = arith.constant 0 : i32
    %c0_i32_0 = arith.constant 0 : i32
    %c0_i32_1 = arith.constant 0 : i32
    return %arg0, %c0_i32, %c0_i32_0 : i32, i32, i32
  }
}

</mosaic_0001>

<llo_original>
// kernel: fedavg_cnn_forward.1
$region0: #{fedavg_cnn_forward.1}
  #allocation0 [shape = 'u32[]', space=smem, size = 0x4, offset = 0x4, fixed_abs, tag = 'smem constant byte address 0x4 - core index']
  #allocation1 [shape = 'u32[144,128]{1,0:T(1,128)}', space=vmem, size = 0x12000, scoped, tag = 'internal scratch']
  #allocation2 [shape = 'f32[60,128]{1,0:T(8,128)}', space=vmem, size = 0x8000, scoped, tag = 'scratch operand']
  #allocation3 [shape = 'f32[51,128]{1,0:T(8,128)}', space=vmem, size = 0x7000, scoped, tag = 'scratch operand']
  %s0 = inlined_call_operand.vmem [shape: f32[64,96], index: 0, kind: input, shape index: {}]
  %s1 = inlined_call_operand.vmem [shape: f32[5,96,168], index: 1, kind: input, shape index: {}]
  %s2 = inlined_call_operand.vmem [shape: f32[1,168], index: 2, kind: input, shape index: {}]
  %s3 = inlined_call_operand.vmem [shape: f32[2,168,128], index: 3, kind: input, shape index: {}]
  %s4 = inlined_call_operand.vmem [shape: f32[5,128,160], index: 4, kind: input, shape index: {}]
  %s5 = inlined_call_operand.vmem [shape: f32[1,160], index: 5, kind: input, shape index: {}]
  %s6 = inlined_call_operand.vmem [shape: f32[2,160,128], index: 6, kind: input, shape index: {}]
  %s7 = inlined_call_operand.vmem [shape: f32[5,128,128], index: 7, kind: input, shape index: {}]
  %s8 = inlined_call_operand.vmem [shape: f32[1,128], index: 8, kind: input, shape index: {}]
  %s9 = inlined_call_operand.vmem [shape: f32[128,128], index: 9, kind: input, shape index: {}]
  %s10 = inlined_call_operand.vmem [shape: f32[1,128], index: 10, kind: input, shape index: {}]
  %s11 = inlined_call_operand.vmem [shape: f32[128,128], index: 11, kind: input, shape index: {}]
  %s12 = inlined_call_operand.vmem [shape: f32[1,128], index: 12, kind: input, shape index: {}]
  %s13 = inlined_call_operand.vmem [shape: f32[2,33], index: 13, kind: input, shape index: {}]
  %s14 = inlined_call_operand.hbm [shape: f32[1,2,128], index: 14, kind: output, shape index: {}]
  %s15 = sld [smem:[#allocation0]]
  $region66: #{fedavg_cnn_forward.1} parent=0
    _
  %s17 = ssub.s32 1, %s15
  %s18 = scalar_select 0, %s17, %s15
  $region1: #{fedavg_cnn_forward.1} parent=0
    #allocation4 [shape = 'u8[1024]{0}', space=vmem, size = 0x400, scoped, tag = 'output window, operand 0, single buffered']
    #allocation5 [shape = 's32[1]{0}', space=sflag, size = 0x4, scoped, tag = 'scoped memory for fedavg_cnn_forward.1']
    %19 = vsyncpa [#allocation5], 0
    // Predicated region
    $region2: #{fedavg_cnn_forward.1} parent=1 // pred_check
      _
    $region3: #{fedavg_cnn_forward.1} parent=1 // pred_check_branch
      %21 = sbr.rel (0) target = $region5
    $region4: #{fedavg_cnn_forward.1} parent=1 // pred_region
      _
    $region5: #{fedavg_cnn_forward.1} parent=1 // pred_fallthru
      _
    // Predicated region
    $region6: #{fedavg_cnn_forward.1} parent=1 // pred_check
      _
    $region7: #{fedavg_cnn_forward.1} parent=1 // pred_check_branch
      %23 = sbr.rel (0) target = $region9
    $region8: #{fedavg_cnn_forward.1} parent=1 // pred_region
      _
    $region9: #{fedavg_cnn_forward.1} parent=1 // pred_fallthru
      _
    // Predicated region
    $region10: #{fedavg_cnn_forward.1} parent=1 // pred_check
      _
    $region11: #{fedavg_cnn_forward.1} parent=1 // pred_check_branch
      %25 = sbr.rel (0) target = $region13
    $region12: #{fedavg_cnn_forward.1} parent=1 // pred_region
      _
    $region13: #{fedavg_cnn_forward.1} parent=1 // pred_fallthru
      _
    // Predicated region
    $region14: #{fedavg_cnn_forward.1} parent=1 // pred_check
      _
    $region15: #{fedavg_cnn_forward.1} parent=1 // pred_check_branch
      %27 = sbr.rel (0) target = $region17
    $region16: #{fedavg_cnn_forward.1} parent=1 // pred_region
      _
    $region17: #{fedavg_cnn_forward.1} parent=1 // pred_fallthru
      _
    // Predicated region
    $region18: #{fedavg_cnn_forward.1} parent=1 // pred_check
      _
    $region19: #{fedavg_cnn_forward.1} parent=1 // pred_check_branch
      %29 = sbr.rel (0) target = $region21
    $region20: #{fedavg_cnn_forward.1} parent=1 // pred_region
      _
    $region21: #{fedavg_cnn_forward.1} parent=1 // pred_fallthru
      _
    // Predicated region
    $region22: #{fedavg_cnn_forward.1} parent=1 // pred_check
      _
    $region23: #{fedavg_cnn_forward.1} parent=1 // pred_check_branch
      %31 = sbr.rel (0) target = $region25
    $region24: #{fedavg_cnn_forward.1} parent=1 // pred_region
      _
    $region25: #{fedavg_cnn_forward.1} parent=1 // pred_fallthru
      _
    // Predicated region
    $region26: #{fedavg_cnn_forward.1} parent=1 // pred_check
      _
    $region27: #{fedavg_cnn_forward.1} parent=1 // pred_check_branch
      %33 = sbr.rel (0) target = $region29
    $region28: #{fedavg_cnn_forward.1} parent=1 // pred_region
      _
    $region29: #{fedavg_cnn_forward.1} parent=1 // pred_fallthru
      _
    // Predicated region
    $region30: #{fedavg_cnn_forward.1} parent=1 // pred_check
      _
    $region31: #{fedavg_cnn_forward.1} parent=1 // pred_check_branch
      %35 = sbr.rel (0) target = $region33
    $region32: #{fedavg_cnn_forward.1} parent=1 // pred_region
      _
    $region33: #{fedavg_cnn_forward.1} parent=1 // pred_fallthru
      _
    // Predicated region
    $region34: #{fedavg_cnn_forward.1} parent=1 // pred_check
      _
    $region35: #{fedavg_cnn_forward.1} parent=1 // pred_check_branch
      %37 = sbr.rel (0) target = $region37
    $region36: #{fedavg_cnn_forward.1} parent=1 // pred_region
      _
    $region37: #{fedavg_cnn_forward.1} parent=1 // pred_fallthru
      _
    // Predicated region
    $region38: #{fedavg_cnn_forward.1} parent=1 // pred_check
      _
    $region39: #{fedavg_cnn_forward.1} parent=1 // pred_check_branch
      %39 = sbr.rel (0) target = $region41
    $region40: #{fedavg_cnn_forward.1} parent=1 // pred_region
      _
    $region41: #{fedavg_cnn_forward.1} parent=1 // pred_fallthru
      _
    // Predicated region
    $region42: #{fedavg_cnn_forward.1} parent=1 // pred_check
      _
    $region43: #{fedavg_cnn_forward.1} parent=1 // pred_check_branch
      %41 = sbr.rel (0) target = $region45
    $region44: #{fedavg_cnn_forward.1} parent=1 // pred_region
      _
    $region45: #{fedavg_cnn_forward.1} parent=1 // pred_fallthru
      _
    // Predicated region
    $region46: #{fedavg_cnn_forward.1} parent=1 // pred_check
      _
    $region47: #{fedavg_cnn_forward.1} parent=1 // pred_check_branch
      %43 = sbr.rel (0) target = $region49
    $region48: #{fedavg_cnn_forward.1} parent=1 // pred_region
      _
    $region49: #{fedavg_cnn_forward.1} parent=1 // pred_fallthru
      _
    // Predicated region
    $region50: #{fedavg_cnn_forward.1} parent=1 // pred_check
      _
    $region51: #{fedavg_cnn_forward.1} parent=1 // pred_check_branch
      %45 = sbr.rel (0) target = $region53
    $region52: #{fedavg_cnn_forward.1} parent=1 // pred_region
      _
    $region53: #{fedavg_cnn_forward.1} parent=1 // pred_fallthru
      _
    // Predicated region
    $region54: #{fedavg_cnn_forward.1} parent=1 // pred_check
      _
    $region55: #{fedavg_cnn_forward.1} parent=1 // pred_check_branch
      %47 = sbr.rel (0) target = $region57
    $region56: #{fedavg_cnn_forward.1} parent=1 // pred_region
      _
    $region57: #{fedavg_cnn_forward.1} parent=1 // pred_fallthru
      _
    %v48 = vld [vmem:[%s0] sm:$0xff]
    %v49 = vld [vmem:[%s0 + $0x8] sm:$0xff]
    %v50 = vld [vmem:[%s0 + $0x10] sm:$0xff]
    %v51 = vld [vmem:[%s0 + $0x18] sm:$0xff]
    %v52 = vld [vmem:[%s0 + $0x20] sm:$0xff]
    %v53 = vld [vmem:[%s0 + $0x28] sm:$0xff]
    %v54 = vld [vmem:[%s0 + $0x30] sm:$0xff]
    %v55 = vld [vmem:[%s0 + $0x38] sm:$0xf]
    %v56 = vld [vmem:[%s1] sm:$0xff]
    %v57 = vld [vmem:[%s1 + $0x8] sm:$0xff]
    %v58 = vld [vmem:[%s1 + $0x10] sm:$0xff]
    %v59 = vld [vmem:[%s1 + $0x18] sm:$0xff]
    %v60 = vld [vmem:[%s1 + $0x20] sm:$0xff]
    %v61 = vld [vmem:[%s1 + $0x28] sm:$0xff]
    %v62 = vld [vmem:[%s1 + $0x30] sm:$0xff]
    %v63 = vld [vmem:[%s1 + $0x38] sm:$0xff]
    %v64 = vld [vmem:[%s1 + $0x40] sm:$0xff]
    %v65 = vld [vmem:[%s1 + $0x48] sm:$0xff]
    %v66 = vld [vmem:[%s1 + $0x50] sm:$0xff]
    %v67 = vld [vmem:[%s1 + $0x58] sm:$0xff]
    %v68 = vld [vmem:[%s1 + $0x60] sm:$0xff]
    %v69 = vld [vmem:[%s1 + $0x68] sm:$0xff]
    %v70 = vld [vmem:[%s1 + $0x70] sm:$0xff]
    %v71 = vld [vmem:[%s1 + $0x78] sm:$0xff]
    %v72 = vld [vmem:[%s1 + $0x80] sm:$0xff]
    %v73 = vld [vmem:[%s1 + $0x88] sm:$0xff]
    %v74 = vld [vmem:[%s1 + $0x90] sm:$0xff]
    %v75 = vld [vmem:[%s1 + $0x98] sm:$0xff]
    %v76 = vld [vmem:[%s1 + $0xa0] sm:$0xff]
    %v77 = vld [vmem:[%s1 + $0xa8] sm:$0xff]
    %v78 = vld [vmem:[%s1 + $0xb0] sm:$0xff]
    %v79 = vld [vmem:[%s1 + $0xb8] sm:$0xff]
    %v80 = vld [vmem:[%s0 + $0x1] sm:$0xff]
    %v81 = vld [vmem:[%s0 + $0x9] sm:$0xff]
    %v82 = vld [vmem:[%s0 + $0x11] sm:$0xff]
    %v83 = vld [vmem:[%s0 + $0x19] sm:$0xff]
    %v84 = vld [vmem:[%s0 + $0x21] sm:$0xff]
    %v85 = vld [vmem:[%s0 + $0x29] sm:$0xff]
    %v86 = vld [vmem:[%s0 + $0x31] sm:$0xff]
    %v87 = vld [vmem:[%s0 + $0x39] sm:$0xf]
    %s88 = scalar_lea.vmem %s1, 192
    %v89 = vld [vmem:[%s88] sm:$0xff]
    %v90 = vld [vmem:[%s88 + $0x8] sm:$0xff]
    %v91 = vld [vmem:[%s88 + $0x10] sm:$0xff]
    %v92 = vld [vmem:[%s88 + $0x18] sm:$0xff]
    %v93 = vld [vmem:[%s88 + $0x20] sm:$0xff]
    %v94 = vld [vmem:[%s88 + $0x28] sm:$0xff]
    %v95 = vld [vmem:[%s88 + $0x30] sm:$0xff]
    %v96 = vld [vmem:[%s88 + $0x38] sm:$0xff]
    %v97 = vld [vmem:[%s88 + $0x40] sm:$0xff]
    %v98 = vld [vmem:[%s88 + $0x48] sm:$0xff]
    %v99 = vld [vmem:[%s88 + $0x50] sm:$0xff]
    %v100 = vld [vmem:[%s88 + $0x58] sm:$0xff]
    %v101 = vld [vmem:[%s88 + $0x60] sm:$0xff]
    %v102 = vld [vmem:[%s88 + $0x68] sm:$0xff]
    %v103 = vld [vmem:[%s88 + $0x70] sm:$0xff]
    %v104 = vld [vmem:[%s88 + $0x78] sm:$0xff]
    %v105 = vld [vmem:[%s88 + $0x80] sm:$0xff]
    %v106 = vld [vmem:[%s88 + $0x88] sm:$0xff]
    %v107 = vld [vmem:[%s88 + $0x90] sm:$0xff]
    %v108 = vld [vmem:[%s88 + $0x98] sm:$0xff]
    %v109 = vld [vmem:[%s88 + $0xa0] sm:$0xff]
    %v110 = vld [vmem:[%s88 + $0xa8] sm:$0xff]
    %v111 = vld [vmem:[%s88 + $0xb0] sm:$0xff]
    %v112 = vld [vmem:[%s88 + $0xb8] sm:$0xff]
    %vm113 = vcmask 785408
    %v115 = vsel %vm113, %v80, 0
    %v118 = vsel %vm113, %v81, 0
    %v121 = vsel %vm113, %v82, 0
    %v124 = vsel %vm113, %v83, 0
    %v127 = vsel %vm113, %v84, 0
    %v130 = vsel %vm113, %v85, 0
    %v133 = vsel %vm113, %v86, 0
    %v136 = vsel %vm113, %v87, 0
    %138 = vmatprep.subr.mxu0 0.0
    %139 = vmatpush1.msra.mxu0 0.0
    %140 = vmatprep.subr.mxu0 0.0
    %141 = vmatpush1.msra.mxu0 0.0
    %142 = vmatprep.subr.mxu0 0.0
    %143 = vmatpush1.msra.mxu0 0.0
    %144 = vmatprep.subr.mxu0 0.0
    %145 = vmatpush1.msra.mxu0 0.0
    %146 = vmatprep.subr.mxu0 %v112
    %147 = vmatpush1.msra.mxu0 %v111
    %148 = vmatprep.subr.mxu0 %v110
    %149 = vmatpush1.msra.mxu0 %v109
    %150 = vmatprep.subr.mxu0 %v108
    %151 = vmatpush1.msra.mxu0 %v107
    %152 = vmatprep.subr.mxu0 %v106
    %153 = vmatpush1.msra.mxu0 %v105
    %154 = vmatprep.subr.mxu0 %v104
    %155 = vmatpush1.msra.mxu0 %v103
    %156 = vmatprep.subr.mxu0 %v102
    %157 = vmatpush1.msra.mxu0 %v101
    %158 = vmatprep.subr.mxu0 %v100
    %159 = vmatpush1.msra.mxu0 %v99
    %160 = vmatprep.subr.mxu0 %v98
    %161 = vmatpush1.msra.mxu0 %v97
    %162 = vmatprep.subr.mxu0 %v96
    %163 = vmatpush1.msra.mxu0 %v95
    %164 = vmatprep.subr.mxu0 %v94
    %165 = vmatpush1.msra.mxu0 %v93
    %166 = vmatprep.subr.mxu0 %v92
    %167 = vmatpush1.msra.mxu0 %v91
    %168 = vmatprep.subr.mxu0 %v90
    %169 = vmatpush1.msra.mxu0 %v89
    %170 = vmatprep.subr.mxu0 0.0
    %171 = vmatpush2.msra.mxu0 0.0
    %172 = vmatprep.subr.mxu0 0.0
    %173 = vmatpush2.msra.mxu0 0.0
    %174 = vmatprep.subr.mxu0 0.0
    %175 = vmatpush2.msra.mxu0 0.0
    %176 = vmatprep.subr.mxu0 0.0
    %177 = vmatpush2.msra.mxu0 0.0
    %178 = vmatprep.subr.mxu0 0.0
    %179 = vmatpush2.msra.mxu0 0.0
    %180 = vmatprep.subr.mxu0 0.0
    %181 = vmatpush2.msra.mxu0 0.0
    %182 = vmatprep.subr.mxu0 0.0
    %183 = vmatpush2.msra.mxu0 0.0
    %184 = vmatprep.subr.mxu0 0.0
    %185 = vmatpush2.msra.mxu0 0.0
    %186 = vmatprep.subr.mxu0 0.0
    %187 = vmatpush2.msra.mxu0 0.0
    %188 = vmatprep.subr.mxu0 0.0
    %189 = vmatpush2.msra.mxu0 0.0
    %190 = vmatprep.subr.mxu0 0.0
    %191 = vmatpush2.msra.mxu0 0.0
    %192 = vmatprep.subr.mxu0 0.0
    %193 = vmatpush2.msra.mxu0 0.0
    %194 = vmatprep.subr.mxu0 0.0
    %195 = vmatpush2.msra.mxu0 0.0
    %196 = vmatprep.subr.mxu0 0.0
    %197 = vmatpush2.msra.mxu0 0.0
    %198 = vmatprep.subr.mxu0 0.0
    %199 = vmatpush2.msra.mxu0 0.0
    %200 = vmatprep.subr.mxu0 0.0
    %201 = vmatpush2.msra.mxu0 0.0
    %202 = vmatprep.mubr.f32.mxu0 0.0
    %203 = vmatmul.mubr.f32.gmra.mxu0 %v115
    %v204 = vpop.f32.mrf.mxu0
    %v205 = vadd.f32 0.0, %v204
    %v206 = vpop.f32.mrf.mxu0
    %v207 = vadd.f32 0.0, %v206
    %208 = vmatprep.mubr.f32.mxu0 0.0
    %209 = vmatmul.mubr.f32.gmra.mxu0 %v118
    %v210 = vpop.f32.mrf.mxu0
    %v211 = vadd.f32 0.0, %v210
    %v212 = vpop.f32.mrf.mxu0
    %v213 = vadd.f32 0.0, %v212
    %214 = vmatprep.mubr.f32.mxu0 0.0
    %215 = vmatmul.mubr.f32.gmra.mxu0 %v121
    %v216 = vpop.f32.mrf.mxu0
    %v217 = vadd.f32 0.0, %v216
    %v218 = vpop.f32.mrf.mxu0
    %v219 = vadd.f32 0.0, %v218
    %220 = vmatprep.mubr.f32.mxu0 0.0
    %221 = vmatmul.mubr.f32.gmra.mxu0 %v124
    %v222 = vpop.f32.mrf.mxu0
    %v223 = vadd.f32 0.0, %v222
    %v224 = vpop.f32.mrf.mxu0
    %v225 = vadd.f32 0.0, %v224
    %226 = vmatprep.mubr.f32.mxu0 0.0
    %227 = vmatmul.mubr.f32.gmra.mxu0 %v127
    %v228 = vpop.f32.mrf.mxu0
    %v229 = vadd.f32 0.0, %v228
    %v230 = vpop.f32.mrf.mxu0
    %v231 = vadd.f32 0.0, %v230
    %232 = vmatprep.mubr.f32.mxu0 0.0
    %233 = vmatmul.mubr.f32.gmra.mxu0 %v130
    %v234 = vpop.f32.mrf.mxu0
    %v235 = vadd.f32 0.0, %v234
    %v236 = vpop.f32.mrf.mxu0
    %v237 = vadd.f32 0.0, %v236
    %238 = vmatprep.mubr.f32.mxu0 0.0
    %239 = vmatmul.mubr.f32.gmra.mxu0 %v133
    %v240 = vpop.f32.mrf.mxu0
    %v241 = vadd.f32 0.0, %v240
    %v242 = vpop.f32.mrf.mxu0
    %v243 = vadd.f32 0.0, %v242
    %244 = vmatprep.mubr.f32.mxu0 0.0
    %245 = vmatmul.mubr.f32.gmra.mxu0 %v136
    %v246 = vpop.f32.mrf.mxu0
    %v247 = vadd.f32 0.0, %v246
    %v248 = vpop.f32.mrf.mxu0
    %v249 = vadd.f32 0.0, %v248
    %250 = vdwg.mxu0
    %v252 = vsel %vm113, %v48, 0
    %v255 = vsel %vm113, %v49, 0
    %v258 = vsel %vm113, %v50, 0
    %v261 = vsel %vm113, %v51, 0
    %v264 = vsel %vm113, %v52, 0
    %v267 = vsel %vm113, %v53, 0
    %v270 = vsel %vm113, %v54, 0
    %v273 = vsel %vm113, %v55, 0
    %275 = vmatprep.subr.mxu0 0.0
    %276 = vmatpush1.msra.mxu0 0.0
    %277 = vmatprep.subr.mxu0 0.0
    %278 = vmatpush1.msra.mxu0 0.0
    %279 = vmatprep.subr.mxu0 0.0
    %280 = vmatpush1.msra.mxu0 0.0
    %281 = vmatprep.subr.mxu0 0.0
    %282 = vmatpush1.msra.mxu0 0.0
    %283 = vmatprep.subr.mxu0 %v79
    %284 = vmatpush1.msra.mxu0 %v78
    %285 = vmatprep.subr.mxu0 %v77
    %286 = vmatpush1.msra.mxu0 %v76
    %287 = vmatprep.subr.mxu0 %v75
    %288 = vmatpush1.msra.mxu0 %v74
    %289 = vmatprep.subr.mxu0 %v73
    %290 = vmatpush1.msra.mxu0 %v72
    %291 = vmatprep.subr.mxu0 %v71
    %292 = vmatpush1.msra.mxu0 %v70
    %293 = vmatprep.subr.mxu0 %v69
    %294 = vmatpush1.msra.mxu0 %v68
    %295 = vmatprep.subr.mxu0 %v67
    %296 = vmatpush1.msra.mxu0 %v66
    %297 = vmatprep.subr.mxu0 %v65
    %298 = vmatpush1.msra.mxu0 %v64
    %299 = vmatprep.subr.mxu0 %v63
    %300 = vmatpush1.msra.mxu0 %v62
    %301 = vmatprep.subr.mxu0 %v61
    %302 = vmatpush1.msra.mxu0 %v60
    %303 = vmatprep.subr.mxu0 %v59
    %304 = vmatpush1.msra.mxu0 %v58
    %305 = vmatprep.subr.mxu0 %v57
    %306 = vmatpush1.msra.mxu0 %v56
    %307 = vmatprep.subr.mxu0 0.0
    %308 = vmatpush2.msra.mxu0 0.0
    %309 = vmatprep.subr.mxu0 0.0
    %310 = vmatpush2.msra.mxu0 0.0
    %311 = vmatprep.subr.mxu0 0.0
    %312 = vmatpush2.msra.mxu0 0.0
    %313 = vmatprep.subr.mxu0 0.0
    %314 = vmatpush2.msra.mxu0 0.0
    %315 = vmatprep.subr.mxu0 0.0
    %316 = vmatpush2.msra.mxu0 0.0
    %317 = vmatprep.subr.mxu0 0.0
    %318 = vmatpush2.msra.mxu0 0.0
    %319 = vmatprep.subr.mxu0 0.0
    %320 = vmatpush2.msra.mxu0 0.0
    %321 = vmatprep.subr.mxu0 0.0
    %322 = vmatpush2.msra.mxu0 0.0
    %323 = vmatprep.subr.mxu0 0.0
    %324 = vmatpush2.msra.mxu0 0.0
    %325 = vmatprep.subr.mxu0 0.0
    %326 = vmatpush2.msra.mxu0 0.0
    %327 = vmatprep.subr.mxu0 0.0
    %328 = vmatpush2.msra.mxu0 0.0
    %329 = vmatprep.subr.mxu0 0.0
    %330 = vmatpush2.msra.mxu0 0.0
    %331 = vmatprep.subr.mxu0 0.0
    %332 = vmatpush2.msra.mxu0 0.0
    %333 = vmatprep.subr.mxu0 0.0
    %334 = vmatpush2.msra.mxu0 0.0
    %335 = vmatprep.subr.mxu0 0.0
    %336 = vmatpush2.msra.mxu0 0.0
    %337 = vmatprep.subr.mxu0 0.0
    %338 = vmatpush2.msra.mxu0 0.0
    %339 = vmatprep.mubr.f32.mxu0 0.0
    %340 = vmatmul.mubr.f32.gmra.mxu0 %v252
    %v341 = vpop.f32.mrf.mxu0
    %v342 = vadd.f32 %v205, %v341
    %v343 = vpop.f32.mrf.mxu0
    %v344 = vadd.f32 %v207, %v343
    %345 = vmatprep.mubr.f32.mxu0 0.0
    %346 = vmatmul.mubr.f32.gmra.mxu0 %v255
    %v347 = vpop.f32.mrf.mxu0
    %v348 = vadd.f32 %v211, %v347
    %v349 = vpop.f32.mrf.mxu0
    %v350 = vadd.f32 %v213, %v349
    %351 = vmatprep.mubr.f32.mxu0 0.0
    %352 = vmatmul.mubr.f32.gmra.mxu0 %v258
    %v353 = vpop.f32.mrf.mxu0
    %v354 = vadd.f32 %v217, %v353
    %v355 = vpop.f32.mrf.mxu0
    %v356 = vadd.f32 %v219, %v355
    %357 = vmatprep.mubr.f32.mxu0 0.0
    %358 = vmatmul.mubr.f32.gmra.mxu0 %v261
    %v359 = vpop.f32.mrf.mxu0
    %v360 = vadd.f32 %v223, %v359
    %v361 = vpop.f32.mrf.mxu0
    %v362 = vadd.f32 %v225, %v361
    %363 = vmatprep.mubr.f32.mxu0 0.0
    %364 = vmatmul.mubr.f32.gmra.mxu0 %v264
    %v365 = vpop.f32.mrf.mxu0
    %v366 = vadd.f32 %v229, %v365
    %v367 = vpop.f32.mrf.mxu0
    %v368 = vadd.f32 %v231, %v367
    %369 = vmatprep.mubr.f32.mxu0 0.0
    %370 = vmatmul.mubr.f32.gmra.mxu0 %v267
    %v371 = vpop.f32.mrf.mxu0
    %v372 = vadd.f32 %v235, %v371
    %v373 = vpop.f32.mrf.mxu0
    %v374 = vadd.f32 %v237, %v373
    %375 = vmatprep.mubr.f32.mxu0 0.0
    %376 = vmatmul.mubr.f32.gmra.mxu0 %v270
    %v377 = vpop.f32.mrf.mxu0
    %v378 = vadd.f32 %v241, %v377
    %v379 = vpop.f32.mrf.mxu0
    %v380 = vadd.f32 %v243, %v379
    %381 = vmatprep.mubr.f32.mxu0 0.0
    %382 = vmatmul.mubr.f32.gmra.mxu0 %v273
    %v383 = vpop.f32.mrf.mxu0
    %v384 = vadd.f32 %v247, %v383
    %v385 = vpop.f32.mrf.mxu0
    %v386 = vadd.f32 %v249, %v385
    %387 = vdwg.mxu0
    %v388 = vld [vmem:[%s0 + $0x2] sm:$0xff]
    %v389 = vld [vmem:[%s0 + $0xa] sm:$0xff]
    %v390 = vld [vmem:[%s0 + $0x12] sm:$0xff]
    %v391 = vld [vmem:[%s0 + $0x1a] sm:$0xff]
    %v392 = vld [vmem:[%s0 + $0x22] sm:$0xff]
    %v393 = vld [vmem:[%s0 + $0x2a] sm:$0xff]
    %v394 = vld [vmem:[%s0 + $0x32] sm:$0xff]
    %v395 = vld [vmem:[%s0 + $0x3a] sm:$0xf]
    %s396 = scalar_lea.vmem %s1, 384
    %v397 = vld [vmem:[%s396] sm:$0xff]
    %v398 = vld [vmem:[%s396 + $0x8] sm:$0xff]
    %v399 = vld [vmem:[%s396 + $0x10] sm:$0xff]
    %v400 = vld [vmem:[%s396 + $0x18] sm:$0xff]
    %v401 = vld [vmem:[%s396 + $0x20] sm:$0xff]
    %v402 = vld [vmem:[%s396 + $0x28] sm:$0xff]
    %v403 = vld [vmem:[%s396 + $0x30] sm:$0xff]
    %v404 = vld [vmem:[%s396 + $0x38] sm:$0xff]
    %v405 = vld [vmem:[%s396 + $0x40] sm:$0xff]
    %v406 = vld [vmem:[%s396 + $0x48] sm:$0xff]
    %v407 = vld [vmem:[%s396 + $0x50] sm:$0xff]
    %v408 = vld [vmem:[%s396 + $0x58] sm:$0xff]
    %v409 = vld [vmem:[%s396 + $0x60] sm:$0xff]
    %v410 = vld [vmem:[%s396 + $0x68] sm:$0xff]
    %v411 = vld [vmem:[%s396 + $0x70] sm:$0xff]
    %v412 = vld [vmem:[%s396 + $0x78] sm:$0xff]
    %v413 = vld [vmem:[%s396 + $0x80] sm:$0xff]
    %v414 = vld [vmem:[%s396 + $0x88] sm:$0xff]
    %v415 = vld [vmem:[%s396 + $0x90] sm:$0xff]
    %v416 = vld [vmem:[%s396 + $0x98] sm:$0xff]
    %v417 = vld [vmem:[%s396 + $0xa0] sm:$0xff]
    %v418 = vld [vmem:[%s396 + $0xa8] sm:$0xff]
    %v419 = vld [vmem:[%s396 + $0xb0] sm:$0xff]
    %v420 = vld [vmem:[%s396 + $0xb8] sm:$0xff]
    %v422 = vsel %vm113, %v388, 0
    %v425 = vsel %vm113, %v389, 0
    %v428 = vsel %vm113, %v390, 0
    %v431 = vsel %vm113, %v391, 0
    %v434 = vsel %vm113, %v392, 0
    %v437 = vsel %vm113, %v393, 0
    %v440 = vsel %vm113, %v394, 0
    %v443 = vsel %vm113, %v395, 0
    %445 = vmatprep.subr.mxu0 0.0
    %446 = vmatpush1.msra.mxu0 0.0
    %447 = vmatprep.subr.mxu0 0.0
    %448 = vmatpush1.msra.mxu0 0.0
    %449 = vmatprep.subr.mxu0 0.0
    %450 = vmatpush1.msra.mxu0 0.0
    %451 = vmatprep.subr.mxu0 0.0
    %452 = vmatpush1.msra.mxu0 0.0
    %453 = vmatprep.subr.mxu0 %v420
    %454 = vmatpush1.msra.mxu0 %v419
    %455 = vmatprep.subr.mxu0 %v418
    %456 = vmatpush1.msra.mxu0 %v417
    %457 = vmatprep.subr.mxu0 %v416
    %458 = vmatpush1.msra.mxu0 %v415
    %459 = vmatprep.subr.mxu0 %v414
    %460 = vmatpush1.msra.mxu0 %v413
    %461 = vmatprep.subr.mxu0 %v412
    %462 = vmatpush1.msra.mxu0 %v411
    %463 = vmatprep.subr.mxu0 %v410
    %464 = vmatpush1.msra.mxu0 %v409
    %465 = vmatprep.subr.mxu0 %v408
    %466 = vmatpush1.msra.mxu0 %v407
    %467 = vmatprep.subr.mxu0 %v406
    %468 = vmatpush1.msra.mxu0 %v405
    %469 = vmatprep.subr.mxu0 %v404
    %470 = vmatpush1.msra.mxu0 %v403
    %471 = vmatprep.subr.mxu0 %v402
    %472 = vmatpush1.msra.mxu0 %v401
    %473 = vmatprep.subr.mxu0 %v400
    %474 = vmatpush1.msra.mxu0 %v399
    %475 = vmatprep.subr.mxu0 %v398
    %476 = vmatpush1.msra.mxu0 %v397
    %477 = vmatprep.subr.mxu0 0.0
    %478 = vmatpush2.msra.mxu0 0.0
    %479 = vmatprep.subr.mxu0 0.0
    %480 = vmatpush2.msra.mxu0 0.0
    %481 = vmatprep.subr.mxu0 0.0
    %482 = vmatpush2.msra.mxu0 0.0
    %483 = vmatprep.subr.mxu0 0.0
    %484 = vmatpush2.msra.mxu0 0.0
    %485 = vmatprep.subr.mxu0 0.0
    %486 = vmatpush2.msra.mxu0 0.0
    %487 = vmatprep.subr.mxu0 0.0
    %488 = vmatpush2.msra.mxu0 0.0
    %489 = vmatprep.subr.mxu0 0.0
    %490 = vmatpush2.msra.mxu0 0.0
    %491 = vmatprep.subr.mxu0 0.0
    %492 = vmatpush2.msra.mxu0 0.0
    %493 = vmatprep.subr.mxu0 0.0
    %494 = vmatpush2.msra.mxu0 0.0
    %495 = vmatprep.subr.mxu0 0.0
    %496 = vmatpush2.msra.mxu0 0.0
    %497 = vmatprep.subr.mxu0 0.0
    %498 = vmatpush2.msra.mxu0 0.0
    %499 = vmatprep.subr.mxu0 0.0
    %500 = vmatpush2.msra.mxu0 0.0
    %501 = vmatprep.subr.mxu0 0.0
    %502 = vmatpush2.msra.mxu0 0.0
    %503 = vmatprep.subr.mxu0 0.0
    %504 = vmatpush2.msra.mxu0 0.0
    %505 = vmatprep.subr.mxu0 0.0
    %506 = vmatpush2.msra.mxu0 0.0
    %507 = vmatprep.subr.mxu0 0.0
    %508 = vmatpush2.msra.mxu0 0.0
    %509 = vmatprep.mubr.f32.mxu0 0.0
    %510 = vmatmul.mubr.f32.gmra.mxu0 %v422
    %v511 = vpop.f32.mrf.mxu0
    %v512 = vadd.f32 0.0, %v511
    %v513 = vpop.f32.mrf.mxu0
    %v514 = vadd.f32 0.0, %v513
    %515 = vmatprep.mubr.f32.mxu0 0.0
    %516 = vmatmul.mubr.f32.gmra.mxu0 %v425
    %v517 = vpop.f32.mrf.mxu0
    %v518 = vadd.f32 0.0, %v517
    %v519 = vpop.f32.mrf.mxu0
    %v520 = vadd.f32 0.0, %v519
    %521 = vmatprep.mubr.f32.mxu0 0.0
    %522 = vmatmul.mubr.f32.gmra.mxu0 %v428
    %v523 = vpop.f32.mrf.mxu0
    %v524 = vadd.f32 0.0, %v523
    %v525 = vpop.f32.mrf.mxu0
    %v526 = vadd.f32 0.0, %v525
    %527 = vmatprep.mubr.f32.mxu0 0.0
    %528 = vmatmul.mubr.f32.gmra.mxu0 %v431
    %v529 = vpop.f32.mrf.mxu0
    %v530 = vadd.f32 0.0, %v529
    %v531 = vpop.f32.mrf.mxu0
    %v532 = vadd.f32 0.0, %v531
    %533 = vmatprep.mubr.f32.mxu0 0.0
    %534 = vmatmul.mubr.f32.gmra.mxu0 %v434
    %v535 = vpop.f32.mrf.mxu0
    %v536 = vadd.f32 0.0, %v535
    %v537 = vpop.f32.mrf.mxu0
    %v538 = vadd.f32 0.0, %v537
    %539 = vmatprep.mubr.f32.mxu0 0.0
    %540 = vmatmul.mubr.f32.gmra.mxu0 %v437
    %v541 = vpop.f32.mrf.mxu0
    %v542 = vadd.f32 0.0, %v541
    %v543 = vpop.f32.mrf.mxu0
    %v544 = vadd.f32 0.0, %v543
    %545 = vmatprep.mubr.f32.mxu0 0.0
    %546 = vmatmul.mubr.f32.gmra.mxu0 %v440
    %v547 = vpop.f32.mrf.mxu0
    %v548 = vadd.f32 0.0, %v547
    %v549 = vpop.f32.mrf.mxu0
    %v550 = vadd.f32 0.0, %v549
    %551 = vmatprep.mubr.f32.mxu0 0.0
    %552 = vmatmul.mubr.f32.gmra.mxu0 %v443
    %v553 = vpop.f32.mrf.mxu0
    %v554 = vadd.f32 0.0, %v553
    %v555 = vpop.f32.mrf.mxu0
    %v556 = vadd.f32 0.0, %v555
    %557 = vdwg.mxu0
    %v558 = vadd.f32 %v342, %v512
    %v559 = vadd.f32 %v344, %v514
    %v560 = vadd.f32 %v348, %v518
    %v561 = vadd.f32 %v350, %v520
    %v562 = vadd.f32 %v354, %v524
    %v563 = vadd.f32 %v356, %v526
    %v564 = vadd.f32 %v360, %v530
    %v565 = vadd.f32 %v362, %v532
    %v566 = vadd.f32 %v366, %v536
    %v567 = vadd.f32 %v368, %v538
    %v568 = vadd.f32 %v372, %v542
    %v569 = vadd.f32 %v374, %v544
    %v570 = vadd.f32 %v378, %v548
    %v571 = vadd.f32 %v380, %v550
    %v572 = vadd.f32 %v384, %v554
    %v573 = vadd.f32 %v386, %v556
    %v574 = vld [vmem:[%s0 + $0x3] sm:$0xff]
    %v575 = vld [vmem:[%s0 + $0xb] sm:$0xff]
    %v576 = vld [vmem:[%s0 + $0x13] sm:$0xff]
    %v577 = vld [vmem:[%s0 + $0x1b] sm:$0xff]
    %v578 = vld [vmem:[%s0 + $0x23] sm:$0xff]
    %v579 = vld [vmem:[%s0 + $0x2b] sm:$0xff]
    %v580 = vld [vmem:[%s0 + $0x33] sm:$0xff]
    %v581 = vld [vmem:[%s0 + $0x3b] sm:$0xf]
    %s582 = scalar_lea.vmem %s1, 576
    %v583 = vld [vmem:[%s582] sm:$0xff]
    %v584 = vld [vmem:[%s582 + $0x8] sm:$0xff]
    %v585 = vld [vmem:[%s582 + $0x10] sm:$0xff]
    %v586 = vld [vmem:[%s582 + $0x18] sm:$0xff]
    %v587 = vld [vmem:[%s582 + $0x20] sm:$0xff]
    %v588 = vld [vmem:[%s582 + $0x28] sm:$0xff]
    %v589 = vld [vmem:[%s582 + $0x30] sm:$0xff]
    %v590 = vld [vmem:[%s582 + $0x38] sm:$0xff]
    %v591 = vld [vmem:[%s582 + $0x40] sm:$0xff]
    %v592 = vld [vmem:[%s582 + $0x48] sm:$0xff]
    %v593 = vld [vmem:[%s582 + $0x50] sm:$0xff]
    %v594 = vld [vmem:[%s582 + $0x58] sm:$0xff]
    %v595 = vld [vmem:[%s582 + $0x60] sm:$0xff]
    %v596 = vld [vmem:[%s582 + $0x68] sm:$0xff]
    %v597 = vld [vmem:[%s582 + $0x70] sm:$0xff]
    %v598 = vld [vmem:[%s582 + $0x78] sm:$0xff]
    %v599 = vld [vmem:[%s582 + $0x80] sm:$0xff]
    %v600 = vld [vmem:[%s582 + $0x88] sm:$0xff]
    %v601 = vld [vmem:[%s582 + $0x90] sm:$0xff]
    %v602 = vld [vmem:[%s582 + $0x98] sm:$0xff]
    %v603 = vld [vmem:[%s582 + $0xa0] sm:$0xff]
    %v604 = vld [vmem:[%s582 + $0xa8] sm:$0xff]
    %v605 = vld [vmem:[%s582 + $0xb0] sm:$0xff]
    %v606 = vld [vmem:[%s582 + $0xb8] sm:$0xff]
    %v608 = vsel %vm113, %v574, 0
    %v611 = vsel %vm113, %v575, 0
    %v614 = vsel %vm113, %v576, 0
    %v617 = vsel %vm113, %v577, 0
    %v620 = vsel %vm113, %v578, 0
    %v623 = vsel %vm113, %v579, 0
    %v626 = vsel %vm113, %v580, 0
    %v629 = vsel %vm113, %v581, 0
    %631 = vmatprep.subr.mxu0 0.0
    %632 = vmatpush1.msra.mxu0 0.0
    %633 = vmatprep.subr.mxu0 0.0
    %634 = vmatpush1.msra.mxu0 0.0
    %635 = vmatprep.subr.mxu0 0.0
    %636 = vmatpush1.msra.mxu0 0.0
    %637 = vmatprep.subr.mxu0 0.0
    %638 = vmatpush1.msra.mxu0 0.0
    %639 = vmatprep.subr.mxu0 %v606
    %640 = vmatpush1.msra.mxu0 %v605
    %641 = vmatprep.subr.mxu0 %v604
    %642 = vmatpush1.msra.mxu0 %v603
    %643 = vmatprep.subr.mxu0 %v602
    %644 = vmatpush1.msra.mxu0 %v601
    %645 = vmatprep.subr.mxu0 %v600
    %646 = vmatpush1.msra.mxu0 %v599
    %647 = vmatprep.subr.mxu0 %v598
    %648 = vmatpush1.msra.mxu0 %v597
    %649 = vmatprep.subr.mxu0 %v596
    %650 = vmatpush1.msra.mxu0 %v595
    %651 = vmatprep.subr.mxu0 %v594
    %652 = vmatpush1.msra.mxu0 %v593
    %653 = vmatprep.subr.mxu0 %v592
    %654 = vmatpush1.msra.mxu0 %v591
    %655 = vmatprep.subr.mxu0 %v590
    %656 = vmatpush1.msra.mxu0 %v589
    %657 = vmatprep.subr.mxu0 %v588
    %658 = vmatpush1.msra.mxu0 %v587
    %659 = vmatprep.subr.mxu0 %v586
    %660 = vmatpush1.msra.mxu0 %v585
    %661 = vmatprep.subr.mxu0 %v584
    %662 = vmatpush1.msra.mxu0 %v583
    %663 = vmatprep.subr.mxu0 0.0
    %664 = vmatpush2.msra.mxu0 0.0
    %665 = vmatprep.subr.mxu0 0.0
    %666 = vmatpush2.msra.mxu0 0.0
    %667 = vmatprep.subr.mxu0 0.0
    %668 = vmatpush2.msra.mxu0 0.0
    %669 = vmatprep.subr.mxu0 0.0
    %670 = vmatpush2.msra.mxu0 0.0
    %671 = vmatprep.subr.mxu0 0.0
    %672 = vmatpush2.msra.mxu0 0.0
    %673 = vmatprep.subr.mxu0 0.0
    %674 = vmatpush2.msra.mxu0 0.0
    %675 = vmatprep.subr.mxu0 0.0
    %676 = vmatpush2.msra.mxu0 0.0
    %677 = vmatprep.subr.mxu0 0.0
    %678 = vmatpush2.msra.mxu0 0.0
    %679 = vmatprep.subr.mxu0 0.0
    %680 = vmatpush2.msra.mxu0 0.0
    %681 = vmatprep.subr.mxu0 0.0
    %682 = vmatpush2.msra.mxu0 0.0
    %683 = vmatprep.subr.mxu0 0.0
    %684 = vmatpush2.msra.mxu0 0.0
    %685 = vmatprep.subr.mxu0 0.0
    %686 = vmatpush2.msra.mxu0 0.0
    %687 = vmatprep.subr.mxu0 0.0
    %688 = vmatpush2.msra.mxu0 0.0
    %689 = vmatprep.subr.mxu0 0.0
    %690 = vmatpush2.msra.mxu0 0.0
    %691 = vmatprep.subr.mxu0 0.0
    %692 = vmatpush2.msra.mxu0 0.0
    %693 = vmatprep.subr.mxu0 0.0
    %694 = vmatpush2.msra.mxu0 0.0
    %695 = vmatprep.mubr.f32.mxu0 0.0
    %696 = vmatmul.mubr.f32.gmra.mxu0 %v608
    %v697 = vpop.f32.mrf.mxu0
    %v698 = vadd.f32 0.0, %v697
    %v699 = vpop.f32.mrf.mxu0
    %v700 = vadd.f32 0.0, %v699
    %701 = vmatprep.mubr.f32.mxu0 0.0
    %702 = vmatmul.mubr.f32.gmra.mxu0 %v611
    %v703 = vpop.f32.mrf.mxu0
    %v704 = vadd.f32 0.0, %v703
    %v705 = vpop.f32.mrf.mxu0
    %v706 = vadd.f32 0.0, %v705
    %707 = vmatprep.mubr.f32.mxu0 0.0
    %708 = vmatmul.mubr.f32.gmra.mxu0 %v614
    %v709 = vpop.f32.mrf.mxu0
    %v710 = vadd.f32 0.0, %v709
    %v711 = vpop.f32.mrf.mxu0
    %v712 = vadd.f32 0.0, %v711
    %713 = vmatprep.mubr.f32.mxu0 0.0
    %714 = vmatmul.mubr.f32.gmra.mxu0 %v617
    %v715 = vpop.f32.mrf.mxu0
    %v716 = vadd.f32 0.0, %v715
    %v717 = vpop.f32.mrf.mxu0
    %v718 = vadd.f32 0.0, %v717
    %719 = vmatprep.mubr.f32.mxu0 0.0
    %720 = vmatmul.mubr.f32.gmra.mxu0 %v620
    %v721 = vpop.f32.mrf.mxu0
    %v722 = vadd.f32 0.0, %v721
    %v723 = vpop.f32.mrf.mxu0
    %v724 = vadd.f32 0.0, %v723
    %725 = vmatprep.mubr.f32.mxu0 0.0
    %726 = vmatmul.mubr.f32.gmra.mxu0 %v623
    %v727 = vpop.f32.mrf.mxu0
    %v728 = vadd.f32 0.0, %v727
    %v729 = vpop.f32.mrf.mxu0
    %v730 = vadd.f32 0.0, %v729
    %731 = vmatprep.mubr.f32.mxu0 0.0
    %732 = vmatmul.mubr.f32.gmra.mxu0 %v626
    %v733 = vpop.f32.mrf.mxu0
    %v734 = vadd.f32 0.0, %v733
    %v735 = vpop.f32.mrf.mxu0
    %v736 = vadd.f32 0.0, %v735
    %737 = vmatprep.mubr.f32.mxu0 0.0
    %738 = vmatmul.mubr.f32.gmra.mxu0 %v629
    %v739 = vpop.f32.mrf.mxu0
    %v740 = vadd.f32 0.0, %v739
    %v741 = vpop.f32.mrf.mxu0
    %v742 = vadd.f32 0.0, %v741
    %743 = vdwg.mxu0
    %v744 = vadd.f32 %v558, %v698
    %v745 = vadd.f32 %v559, %v700
    %v746 = vadd.f32 %v560, %v704
    %v747 = vadd.f32 %v561, %v706
    %v748 = vadd.f32 %v562, %v710
    %v749 = vadd.f32 %v563, %v712
    %v750 = vadd.f32 %v564, %v716
    %v751 = vadd.f32 %v565, %v718
    %v752 = vadd.f32 %v566, %v722
    %v753 = vadd.f32 %v567, %v724
    %v754 = vadd.f32 %v568, %v728
    %v755 = vadd.f32 %v569, %v730
    %v756 = vadd.f32 %v570, %v734
    %v757 = vadd.f32 %v571, %v736
    %v758 = vadd.f32 %v572, %v740
    %v759 = vadd.f32 %v573, %v742
    %v760 = vld [vmem:[%s0 + $0x4] sm:$0xff]
    %v761 = vld [vmem:[%s0 + $0xc] sm:$0xff]
    %v762 = vld [vmem:[%s0 + $0x14] sm:$0xff]
    %v763 = vld [vmem:[%s0 + $0x1c] sm:$0xff]
    %v764 = vld [vmem:[%s0 + $0x24] sm:$0xff]
    %v765 = vld [vmem:[%s0 + $0x2c] sm:$0xff]
    %v766 = vld [vmem:[%s0 + $0x34] sm:$0xff]
    %v767 = vld [vmem:[%s0 + $0x3c] sm:$0xf]
    %s768 = scalar_lea.vmem %s1, 768
    %v769 = vld [vmem:[%s768] sm:$0xff]
    %v770 = vld [vmem:[%s768 + $0x8] sm:$0xff]
    %v771 = vld [vmem:[%s768 + $0x10] sm:$0xff]
    %v772 = vld [vmem:[%s768 + $0x18] sm:$0xff]
    %v773 = vld [vmem:[%s768 + $0x20] sm:$0xff]
    %v774 = vld [vmem:[%s768 + $0x28] sm:$0xff]
    %v775 = vld [vmem:[%s768 + $0x30] sm:$0xff]
    %v776 = vld [vmem:[%s768 + $0x38] sm:$0xff]
    %v777 = vld [vmem:[%s768 + $0x40] sm:$0xff]
    %v778 = vld [vmem:[%s768 + $0x48] sm:$0xff]
    %v779 = vld [vmem:[%s768 + $0x50] sm:$0xff]
    %v780 = vld [vmem:[%s768 + $0x58] sm:$0xff]
    %v781 = vld [vmem:[%s768 + $0x60] sm:$0xff]
    %v782 = vld [vmem:[%s768 + $0x68] sm:$0xff]
    %v783 = vld [vmem:[%s768 + $0x70] sm:$0xff]
    %v784 = vld [vmem:[%s768 + $0x78] sm:$0xff]
    %v785 = vld [vmem:[%s768 + $0x80] sm:$0xff]
    %v786 = vld [vmem:[%s768 + $0x88] sm:$0xff]
    %v787 = vld [vmem:[%s768 + $0x90] sm:$0xff]
    %v788 = vld [vmem:[%s768 + $0x98] sm:$0xff]
    %v789 = vld [vmem:[%s768 + $0xa0] sm:$0xff]
    %v790 = vld [vmem:[%s768 + $0xa8] sm:$0xff]
    %v791 = vld [vmem:[%s768 + $0xb0] sm:$0xff]
    %v792 = vld [vmem:[%s768 + $0xb8] sm:$0xff]
    %v794 = vsel %vm113, %v760, 0
    %v797 = vsel %vm113, %v761, 0
    %v800 = vsel %vm113, %v762, 0
    %v803 = vsel %vm113, %v763, 0
    %v806 = vsel %vm113, %v764, 0
    %v809 = vsel %vm113, %v765, 0
    %v812 = vsel %vm113, %v766, 0
    %v815 = vsel %vm113, %v767, 0
    %817 = vmatprep.subr.mxu0 0.0
    %818 = vmatpush1.msra.mxu0 0.0
    %819 = vmatprep.subr.mxu0 0.0
    %820 = vmatpush1.msra.mxu0 0.0
    %821 = vmatprep.subr.mxu0 0.0
    %822 = vmatpush1.msra.mxu0 0.0
    %823 = vmatprep.subr.mxu0 0.0
    %824 = vmatpush1.msra.mxu0 0.0
    %825 = vmatprep.subr.mxu0 %v792
    %826 = vmatpush1.msra.mxu0 %v791
    %827 = vmatprep.subr.mxu0 %v790
    %828 = vmatpush1.msra.mxu0 %v789
    %829 = vmatprep.subr.mxu0 %v788
    %830 = vmatpush1.msra.mxu0 %v787
    %831 = vmatprep.subr.mxu0 %v786
    %832 = vmatpush1.msra.mxu0 %v785
    %833 = vmatprep.subr.mxu0 %v784
    %834 = vmatpush1.msra.mxu0 %v783
    %835 = vmatprep.subr.mxu0 %v782
    %836 = vmatpush1.msra.mxu0 %v781
    %837 = vmatprep.subr.mxu0 %v780
    %838 = vmatpush1.msra.mxu0 %v779
    %839 = vmatprep.subr.mxu0 %v778
    %840 = vmatpush1.msra.mxu0 %v777
    %841 = vmatprep.subr.mxu0 %v776
    %842 = vmatpush1.msra.mxu0 %v775
    %843 = vmatprep.subr.mxu0 %v774
    %844 = vmatpush1.msra.mxu0 %v773
    %845 = vmatprep.subr.mxu0 %v772
    %846 = vmatpush1.msra.mxu0 %v771
    %847 = vmatprep.subr.mxu0 %v770
    %848 = vmatpush1.msra.mxu0 %v769
    %849 = vmatprep.subr.mxu0 0.0
    %850 = vmatpush2.msra.mxu0 0.0
    %851 = vmatprep.subr.mxu0 0.0
    %852 = vmatpush2.msra.mxu0 0.0
    %853 = vmatprep.subr.mxu0 0.0
    %854 = vmatpush2.msra.mxu0 0.0
    %855 = vmatprep.subr.mxu0 0.0
    %856 = vmatpush2.msra.mxu0 0.0
    %857 = vmatprep.subr.mxu0 0.0
    %858 = vmatpush2.msra.mxu0 0.0
    %859 = vmatprep.subr.mxu0 0.0
    %860 = vmatpush2.msra.mxu0 0.0
    %861 = vmatprep.subr.mxu0 0.0
    %862 = vmatpush2.msra.mxu0 0.0
    %863 = vmatprep.subr.mxu0 0.0
    %864 = vmatpush2.msra.mxu0 0.0
    %865 = vmatprep.subr.mxu0 0.0
    %866 = vmatpush2.msra.mxu0 0.0
    %867 = vmatprep.subr.mxu0 0.0
    %868 = vmatpush2.msra.mxu0 0.0
    %869 = vmatprep.subr.mxu0 0.0
    %870 = vmatpush2.msra.mxu0 0.0
    %871 = vmatprep.subr.mxu0 0.0
    %872 = vmatpush2.msra.mxu0 0.0
    %873 = vmatprep.subr.mxu0 0.0
    %874 = vmatpush2.msra.mxu0 0.0
    %875 = vmatprep.subr.mxu0 0.0
    %876 = vmatpush2.msra.mxu0 0.0
    %877 = vmatprep.subr.mxu0 0.0
    %878 = vmatpush2.msra.mxu0 0.0
    %879 = vmatprep.subr.mxu0 0.0
    %880 = vmatpush2.msra.mxu0 0.0
    %881 = vmatprep.mubr.f32.mxu0 0.0
    %882 = vmatmul.mubr.f32.gmra.mxu0 %v794
    %v883 = vpop.f32.mrf.mxu0
    %v884 = vadd.f32 0.0, %v883
    %v885 = vpop.f32.mrf.mxu0
    %v886 = vadd.f32 0.0, %v885
    %887 = vmatprep.mubr.f32.mxu0 0.0
    %888 = vmatmul.mubr.f32.gmra.mxu0 %v797
    %v889 = vpop.f32.mrf.mxu0
    %v890 = vadd.f32 0.0, %v889
    %v891 = vpop.f32.mrf.mxu0
    %v892 = vadd.f32 0.0, %v891
    %893 = vmatprep.mubr.f32.mxu0 0.0
    %894 = vmatmul.mubr.f32.gmra.mxu0 %v800
    %v895 = vpop.f32.mrf.mxu0
    %v896 = vadd.f32 0.0, %v895
    %v897 = vpop.f32.mrf.mxu0
    %v898 = vadd.f32 0.0, %v897
    %899 = vmatprep.mubr.f32.mxu0 0.0
    %900 = vmatmul.mubr.f32.gmra.mxu0 %v803
    %v901 = vpop.f32.mrf.mxu0
    %v902 = vadd.f32 0.0, %v901
    %v903 = vpop.f32.mrf.mxu0
    %v904 = vadd.f32 0.0, %v903
    %905 = vmatprep.mubr.f32.mxu0 0.0
    %906 = vmatmul.mubr.f32.gmra.mxu0 %v806
    %v907 = vpop.f32.mrf.mxu0
    %v908 = vadd.f32 0.0, %v907
    %v909 = vpop.f32.mrf.mxu0
    %v910 = vadd.f32 0.0, %v909
    %911 = vmatprep.mubr.f32.mxu0 0.0
    %912 = vmatmul.mubr.f32.gmra.mxu0 %v809
    %v913 = vpop.f32.mrf.mxu0
    %v914 = vadd.f32 0.0, %v913
    %v915 = vpop.f32.mrf.mxu0
    %v916 = vadd.f32 0.0, %v915
    %917 = vmatprep.mubr.f32.mxu0 0.0
    %918 = vmatmul.mubr.f32.gmra.mxu0 %v812
    %v919 = vpop.f32.mrf.mxu0
    %v920 = vadd.f32 0.0, %v919
    %v921 = vpop.f32.mrf.mxu0
    %v922 = vadd.f32 0.0, %v921
    %923 = vmatprep.mubr.f32.mxu0 0.0
    %924 = vmatmul.mubr.f32.gmra.mxu0 %v815
    %v925 = vpop.f32.mrf.mxu0
    %v926 = vadd.f32 0.0, %v925
    %v927 = vpop.f32.mrf.mxu0
    %v928 = vadd.f32 0.0, %v927
    %929 = vdwg.mxu0
    %v930 = vadd.f32 %v744, %v884
    %v931 = vadd.f32 %v745, %v886
    %v932 = vadd.f32 %v746, %v890
    %v933 = vadd.f32 %v747, %v892
    %v934 = vadd.f32 %v748, %v896
    %v935 = vadd.f32 %v749, %v898
    %v936 = vadd.f32 %v750, %v902
    %v937 = vadd.f32 %v751, %v904
    %v938 = vadd.f32 %v752, %v908
    %v939 = vadd.f32 %v753, %v910
    %v940 = vadd.f32 %v754, %v914
    %v941 = vadd.f32 %v755, %v916
    %v942 = vadd.f32 %v756, %v920
    %v943 = vadd.f32 %v757, %v922
    %v944 = vadd.f32 %v758, %v926
    %v945 = vadd.f32 %v759, %v928
    %v946 = vld [vmem:[%s2] sm:$0x3]
    %v948 = vlaneseq
    %v949 = vshrl.u32 %v948, 7
    %v950 = vsub.s32 0, %v949
    %v951 = vrot.slane %v946, %v950
    %v952 = vlaneseq
    %v953 = vshrl.u32 %v952, 7
    %v954 = vsub.s32 1, %v953
    %v955 = vrot.slane %v946, %v954
    %v958 = vadd.f32 %v930, %v951
    %v959 = vadd.f32 %v931, %v955
    %v960 = vadd.f32 %v932, %v951
    %v961 = vadd.f32 %v933, %v955
    %v962 = vadd.f32 %v934, %v951
    %v963 = vadd.f32 %v935, %v955
    %v964 = vadd.f32 %v936, %v951
    %v965 = vadd.f32 %v937, %v955
    %v966 = vadd.f32 %v938, %v951
    %v967 = vadd.f32 %v939, %v955
    %v968 = vadd.f32 %v940, %v951
    %v969 = vadd.f32 %v941, %v955
    %v970 = vadd.f32 %v942, %v951
    %v971 = vadd.f32 %v943, %v955
    %v972 = vadd.f32 %v944, %v951
    %v973 = vadd.f32 %v945, %v955
    %v974 = vmax.f32 %v958, 0.0
    %v975 = vmax.f32 %v959, 0.0
    %v976 = vmax.f32 %v960, 0.0
    %v977 = vmax.f32 %v961, 0.0
    %v978 = vmax.f32 %v962, 0.0
    %v979 = vmax.f32 %v963, 0.0
    %v980 = vmax.f32 %v964, 0.0
    %v981 = vmax.f32 %v965, 0.0
    %v982 = vmax.f32 %v966, 0.0
    %v983 = vmax.f32 %v967, 0.0
    %v984 = vmax.f32 %v968, 0.0
    %v985 = vmax.f32 %v969, 0.0
    %v986 = vmax.f32 %v970, 0.0
    %v987 = vmax.f32 %v971, 0.0
    %v988 = vmax.f32 %v972, 0.0
    %v989 = vmax.f32 %v973, 0.0
    %v990 = vld [vmem:[%s3] sm:$0xff]
    %v991 = vld [vmem:[%s3 + $0x8] sm:$0xff]
    %v992 = vld [vmem:[%s3 + $0x10] sm:$0xff]
    %v993 = vld [vmem:[%s3 + $0x18] sm:$0xff]
    %v994 = vld [vmem:[%s3 + $0x20] sm:$0xff]
    %v995 = vld [vmem:[%s3 + $0x28] sm:$0xff]
    %v996 = vld [vmem:[%s3 + $0x30] sm:$0xff]
    %v997 = vld [vmem:[%s3 + $0x38] sm:$0xff]
    %v998 = vld [vmem:[%s3 + $0x40] sm:$0xff]
    %v999 = vld [vmem:[%s3 + $0x48] sm:$0xff]
    %v1000 = vld [vmem:[%s3 + $0x50] sm:$0xff]
    %v1001 = vld [vmem:[%s3 + $0x58] sm:$0xff]
    %v1002 = vld [vmem:[%s3 + $0x60] sm:$0xff]
    %v1003 = vld [vmem:[%s3 + $0x68] sm:$0xff]
    %v1004 = vld [vmem:[%s3 + $0x70] sm:$0xff]
    %v1005 = vld [vmem:[%s3 + $0x78] sm:$0xff]
    %v1006 = vld [vmem:[%s3 + $0x80] sm:$0xff]
    %v1007 = vld [vmem:[%s3 + $0x88] sm:$0xff]
    %v1008 = vld [vmem:[%s3 + $0x90] sm:$0xff]
    %v1009 = vld [vmem:[%s3 + $0x98] sm:$0xff]
    %v1010 = vld [vmem:[%s3 + $0xa0] sm:$0xff]
    %vm1011 = vcmask 326656
    %v1013 = vsel %vm1011, %v975, 0
    %v1016 = vsel %vm1011, %v977, 0
    %v1019 = vsel %vm1011, %v979, 0
    %v1022 = vsel %vm1011, %v981, 0
    %v1025 = vsel %vm1011, %v983, 0
    %v1028 = vsel %vm1011, %v985, 0
    %v1031 = vsel %vm1011, %v987, 0
    %v1034 = vsel %vm1011, %v989, 0
    %1036 = vmatprep.subr.mxu0 0.0
    %1037 = vmatpush1.msra.mxu0 %v1005
    %1038 = vmatprep.subr.mxu0 0.0
    %1039 = vmatpush1.msra.mxu0 %v1004
    %1040 = vmatprep.subr.mxu0 0.0
    %1041 = vmatpush1.msra.mxu0 %v1003
    %1042 = vmatprep.subr.mxu0 0.0
    %1043 = vmatpush1.msra.mxu0 %v1002
    %1044 = vmatprep.subr.mxu0 0.0
    %1045 = vmatpush1.msra.mxu0 %v1001
    %1046 = vmatprep.subr.mxu0 0.0
    %1047 = vmatpush1.msra.mxu0 %v1000
    %1048 = vmatprep.subr.mxu0 0.0
    %1049 = vmatpush1.msra.mxu0 %v999
    %1050 = vmatprep.subr.mxu0 0.0
    %1051 = vmatpush1.msra.mxu0 %v998
    %1052 = vmatprep.subr.mxu0 0.0
    %1053 = vmatpush1.msra.mxu0 %v997
    %1054 = vmatprep.subr.mxu0 0.0
    %1055 = vmatpush1.msra.mxu0 %v996
    %1056 = vmatprep.subr.mxu0 0.0
    %1057 = vmatpush1.msra.mxu0 %v995
    %1058 = vmatprep.subr.mxu0 0.0
    %1059 = vmatpush1.msra.mxu0 %v994
    %1060 = vmatprep.subr.mxu0 0.0
    %1061 = vmatpush1.msra.mxu0 %v993
    %1062 = vmatprep.subr.mxu0 0.0
    %1063 = vmatpush1.msra.mxu0 %v992
    %1064 = vmatprep.subr.mxu0 0.0
    %1065 = vmatpush1.msra.mxu0 %v991
    %1066 = vmatprep.subr.mxu0 0.0
    %1067 = vmatpush1.msra.mxu0 %v990
    %1068 = vmatprep.subr.mxu0 0.0
    %1069 = vmatpush2.msra.mxu0 0.0
    %1070 = vmatprep.subr.mxu0 0.0
    %1071 = vmatpush2.msra.mxu0 0.0
    %1072 = vmatprep.subr.mxu0 0.0
    %1073 = vmatpush2.msra.mxu0 0.0
    %1074 = vmatprep.subr.mxu0 0.0
    %1075 = vmatpush2.msra.mxu0 0.0
    %1076 = vmatprep.subr.mxu0 0.0
    %1077 = vmatpush2.msra.mxu0 0.0
    %1078 = vmatprep.subr.mxu0 0.0
    %1079 = vmatpush2.msra.mxu0 0.0
    %1080 = vmatprep.subr.mxu0 0.0
    %1081 = vmatpush2.msra.mxu0 0.0
    %1082 = vmatprep.subr.mxu0 0.0
    %1083 = vmatpush2.msra.mxu0 0.0
    %1084 = vmatprep.subr.mxu0 0.0
    %1085 = vmatpush2.msra.mxu0 0.0
    %1086 = vmatprep.subr.mxu0 0.0
    %1087 = vmatpush2.msra.mxu0 0.0
    %1088 = vmatprep.subr.mxu0 0.0
    %1089 = vmatpush2.msra.mxu0 0.0
    %1090 = vmatprep.subr.mxu0 0.0
    %1091 = vmatpush2.msra.mxu0 %v1010
    %1092 = vmatprep.subr.mxu0 0.0
    %1093 = vmatpush2.msra.mxu0 %v1009
    %1094 = vmatprep.subr.mxu0 0.0
    %1095 = vmatpush2.msra.mxu0 %v1008
    %1096 = vmatprep.subr.mxu0 0.0
    %1097 = vmatpush2.msra.mxu0 %v1007
    %1098 = vmatprep.subr.mxu0 0.0
    %1099 = vmatpush2.msra.mxu0 %v1006
    %1100 = vmatprep.mubr.f32.mxu0 %v1013
    %1101 = vmatmul.mubr.f32.gmra.mxu0 %v974
    %v1102 = vpop.f32.mrf.mxu0
    %v1103 = vadd.f32 0.0, %v1102
    %v1104 = vpop.f32.mrf.mxu0
    %1105 = vmatprep.mubr.f32.mxu0 %v1016
    %1106 = vmatmul.mubr.f32.gmra.mxu0 %v976
    %v1107 = vpop.f32.mrf.mxu0
    %v1108 = vadd.f32 0.0, %v1107
    %v1109 = vpop.f32.mrf.mxu0
    %1110 = vmatprep.mubr.f32.mxu0 %v1019
    %1111 = vmatmul.mubr.f32.gmra.mxu0 %v978
    %v1112 = vpop.f32.mrf.mxu0
    %v1113 = vadd.f32 0.0, %v1112
    %v1114 = vpop.f32.mrf.mxu0
    %1115 = vmatprep.mubr.f32.mxu0 %v1022
    %1116 = vmatmul.mubr.f32.gmra.mxu0 %v980
    %v1117 = vpop.f32.mrf.mxu0
    %v1118 = vadd.f32 0.0, %v1117
    %v1119 = vpop.f32.mrf.mxu0
    %1120 = vmatprep.mubr.f32.mxu0 %v1025
    %1121 = vmatmul.mubr.f32.gmra.mxu0 %v982
    %v1122 = vpop.f32.mrf.mxu0
    %v1123 = vadd.f32 0.0, %v1122
    %v1124 = vpop.f32.mrf.mxu0
    %1125 = vmatprep.mubr.f32.mxu0 %v1028
    %1126 = vmatmul.mubr.f32.gmra.mxu0 %v984
    %v1127 = vpop.f32.mrf.mxu0
    %v1128 = vadd.f32 0.0, %v1127
    %v1129 = vpop.f32.mrf.mxu0
    %1130 = vmatprep.mubr.f32.mxu0 %v1031
    %1131 = vmatmul.mubr.f32.gmra.mxu0 %v986
    %v1132 = vpop.f32.mrf.mxu0
    %v1133 = vadd.f32 0.0, %v1132
    %v1134 = vpop.f32.mrf.mxu0
    %1135 = vmatprep.mubr.f32.mxu0 %v1034
    %1136 = vmatmul.mubr.f32.gmra.mxu0 %v988
    %v1137 = vpop.f32.mrf.mxu0
    %v1138 = vadd.f32 0.0, %v1137
    %v1139 = vpop.f32.mrf.mxu0
    %1140 = vdwg.mxu0
    %s1141 = scalar_lea.vmem %s3, 168
    %v1142 = vld [vmem:[%s1141] sm:$0xff]
    %v1143 = vld [vmem:[%s1141 + $0x8] sm:$0xff]
    %v1144 = vld [vmem:[%s1141 + $0x10] sm:$0xff]
    %v1145 = vld [vmem:[%s1141 + $0x18] sm:$0xff]
    %v1146 = vld [vmem:[%s1141 + $0x20] sm:$0xff]
    %v1147 = vld [vmem:[%s1141 + $0x28] sm:$0xff]
    %v1148 = vld [vmem:[%s1141 + $0x30] sm:$0xff]
    %v1149 = vld [vmem:[%s1141 + $0x38] sm:$0xff]
    %v1150 = vld [vmem:[%s1141 + $0x40] sm:$0xff]
    %v1151 = vld [vmem:[%s1141 + $0x48] sm:$0xff]
    %v1152 = vld [vmem:[%s1141 + $0x50] sm:$0xff]
    %v1153 = vld [vmem:[%s1141 + $0x58] sm:$0xff]
    %v1154 = vld [vmem:[%s1141 + $0x60] sm:$0xff]
    %v1155 = vld [vmem:[%s1141 + $0x68] sm:$0xff]
    %v1156 = vld [vmem:[%s1141 + $0x70] sm:$0xff]
    %v1157 = vld [vmem:[%s1141 + $0x78] sm:$0xff]
    %v1158 = vld [vmem:[%s1141 + $0x80] sm:$0xff]
    %v1159 = vld [vmem:[%s1141 + $0x88] sm:$0xff]
    %v1160 = vld [vmem:[%s1141 + $0x90] sm:$0xff]
    %v1161 = vld [vmem:[%s1141 + $0x98] sm:$0xff]
    %v1162 = vld [vmem:[%s1141 + $0xa0] sm:$0xff]
    %1163 = vmatprep.subr.mxu0 0.0
    %1164 = vmatpush1.msra.mxu0 %v1157
    %1165 = vmatprep.subr.mxu0 0.0
    %1166 = vmatpush1.msra.mxu0 %v1156
    %1167 = vmatprep.subr.mxu0 0.0
    %1168 = vmatpush1.msra.mxu0 %v1155
    %1169 = vmatprep.subr.mxu0 0.0
    %1170 = vmatpush1.msra.mxu0 %v1154
    %1171 = vmatprep.subr.mxu0 0.0
    %1172 = vmatpush1.msra.mxu0 %v1153
    %1173 = vmatprep.subr.mxu0 0.0
    %1174 = vmatpush1.msra.mxu0 %v1152
    %1175 = vmatprep.subr.mxu0 0.0
    %1176 = vmatpush1.msra.mxu0 %v1151
    %1177 = vmatprep.subr.mxu0 0.0
    %1178 = vmatpush1.msra.mxu0 %v1150
    %1179 = vmatprep.subr.mxu0 0.0
    %1180 = vmatpush1.msra.mxu0 %v1149
    %1181 = vmatprep.subr.mxu0 0.0
    %1182 = vmatpush1.msra.mxu0 %v1148
    %1183 = vmatprep.subr.mxu0 0.0
    %1184 = vmatpush1.msra.mxu0 %v1147
    %1185 = vmatprep.subr.mxu0 0.0
    %1186 = vmatpush1.msra.mxu0 %v1146
    %1187 = vmatprep.subr.mxu0 0.0
    %1188 = vmatpush1.msra.mxu0 %v1145
    %1189 = vmatprep.subr.mxu0 0.0
    %1190 = vmatpush1.msra.mxu0 %v1144
    %1191 = vmatprep.subr.mxu0 0.0
    %1192 = vmatpush1.msra.mxu0 %v1143
    %1193 = vmatprep.subr.mxu0 0.0
    %1194 = vmatpush1.msra.mxu0 %v1142
    %1195 = vmatprep.subr.mxu0 0.0
    %1196 = vmatpush2.msra.mxu0 0.0
    %1197 = vmatprep.subr.mxu0 0.0
    %1198 = vmatpush2.msra.mxu0 0.0
    %1199 = vmatprep.subr.mxu0 0.0
    %1200 = vmatpush2.msra.mxu0 0.0
    %1201 = vmatprep.subr.mxu0 0.0
    %1202 = vmatpush2.msra.mxu0 0.0
    %1203 = vmatprep.subr.mxu0 0.0
    %1204 = vmatpush2.msra.mxu0 0.0
    %1205 = vmatprep.subr.mxu0 0.0
    %1206 = vmatpush2.msra.mxu0 0.0
    %1207 = vmatprep.subr.mxu0 0.0
    %1208 = vmatpush2.msra.mxu0 0.0
    %1209 = vmatprep.subr.mxu0 0.0
    %1210 = vmatpush2.msra.mxu0 0.0
    %1211 = vmatprep.subr.mxu0 0.0
    %1212 = vmatpush2.msra.mxu0 0.0
    %1213 = vmatprep.subr.mxu0 0.0
    %1214 = vmatpush2.msra.mxu0 0.0
    %1215 = vmatprep.subr.mxu0 0.0
    %1216 = vmatpush2.msra.mxu0 0.0
    %1217 = vmatprep.subr.mxu0 0.0
    %1218 = vmatpush2.msra.mxu0 %v1162
    %1219 = vmatprep.subr.mxu0 0.0
    %1220 = vmatpush2.msra.mxu0 %v1161
    %1221 = vmatprep.subr.mxu0 0.0
    %1222 = vmatpush2.msra.mxu0 %v1160
    %1223 = vmatprep.subr.mxu0 0.0
    %1224 = vmatpush2.msra.mxu0 %v1159
    %1225 = vmatprep.subr.mxu0 0.0
    %1226 = vmatpush2.msra.mxu0 %v1158
    %1227 = vmatprep.mubr.f32.mxu0 %v1013
    %1228 = vmatmul.mubr.f32.gmra.mxu0 %v974
    %v1229 = vpop.f32.mrf.mxu0
    %v1230 = vadd.f32 0.0, %v1229
    %v1231 = vpop.f32.mrf.mxu0
    %1232 = vmatprep.mubr.f32.mxu0 %v1016
    %1233 = vmatmul.mubr.f32.gmra.mxu0 %v976
    %v1234 = vpop.f32.mrf.mxu0
    %v1235 = vadd.f32 0.0, %v1234
    %v1236 = vpop.f32.mrf.mxu0
    %1237 = vmatprep.mubr.f32.mxu0 %v1019
    %1238 = vmatmul.mubr.f32.gmra.mxu0 %v978
    %v1239 = vpop.f32.mrf.mxu0
    %v1240 = vadd.f32 0.0, %v1239
    %v1241 = vpop.f32.mrf.mxu0
    %1242 = vmatprep.mubr.f32.mxu0 %v1022
    %1243 = vmatmul.mubr.f32.gmra.mxu0 %v980
    %v1244 = vpop.f32.mrf.mxu0
    %v1245 = vadd.f32 0.0, %v1244
    %v1246 = vpop.f32.mrf.mxu0
    %1247 = vmatprep.mubr.f32.mxu0 %v1025
    %1248 = vmatmul.mubr.f32.gmra.mxu0 %v982
    %v1249 = vpop.f32.mrf.mxu0
    %v1250 = vadd.f32 0.0, %v1249
    %v1251 = vpop.f32.mrf.mxu0
    %1252 = vmatprep.mubr.f32.mxu0 %v1028
    %1253 = vmatmul.mubr.f32.gmra.mxu0 %v984
    %v1254 = vpop.f32.mrf.mxu0
    %v1255 = vadd.f32 0.0, %v1254
    %v1256 = vpop.f32.mrf.mxu0
    %1257 = vmatprep.mubr.f32.mxu0 %v1031
    %1258 = vmatmul.mubr.f32.gmra.mxu0 %v986
    %v1259 = vpop.f32.mrf.mxu0
    %v1260 = vadd.f32 0.0, %v1259
    %v1261 = vpop.f32.mrf.mxu0
    %1262 = vmatprep.mubr.f32.mxu0 %v1034
    %1263 = vmatmul.mubr.f32.gmra.mxu0 %v988
    %v1264 = vpop.f32.mrf.mxu0
    %v1265 = vadd.f32 0.0, %v1264
    %v1266 = vpop.f32.mrf.mxu0
    %1267 = vdwg.mxu0
    %v1268 = vmax.f32 %v1103, %v1230
    %v1269 = vmax.f32 %v1108, %v1235
    %v1270 = vmax.f32 %v1113, %v1240
    %v1271 = vmax.f32 %v1118, %v1245
    %v1272 = vmax.f32 %v1123, %v1250
    %v1273 = vmax.f32 %v1128, %v1255
    %v1274 = vmax.f32 %v1133, %v1260
    %v1275 = vmax.f32 %v1138, %v1265
    %1276 = vst [vmem:[#allocation2] sm:$0xff] %v1268
    %1277 = vst [vmem:[#allocation2 + $0x8] sm:$0xff] %v1269
    %1278 = vst [vmem:[#allocation2 + $0x10] sm:$0xff] %v1270
    %1279 = vst [vmem:[#allocation2 + $0x18] sm:$0xff] %v1271
    %1280 = vst [vmem:[#allocation2 + $0x20] sm:$0xff] %v1272
    %1281 = vst [vmem:[#allocation2 + $0x28] sm:$0xff] %v1273
    %1282 = vst [vmem:[#allocation2 + $0x30] sm:$0xff] %v1274
    %1283 = vst [vmem:[#allocation2 + $0x38] sm:$0xf] %v1275
    %v1284 = vld [vmem:[#allocation2] sm:$0xff]
    %v1285 = vld [vmem:[#allocation2 + $0x8] sm:$0xff]
    %v1286 = vld [vmem:[#allocation2 + $0x10] sm:$0xff]
    %v1287 = vld [vmem:[#allocation2 + $0x18] sm:$0xff]
    %v1288 = vld [vmem:[#allocation2 + $0x20] sm:$0xff]
    %v1289 = vld [vmem:[#allocation2 + $0x28] sm:$0xff]
    %v1290 = vld [vmem:[#allocation2 + $0x30] sm:$0x7]
    %v1291 = vld [vmem:[#allocation2 + $0x1] sm:$0xff]
    %v1292 = vld [vmem:[#allocation2 + $0x9] sm:$0xff]
    %v1293 = vld [vmem:[#allocation2 + $0x11] sm:$0xff]
    %v1294 = vld [vmem:[#allocation2 + $0x19] sm:$0xff]
    %v1295 = vld [vmem:[#allocation2 + $0x21] sm:$0xff]
    %v1296 = vld [vmem:[#allocation2 + $0x29] sm:$0xff]
    %v1297 = vld [vmem:[#allocation2 + $0x31] sm:$0x7]
    %v1298 = vmax.f32 %v1284, %v1291
    %v1299 = vmax.f32 %v1285, %v1292
    %v1300 = vmax.f32 %v1286, %v1293
    %v1301 = vmax.f32 %v1287, %v1294
    %v1302 = vmax.f32 %v1288, %v1295
    %v1303 = vmax.f32 %v1289, %v1296
    %v1304 = vmax.f32 %v1290, %v1297
    %v1305 = vld [vmem:[%s4] sm:$0xff]
    %v1306 = vld [vmem:[%s4 + $0x8] sm:$0xff]
    %v1307 = vld [vmem:[%s4 + $0x10] sm:$0xff]
    %v1308 = vld [vmem:[%s4 + $0x18] sm:$0xff]
    %v1309 = vld [vmem:[%s4 + $0x20] sm:$0xff]
    %v1310 = vld [vmem:[%s4 + $0x28] sm:$0xff]
    %v1311 = vld [vmem:[%s4 + $0x30] sm:$0xff]
    %v1312 = vld [vmem:[%s4 + $0x38] sm:$0xff]
    %v1313 = vld [vmem:[%s4 + $0x40] sm:$0xff]
    %v1314 = vld [vmem:[%s4 + $0x48] sm:$0xff]
    %v1315 = vld [vmem:[%s4 + $0x50] sm:$0xff]
    %v1316 = vld [vmem:[%s4 + $0x58] sm:$0xff]
    %v1317 = vld [vmem:[%s4 + $0x60] sm:$0xff]
    %v1318 = vld [vmem:[%s4 + $0x68] sm:$0xff]
    %v1319 = vld [vmem:[%s4 + $0x70] sm:$0xff]
    %v1320 = vld [vmem:[%s4 + $0x78] sm:$0xff]
    %v1321 = vld [vmem:[%s4 + $0x80] sm:$0xff]
    %v1322 = vld [vmem:[%s4 + $0x88] sm:$0xff]
    %v1323 = vld [vmem:[%s4 + $0x90] sm:$0xff]
    %v1324 = vld [vmem:[%s4 + $0x98] sm:$0xff]
    %v1325 = vld [vmem:[%s4 + $0xa0] sm:$0xff]
    %v1326 = vld [vmem:[%s4 + $0xa8] sm:$0xff]
    %v1327 = vld [vmem:[%s4 + $0xb0] sm:$0xff]
    %v1328 = vld [vmem:[%s4 + $0xb8] sm:$0xff]
    %v1329 = vld [vmem:[%s4 + $0xc0] sm:$0xff]
    %v1330 = vld [vmem:[%s4 + $0xc8] sm:$0xff]
    %v1331 = vld [vmem:[%s4 + $0xd0] sm:$0xff]
    %v1332 = vld [vmem:[%s4 + $0xd8] sm:$0xff]
    %v1333 = vld [vmem:[%s4 + $0xe0] sm:$0xff]
    %v1334 = vld [vmem:[%s4 + $0xe8] sm:$0xff]
    %v1335 = vld [vmem:[%s4 + $0xf0] sm:$0xff]
    %v1336 = vld [vmem:[%s4 + $0xf8] sm:$0xff]
    %v1337 = vld [vmem:[#allocation2 + $0x2] sm:$0xff]
    %v1338 = vld [vmem:[#allocation2 + $0xa] sm:$0xff]
    %v1339 = vld [vmem:[#allocation2 + $0x12] sm:$0xff]
    %v1340 = vld [vmem:[#allocation2 + $0x1a] sm:$0xff]
    %v1341 = vld [vmem:[#allocation2 + $0x22] sm:$0xff]
    %v1342 = vld [vmem:[#allocation2 + $0x2a] sm:$0xff]
    %v1343 = vld [vmem:[#allocation2 + $0x32] sm:$0x7]
    %v1344 = vld [vmem:[#allocation2 + $0x3] sm:$0xff]
    %v1345 = vld [vmem:[#allocation2 + $0xb] sm:$0xff]
    %v1346 = vld [vmem:[#allocation2 + $0x13] sm:$0xff]
    %v1347 = vld [vmem:[#allocation2 + $0x1b] sm:$0xff]
    %v1348 = vld [vmem:[#allocation2 + $0x23] sm:$0xff]
    %v1349 = vld [vmem:[#allocation2 + $0x2b] sm:$0xff]
    %v1350 = vld [vmem:[#allocation2 + $0x33] sm:$0x7]
    %v1351 = vmax.f32 %v1337, %v1344
    %v1352 = vmax.f32 %v1338, %v1345
    %v1353 = vmax.f32 %v1339, %v1346
    %v1354 = vmax.f32 %v1340, %v1347
    %v1355 = vmax.f32 %v1341, %v1348
    %v1356 = vmax.f32 %v1342, %v1349
    %v1357 = vmax.f32 %v1343, %v1350
    %s1358 = scalar_lea.vmem %s4, 256
    %v1359 = vld [vmem:[%s1358] sm:$0xff]
    %v1360 = vld [vmem:[%s1358 + $0x8] sm:$0xff]
    %v1361 = vld [vmem:[%s1358 + $0x10] sm:$0xff]
    %v1362 = vld [vmem:[%s1358 + $0x18] sm:$0xff]
    %v1363 = vld [vmem:[%s1358 + $0x20] sm:$0xff]
    %v1364 = vld [vmem:[%s1358 + $0x28] sm:$0xff]
    %v1365 = vld [vmem:[%s1358 + $0x30] sm:$0xff]
    %v1366 = vld [vmem:[%s1358 + $0x38] sm:$0xff]
    %v1367 = vld [vmem:[%s1358 + $0x40] sm:$0xff]
    %v1368 = vld [vmem:[%s1358 + $0x48] sm:$0xff]
    %v1369 = vld [vmem:[%s1358 + $0x50] sm:$0xff]
    %v1370 = vld [vmem:[%s1358 + $0x58] sm:$0xff]
    %v1371 = vld [vmem:[%s1358 + $0x60] sm:$0xff]
    %v1372 = vld [vmem:[%s1358 + $0x68] sm:$0xff]
    %v1373 = vld [vmem:[%s1358 + $0x70] sm:$0xff]
    %v1374 = vld [vmem:[%s1358 + $0x78] sm:$0xff]
    %v1375 = vld [vmem:[%s1358 + $0x80] sm:$0xff]
    %v1376 = vld [vmem:[%s1358 + $0x88] sm:$0xff]
    %v1377 = vld [vmem:[%s1358 + $0x90] sm:$0xff]
    %v1378 = vld [vmem:[%s1358 + $0x98] sm:$0xff]
    %v1379 = vld [vmem:[%s1358 + $0xa0] sm:$0xff]
    %v1380 = vld [vmem:[%s1358 + $0xa8] sm:$0xff]
    %v1381 = vld [vmem:[%s1358 + $0xb0] sm:$0xff]
    %v1382 = vld [vmem:[%s1358 + $0xb8] sm:$0xff]
    %v1383 = vld [vmem:[%s1358 + $0xc0] sm:$0xff]
    %v1384 = vld [vmem:[%s1358 + $0xc8] sm:$0xff]
    %v1385 = vld [vmem:[%s1358 + $0xd0] sm:$0xff]
    %v1386 = vld [vmem:[%s1358 + $0xd8] sm:$0xff]
    %v1387 = vld [vmem:[%s1358 + $0xe0] sm:$0xff]
    %v1388 = vld [vmem:[%s1358 + $0xe8] sm:$0xff]
    %v1389 = vld [vmem:[%s1358 + $0xf0] sm:$0xff]
    %v1390 = vld [vmem:[%s1358 + $0xf8] sm:$0xff]
    %1391 = vmatprep.subr.mxu0 %v1390
    %1392 = vmatpush1.msra.mxu0 %v1389
    %1393 = vmatprep.subr.mxu0 %v1388
    %1394 = vmatpush1.msra.mxu0 %v1387
    %1395 = vmatprep.subr.mxu0 %v1386
    %1396 = vmatpush1.msra.mxu0 %v1385
    %1397 = vmatprep.subr.mxu0 %v1384
    %1398 = vmatpush1.msra.mxu0 %v1383
    %1399 = vmatprep.subr.mxu0 %v1382
    %1400 = vmatpush1.msra.mxu0 %v1381
    %1401 = vmatprep.subr.mxu0 %v1380
    %1402 = vmatpush1.msra.mxu0 %v1379
    %1403 = vmatprep.subr.mxu0 %v1378
    %1404 = vmatpush1.msra.mxu0 %v1377
    %1405 = vmatprep.subr.mxu0 %v1376
    %1406 = vmatpush1.msra.mxu0 %v1375
    %1407 = vmatprep.subr.mxu0 %v1374
    %1408 = vmatpush1.msra.mxu0 %v1373
    %1409 = vmatprep.subr.mxu0 %v1372
    %1410 = vmatpush1.msra.mxu0 %v1371
    %1411 = vmatprep.subr.mxu0 %v1370
    %1412 = vmatpush1.msra.mxu0 %v1369
    %1413 = vmatprep.subr.mxu0 %v1368
    %1414 = vmatpush1.msra.mxu0 %v1367
    %1415 = vmatprep.subr.mxu0 %v1366
    %1416 = vmatpush1.msra.mxu0 %v1365
    %1417 = vmatprep.subr.mxu0 %v1364
    %1418 = vmatpush1.msra.mxu0 %v1363
    %1419 = vmatprep.subr.mxu0 %v1362
    %1420 = vmatpush1.msra.mxu0 %v1361
    %1421 = vmatprep.subr.mxu0 %v1360
    %1422 = vmatpush1.msra.mxu0 %v1359
    %1423 = vmatprep.subr.mxu0 0.0
    %1424 = vmatpush2.msra.mxu0 0.0
    %1425 = vmatprep.subr.mxu0 0.0
    %1426 = vmatpush2.msra.mxu0 0.0
    %1427 = vmatprep.subr.mxu0 0.0
    %1428 = vmatpush2.msra.mxu0 0.0
    %1429 = vmatprep.subr.mxu0 0.0
    %1430 = vmatpush2.msra.mxu0 0.0
    %1431 = vmatprep.subr.mxu0 0.0
    %1432 = vmatpush2.msra.mxu0 0.0
    %1433 = vmatprep.subr.mxu0 0.0
    %1434 = vmatpush2.msra.mxu0 0.0
    %1435 = vmatprep.subr.mxu0 0.0
    %1436 = vmatpush2.msra.mxu0 0.0
    %1437 = vmatprep.subr.mxu0 0.0
    %1438 = vmatpush2.msra.mxu0 0.0
    %1439 = vmatprep.subr.mxu0 0.0
    %1440 = vmatpush2.msra.mxu0 0.0
    %1441 = vmatprep.subr.mxu0 0.0
    %1442 = vmatpush2.msra.mxu0 0.0
    %1443 = vmatprep.subr.mxu0 0.0
    %1444 = vmatpush2.msra.mxu0 0.0
    %1445 = vmatprep.subr.mxu0 0.0
    %1446 = vmatpush2.msra.mxu0 0.0
    %1447 = vmatprep.subr.mxu0 0.0
    %1448 = vmatpush2.msra.mxu0 0.0
    %1449 = vmatprep.subr.mxu0 0.0
    %1450 = vmatpush2.msra.mxu0 0.0
    %1451 = vmatprep.subr.mxu0 0.0
    %1452 = vmatpush2.msra.mxu0 0.0
    %1453 = vmatprep.subr.mxu0 0.0
    %1454 = vmatpush2.msra.mxu0 0.0
    %1455 = vmatprep.mubr.f32.mxu0 0.0
    %1456 = vmatmul.mubr.f32.gmra.mxu0 %v1351
    %v1457 = vpop.f32.mrf.mxu0
    %v1458 = vadd.f32 0.0, %v1457
    %v1459 = vpop.f32.mrf.mxu0
    %v1460 = vadd.f32 0.0, %v1459
    %1461 = vmatprep.mubr.f32.mxu0 0.0
    %1462 = vmatmul.mubr.f32.gmra.mxu0 %v1352
    %v1463 = vpop.f32.mrf.mxu0
    %v1464 = vadd.f32 0.0, %v1463
    %v1465 = vpop.f32.mrf.mxu0
    %v1466 = vadd.f32 0.0, %v1465
    %1467 = vmatprep.mubr.f32.mxu0 0.0
    %1468 = vmatmul.mubr.f32.gmra.mxu0 %v1353
    %v1469 = vpop.f32.mrf.mxu0
    %v1470 = vadd.f32 0.0, %v1469
    %v1471 = vpop.f32.mrf.mxu0
    %v1472 = vadd.f32 0.0, %v1471
    %1473 = vmatprep.mubr.f32.mxu0 0.0
    %1474 = vmatmul.mubr.f32.gmra.mxu0 %v1354
    %v1475 = vpop.f32.mrf.mxu0
    %v1476 = vadd.f32 0.0, %v1475
    %v1477 = vpop.f32.mrf.mxu0
    %v1478 = vadd.f32 0.0, %v1477
    %1479 = vmatprep.mubr.f32.mxu0 0.0
    %1480 = vmatmul.mubr.f32.gmra.mxu0 %v1355
    %v1481 = vpop.f32.mrf.mxu0
    %v1482 = vadd.f32 0.0, %v1481
    %v1483 = vpop.f32.mrf.mxu0
    %v1484 = vadd.f32 0.0, %v1483
    %1485 = vmatprep.mubr.f32.mxu0 0.0
    %1486 = vmatmul.mubr.f32.gmra.mxu0 %v1356
    %v1487 = vpop.f32.mrf.mxu0
    %v1488 = vadd.f32 0.0, %v1487
    %v1489 = vpop.f32.mrf.mxu0
    %v1490 = vadd.f32 0.0, %v1489
    %1491 = vmatprep.mubr.f32.mxu0 0.0
    %1492 = vmatmul.mubr.f32.gmra.mxu0 %v1357
    %v1493 = vpop.f32.mrf.mxu0
    %v1494 = vadd.f32 0.0, %v1493
    %v1495 = vpop.f32.mrf.mxu0
    %v1496 = vadd.f32 0.0, %v1495
    %1497 = vdwg.mxu0
    %1498 = vmatprep.subr.mxu0 %v1336
    %1499 = vmatpush1.msra.mxu0 %v1335
    %1500 = vmatprep.subr.mxu0 %v1334
    %1501 = vmatpush1.msra.mxu0 %v1333
    %1502 = vmatprep.subr.mxu0 %v1332
    %1503 = vmatpush1.msra.mxu0 %v1331
    %1504 = vmatprep.subr.mxu0 %v1330
    %1505 = vmatpush1.msra.mxu0 %v1329
    %1506 = vmatprep.subr.mxu0 %v1328
    %1507 = vmatpush1.msra.mxu0 %v1327
    %1508 = vmatprep.subr.mxu0 %v1326
    %1509 = vmatpush1.msra.mxu0 %v1325
    %1510 = vmatprep.subr.mxu0 %v1324
    %1511 = vmatpush1.msra.mxu0 %v1323
    %1512 = vmatprep.subr.mxu0 %v1322
    %1513 = vmatpush1.msra.mxu0 %v1321
    %1514 = vmatprep.subr.mxu0 %v1320
    %1515 = vmatpush1.msra.mxu0 %v1319
    %1516 = vmatprep.subr.mxu0 %v1318
    %1517 = vmatpush1.msra.mxu0 %v1317
    %1518 = vmatprep.subr.mxu0 %v1316
    %1519 = vmatpush1.msra.mxu0 %v1315
    %1520 = vmatprep.subr.mxu0 %v1314
    %1521 = vmatpush1.msra.mxu0 %v1313
    %1522 = vmatprep.subr.mxu0 %v1312
    %1523 = vmatpush1.msra.mxu0 %v1311
    %1524 = vmatprep.subr.mxu0 %v1310
    %1525 = vmatpush1.msra.mxu0 %v1309
    %1526 = vmatprep.subr.mxu0 %v1308
    %1527 = vmatpush1.msra.mxu0 %v1307
    %1528 = vmatprep.subr.mxu0 %v1306
    %1529 = vmatpush1.msra.mxu0 %v1305
    %1530 = vmatprep.subr.mxu0 0.0
    %1531 = vmatpush2.msra.mxu0 0.0
    %1532 = vmatprep.subr.mxu0 0.0
    %1533 = vmatpush2.msra.mxu0 0.0
    %1534 = vmatprep.subr.mxu0 0.0
    %1535 = vmatpush2.msra.mxu0 0.0
    %1536 = vmatprep.subr.mxu0 0.0
    %1537 = vmatpush2.msra.mxu0 0.0
    %1538 = vmatprep.subr.mxu0 0.0
    %1539 = vmatpush2.msra.mxu0 0.0
    %1540 = vmatprep.subr.mxu0 0.0
    %1541 = vmatpush2.msra.mxu0 0.0
    %1542 = vmatprep.subr.mxu0 0.0
    %1543 = vmatpush2.msra.mxu0 0.0
    %1544 = vmatprep.subr.mxu0 0.0
    %1545 = vmatpush2.msra.mxu0 0.0
    %1546 = vmatprep.subr.mxu0 0.0
    %1547 = vmatpush2.msra.mxu0 0.0
    %1548 = vmatprep.subr.mxu0 0.0
    %1549 = vmatpush2.msra.mxu0 0.0
    %1550 = vmatprep.subr.mxu0 0.0
    %1551 = vmatpush2.msra.mxu0 0.0
    %1552 = vmatprep.subr.mxu0 0.0
    %1553 = vmatpush2.msra.mxu0 0.0
    %1554 = vmatprep.subr.mxu0 0.0
    %1555 = vmatpush2.msra.mxu0 0.0
    %1556 = vmatprep.subr.mxu0 0.0
    %1557 = vmatpush2.msra.mxu0 0.0
    %1558 = vmatprep.subr.mxu0 0.0
    %1559 = vmatpush2.msra.mxu0 0.0
    %1560 = vmatprep.subr.mxu0 0.0
    %1561 = vmatpush2.msra.mxu0 0.0
    %1562 = vmatprep.mubr.f32.mxu0 0.0
    %1563 = vmatmul.mubr.f32.gmra.mxu0 %v1298
    %v1564 = vpop.f32.mrf.mxu0
    %v1565 = vadd.f32 %v1458, %v1564
    %v1566 = vpop.f32.mrf.mxu0
    %v1567 = vadd.f32 %v1460, %v1566
    %1568 = vmatprep.mubr.f32.mxu0 0.0
    %1569 = vmatmul.mubr.f32.gmra.mxu0 %v1299
    %v1570 = vpop.f32.mrf.mxu0
    %v1571 = vadd.f32 %v1464, %v1570
    %v1572 = vpop.f32.mrf.mxu0
    %v1573 = vadd.f32 %v1466, %v1572
    %1574 = vmatprep.mubr.f32.mxu0 0.0
    %1575 = vmatmul.mubr.f32.gmra.mxu0 %v1300
    %v1576 = vpop.f32.mrf.mxu0
    %v1577 = vadd.f32 %v1470, %v1576
    %v1578 = vpop.f32.mrf.mxu0
    %v1579 = vadd.f32 %v1472, %v1578
    %1580 = vmatprep.mubr.f32.mxu0 0.0
    %1581 = vmatmul.mubr.f32.gmra.mxu0 %v1301
    %v1582 = vpop.f32.mrf.mxu0
    %v1583 = vadd.f32 %v1476, %v1582
    %v1584 = vpop.f32.mrf.mxu0
    %v1585 = vadd.f32 %v1478, %v1584
    %1586 = vmatprep.mubr.f32.mxu0 0.0
    %1587 = vmatmul.mubr.f32.gmra.mxu0 %v1302
    %v1588 = vpop.f32.mrf.mxu0
    %v1589 = vadd.f32 %v1482, %v1588
    %v1590 = vpop.f32.mrf.mxu0
    %v1591 = vadd.f32 %v1484, %v1590
    %1592 = vmatprep.mubr.f32.mxu0 0.0
    %1593 = vmatmul.mubr.f32.gmra.mxu0 %v1303
    %v1594 = vpop.f32.mrf.mxu0
    %v1595 = vadd.f32 %v1488, %v1594
    %v1596 = vpop.f32.mrf.mxu0
    %v1597 = vadd.f32 %v1490, %v1596
    %1598 = vmatprep.mubr.f32.mxu0 0.0
    %1599 = vmatmul.mubr.f32.gmra.mxu0 %v1304
    %v1600 = vpop.f32.mrf.mxu0
    %v1601 = vadd.f32 %v1494, %v1600
    %v1602 = vpop.f32.mrf.mxu0
    %v1603 = vadd.f32 %v1496, %v1602
    %1604 = vdwg.mxu0
    %v1605 = vld [vmem:[#allocation2 + $0x4] sm:$0xff]
    %v1606 = vld [vmem:[#allocation2 + $0xc] sm:$0xff]
    %v1607 = vld [vmem:[#allocation2 + $0x14] sm:$0xff]
    %v1608 = vld [vmem:[#allocation2 + $0x1c] sm:$0xff]
    %v1609 = vld [vmem:[#allocation2 + $0x24] sm:$0xff]
    %v1610 = vld [vmem:[#allocation2 + $0x2c] sm:$0xff]
    %v1611 = vld [vmem:[#allocation2 + $0x34] sm:$0x7]
    %v1612 = vld [vmem:[#allocation2 + $0x5] sm:$0xff]
    %v1613 = vld [vmem:[#allocation2 + $0xd] sm:$0xff]
    %v1614 = vld [vmem:[#allocation2 + $0x15] sm:$0xff]
    %v1615 = vld [vmem:[#allocation2 + $0x1d] sm:$0xff]
    %v1616 = vld [vmem:[#allocation2 + $0x25] sm:$0xff]
    %v1617 = vld [vmem:[#allocation2 + $0x2d] sm:$0xff]
    %v1618 = vld [vmem:[#allocation2 + $0x35] sm:$0x7]
    %v1619 = vmax.f32 %v1605, %v1612
    %v1620 = vmax.f32 %v1606, %v1613
    %v1621 = vmax.f32 %v1607, %v1614
    %v1622 = vmax.f32 %v1608, %v1615
    %v1623 = vmax.f32 %v1609, %v1616
    %v1624 = vmax.f32 %v1610, %v1617
    %v1625 = vmax.f32 %v1611, %v1618
    %s1626 = scalar_lea.vmem %s4, 512
    %v1627 = vld [vmem:[%s1626] sm:$0xff]
    %v1628 = vld [vmem:[%s1626 + $0x8] sm:$0xff]
    %v1629 = vld [vmem:[%s1626 + $0x10] sm:$0xff]
    %v1630 = vld [vmem:[%s1626 + $0x18] sm:$0xff]
    %v1631 = vld [vmem:[%s1626 + $0x20] sm:$0xff]
    %v1632 = vld [vmem:[%s1626 + $0x28] sm:$0xff]
    %v1633 = vld [vmem:[%s1626 + $0x30] sm:$0xff]
    %v1634 = vld [vmem:[%s1626 + $0x38] sm:$0xff]
    %v1635 = vld [vmem:[%s1626 + $0x40] sm:$0xff]
    %v1636 = vld [vmem:[%s1626 + $0x48] sm:$0xff]
    %v1637 = vld [vmem:[%s1626 + $0x50] sm:$0xff]
    %v1638 = vld [vmem:[%s1626 + $0x58] sm:$0xff]
    %v1639 = vld [vmem:[%s1626 + $0x60] sm:$0xff]
    %v1640 = vld [vmem:[%s1626 + $0x68] sm:$0xff]
    %v1641 = vld [vmem:[%s1626 + $0x70] sm:$0xff]
    %v1642 = vld [vmem:[%s1626 + $0x78] sm:$0xff]
    %v1643 = vld [vmem:[%s1626 + $0x80] sm:$0xff]
    %v1644 = vld [vmem:[%s1626 + $0x88] sm:$0xff]
    %v1645 = vld [vmem:[%s1626 + $0x90] sm:$0xff]
    %v1646 = vld [vmem:[%s1626 + $0x98] sm:$0xff]
    %v1647 = vld [vmem:[%s1626 + $0xa0] sm:$0xff]
    %v1648 = vld [vmem:[%s1626 + $0xa8] sm:$0xff]
    %v1649 = vld [vmem:[%s1626 + $0xb0] sm:$0xff]
    %v1650 = vld [vmem:[%s1626 + $0xb8] sm:$0xff]
    %v1651 = vld [vmem:[%s1626 + $0xc0] sm:$0xff]
    %v1652 = vld [vmem:[%s1626 + $0xc8] sm:$0xff]
    %v1653 = vld [vmem:[%s1626 + $0xd0] sm:$0xff]
    %v1654 = vld [vmem:[%s1626 + $0xd8] sm:$0xff]
    %v1655 = vld [vmem:[%s1626 + $0xe0] sm:$0xff]
    %v1656 = vld [vmem:[%s1626 + $0xe8] sm:$0xff]
    %v1657 = vld [vmem:[%s1626 + $0xf0] sm:$0xff]
    %v1658 = vld [vmem:[%s1626 + $0xf8] sm:$0xff]
    %1659 = vmatprep.subr.mxu0 %v1658
    %1660 = vmatpush1.msra.mxu0 %v1657
    %1661 = vmatprep.subr.mxu0 %v1656
    %1662 = vmatpush1.msra.mxu0 %v1655
    %1663 = vmatprep.subr.mxu0 %v1654
    %1664 = vmatpush1.msra.mxu0 %v1653
    %1665 = vmatprep.subr.mxu0 %v1652
    %1666 = vmatpush1.msra.mxu0 %v1651
    %1667 = vmatprep.subr.mxu0 %v1650
    %1668 = vmatpush1.msra.mxu0 %v1649
    %1669 = vmatprep.subr.mxu0 %v1648
    %1670 = vmatpush1.msra.mxu0 %v1647
    %1671 = vmatprep.subr.mxu0 %v1646
    %1672 = vmatpush1.msra.mxu0 %v1645
    %1673 = vmatprep.subr.mxu0 %v1644
    %1674 = vmatpush1.msra.mxu0 %v1643
    %1675 = vmatprep.subr.mxu0 %v1642
    %1676 = vmatpush1.msra.mxu0 %v1641
    %1677 = vmatprep.subr.mxu0 %v1640
    %1678 = vmatpush1.msra.mxu0 %v1639
    %1679 = vmatprep.subr.mxu0 %v1638
    %1680 = vmatpush1.msra.mxu0 %v1637
    %1681 = vmatprep.subr.mxu0 %v1636
    %1682 = vmatpush1.msra.mxu0 %v1635
    %1683 = vmatprep.subr.mxu0 %v1634
    %1684 = vmatpush1.msra.mxu0 %v1633
    %1685 = vmatprep.subr.mxu0 %v1632
    %1686 = vmatpush1.msra.mxu0 %v1631
    %1687 = vmatprep.subr.mxu0 %v1630
    %1688 = vmatpush1.msra.mxu0 %v1629
    %1689 = vmatprep.subr.mxu0 %v1628
    %1690 = vmatpush1.msra.mxu0 %v1627
    %1691 = vmatprep.subr.mxu0 0.0
    %1692 = vmatpush2.msra.mxu0 0.0
    %1693 = vmatprep.subr.mxu0 0.0
    %1694 = vmatpush2.msra.mxu0 0.0
    %1695 = vmatprep.subr.mxu0 0.0
    %1696 = vmatpush2.msra.mxu0 0.0
    %1697 = vmatprep.subr.mxu0 0.0
    %1698 = vmatpush2.msra.mxu0 0.0
    %1699 = vmatprep.subr.mxu0 0.0
    %1700 = vmatpush2.msra.mxu0 0.0
    %1701 = vmatprep.subr.mxu0 0.0
    %1702 = vmatpush2.msra.mxu0 0.0
    %1703 = vmatprep.subr.mxu0 0.0
    %1704 = vmatpush2.msra.mxu0 0.0
    %1705 = vmatprep.subr.mxu0 0.0
    %1706 = vmatpush2.msra.mxu0 0.0
    %1707 = vmatprep.subr.mxu0 0.0
    %1708 = vmatpush2.msra.mxu0 0.0
    %1709 = vmatprep.subr.mxu0 0.0
    %1710 = vmatpush2.msra.mxu0 0.0
    %1711 = vmatprep.subr.mxu0 0.0
    %1712 = vmatpush2.msra.mxu0 0.0
    %1713 = vmatprep.subr.mxu0 0.0
    %1714 = vmatpush2.msra.mxu0 0.0
    %1715 = vmatprep.subr.mxu0 0.0
    %1716 = vmatpush2.msra.mxu0 0.0
    %1717 = vmatprep.subr.mxu0 0.0
    %1718 = vmatpush2.msra.mxu0 0.0
    %1719 = vmatprep.subr.mxu0 0.0
    %1720 = vmatpush2.msra.mxu0 0.0
    %1721 = vmatprep.subr.mxu0 0.0
    %1722 = vmatpush2.msra.mxu0 0.0
    %1723 = vmatprep.mubr.f32.mxu0 0.0
    %1724 = vmatmul.mubr.f32.gmra.mxu0 %v1619
    %v1725 = vpop.f32.mrf.mxu0
    %v1726 = vadd.f32 0.0, %v1725
    %v1727 = vpop.f32.mrf.mxu0
    %v1728 = vadd.f32 0.0, %v1727
    %1729 = vmatprep.mubr.f32.mxu0 0.0
    %1730 = vmatmul.mubr.f32.gmra.mxu0 %v1620
    %v1731 = vpop.f32.mrf.mxu0
    %v1732 = vadd.f32 0.0, %v1731
    %v1733 = vpop.f32.mrf.mxu0
    %v1734 = vadd.f32 0.0, %v1733
    %1735 = vmatprep.mubr.f32.mxu0 0.0
    %1736 = vmatmul.mubr.f32.gmra.mxu0 %v1621
    %v1737 = vpop.f32.mrf.mxu0
    %v1738 = vadd.f32 0.0, %v1737
    %v1739 = vpop.f32.mrf.mxu0
    %v1740 = vadd.f32 0.0, %v1739
    %1741 = vmatprep.mubr.f32.mxu0 0.0
    %1742 = vmatmul.mubr.f32.gmra.mxu0 %v1622
    %v1743 = vpop.f32.mrf.mxu0
    %v1744 = vadd.f32 0.0, %v1743
    %v1745 = vpop.f32.mrf.mxu0
    %v1746 = vadd.f32 0.0, %v1745
    %1747 = vmatprep.mubr.f32.mxu0 0.0
    %1748 = vmatmul.mubr.f32.gmra.mxu0 %v1623
    %v1749 = vpop.f32.mrf.mxu0
    %v1750 = vadd.f32 0.0, %v1749
    %v1751 = vpop.f32.mrf.mxu0
    %v1752 = vadd.f32 0.0, %v1751
    %1753 = vmatprep.mubr.f32.mxu0 0.0
    %1754 = vmatmul.mubr.f32.gmra.mxu0 %v1624
    %v1755 = vpop.f32.mrf.mxu0
    %v1756 = vadd.f32 0.0, %v1755
    %v1757 = vpop.f32.mrf.mxu0
    %v1758 = vadd.f32 0.0, %v1757
    %1759 = vmatprep.mubr.f32.mxu0 0.0
    %1760 = vmatmul.mubr.f32.gmra.mxu0 %v1625
    %v1761 = vpop.f32.mrf.mxu0
    %v1762 = vadd.f32 0.0, %v1761
    %v1763 = vpop.f32.mrf.mxu0
    %v1764 = vadd.f32 0.0, %v1763
    %1765 = vdwg.mxu0
    %v1766 = vadd.f32 %v1565, %v1726
    %v1767 = vadd.f32 %v1567, %v1728
    %v1768 = vadd.f32 %v1571, %v1732
    %v1769 = vadd.f32 %v1573, %v1734
    %v1770 = vadd.f32 %v1577, %v1738
    %v1771 = vadd.f32 %v1579, %v1740
    %v1772 = vadd.f32 %v1583, %v1744
    %v1773 = vadd.f32 %v1585, %v1746
    %v1774 = vadd.f32 %v1589, %v1750
    %v1775 = vadd.f32 %v1591, %v1752
    %v1776 = vadd.f32 %v1595, %v1756
    %v1777 = vadd.f32 %v1597, %v1758
    %v1778 = vadd.f32 %v1601, %v1762
    %v1779 = vadd.f32 %v1603, %v1764
    %v1780 = vld [vmem:[#allocation2 + $0x6] sm:$0xff]
    %v1781 = vld [vmem:[#allocation2 + $0xe] sm:$0xff]
    %v1782 = vld [vmem:[#allocation2 + $0x16] sm:$0xff]
    %v1783 = vld [vmem:[#allocation2 + $0x1e] sm:$0xff]
    %v1784 = vld [vmem:[#allocation2 + $0x26] sm:$0xff]
    %v1785 = vld [vmem:[#allocation2 + $0x2e] sm:$0xff]
    %v1786 = vld [vmem:[#allocation2 + $0x36] sm:$0x7]
    %v1787 = vld [vmem:[#allocation2 + $0x7] sm:$0xff]
    %v1788 = vld [vmem:[#allocation2 + $0xf] sm:$0xff]
    %v1789 = vld [vmem:[#allocation2 + $0x17] sm:$0xff]
    %v1790 = vld [vmem:[#allocation2 + $0x1f] sm:$0xff]
    %v1791 = vld [vmem:[#allocation2 + $0x27] sm:$0xff]
    %v1792 = vld [vmem:[#allocation2 + $0x2f] sm:$0xff]
    %v1793 = vld [vmem:[#allocation2 + $0x37] sm:$0x7]
    %v1794 = vmax.f32 %v1780, %v1787
    %v1795 = vmax.f32 %v1781, %v1788
    %v1796 = vmax.f32 %v1782, %v1789
    %v1797 = vmax.f32 %v1783, %v1790
    %v1798 = vmax.f32 %v1784, %v1791
    %v1799 = vmax.f32 %v1785, %v1792
    %v1800 = vmax.f32 %v1786, %v1793
    %s1801 = scalar_lea.vmem %s4, 768
    %v1802 = vld [vmem:[%s1801] sm:$0xff]
    %v1803 = vld [vmem:[%s1801 + $0x8] sm:$0xff]
    %v1804 = vld [vmem:[%s1801 + $0x10] sm:$0xff]
    %v1805 = vld [vmem:[%s1801 + $0x18] sm:$0xff]
    %v1806 = vld [vmem:[%s1801 + $0x20] sm:$0xff]
    %v1807 = vld [vmem:[%s1801 + $0x28] sm:$0xff]
    %v1808 = vld [vmem:[%s1801 + $0x30] sm:$0xff]
    %v1809 = vld [vmem:[%s1801 + $0x38] sm:$0xff]
    %v1810 = vld [vmem:[%s1801 + $0x40] sm:$0xff]
    %v1811 = vld [vmem:[%s1801 + $0x48] sm:$0xff]
    %v1812 = vld [vmem:[%s1801 + $0x50] sm:$0xff]
    %v1813 = vld [vmem:[%s1801 + $0x58] sm:$0xff]
    %v1814 = vld [vmem:[%s1801 + $0x60] sm:$0xff]
    %v1815 = vld [vmem:[%s1801 + $0x68] sm:$0xff]
    %v1816 = vld [vmem:[%s1801 + $0x70] sm:$0xff]
    %v1817 = vld [vmem:[%s1801 + $0x78] sm:$0xff]
    %v1818 = vld [vmem:[%s1801 + $0x80] sm:$0xff]
    %v1819 = vld [vmem:[%s1801 + $0x88] sm:$0xff]
    %v1820 = vld [vmem:[%s1801 + $0x90] sm:$0xff]
    %v1821 = vld [vmem:[%s1801 + $0x98] sm:$0xff]
    %v1822 = vld [vmem:[%s1801 + $0xa0] sm:$0xff]
    %v1823 = vld [vmem:[%s1801 + $0xa8] sm:$0xff]
    %v1824 = vld [vmem:[%s1801 + $0xb0] sm:$0xff]
    %v1825 = vld [vmem:[%s1801 + $0xb8] sm:$0xff]
    %v1826 = vld [vmem:[%s1801 + $0xc0] sm:$0xff]
    %v1827 = vld [vmem:[%s1801 + $0xc8] sm:$0xff]
    %v1828 = vld [vmem:[%s1801 + $0xd0] sm:$0xff]
    %v1829 = vld [vmem:[%s1801 + $0xd8] sm:$0xff]
    %v1830 = vld [vmem:[%s1801 + $0xe0] sm:$0xff]
    %v1831 = vld [vmem:[%s1801 + $0xe8] sm:$0xff]
    %v1832 = vld [vmem:[%s1801 + $0xf0] sm:$0xff]
    %v1833 = vld [vmem:[%s1801 + $0xf8] sm:$0xff]
    %1834 = vmatprep.subr.mxu0 %v1833
    %1835 = vmatpush1.msra.mxu0 %v1832
    %1836 = vmatprep.subr.mxu0 %v1831
    %1837 = vmatpush1.msra.mxu0 %v1830
    %1838 = vmatprep.subr.mxu0 %v1829
    %1839 = vmatpush1.msra.mxu0 %v1828
    %1840 = vmatprep.subr.mxu0 %v1827
    %1841 = vmatpush1.msra.mxu0 %v1826
    %1842 = vmatprep.subr.mxu0 %v1825
    %1843 = vmatpush1.msra.mxu0 %v1824
    %1844 = vmatprep.subr.mxu0 %v1823
    %1845 = vmatpush1.msra.mxu0 %v1822
    %1846 = vmatprep.subr.mxu0 %v1821
    %1847 = vmatpush1.msra.mxu0 %v1820
    %1848 = vmatprep.subr.mxu0 %v1819
    %1849 = vmatpush1.msra.mxu0 %v1818
    %1850 = vmatprep.subr.mxu0 %v1817
    %1851 = vmatpush1.msra.mxu0 %v1816
    %1852 = vmatprep.subr.mxu0 %v1815
    %1853 = vmatpush1.msra.mxu0 %v1814
    %1854 = vmatprep.subr.mxu0 %v1813
    %1855 = vmatpush1.msra.mxu0 %v1812
    %1856 = vmatprep.subr.mxu0 %v1811
    %1857 = vmatpush1.msra.mxu0 %v1810
    %1858 = vmatprep.subr.mxu0 %v1809
    %1859 = vmatpush1.msra.mxu0 %v1808
    %1860 = vmatprep.subr.mxu0 %v1807
    %1861 = vmatpush1.msra.mxu0 %v1806
    %1862 = vmatprep.subr.mxu0 %v1805
    %1863 = vmatpush1.msra.mxu0 %v1804
    %1864 = vmatprep.subr.mxu0 %v1803
    %1865 = vmatpush1.msra.mxu0 %v1802
    %1866 = vmatprep.subr.mxu0 0.0
    %1867 = vmatpush2.msra.mxu0 0.0
    %1868 = vmatprep.subr.mxu0 0.0
    %1869 = vmatpush2.msra.mxu0 0.0
    %1870 = vmatprep.subr.mxu0 0.0
    %1871 = vmatpush2.msra.mxu0 0.0
    %1872 = vmatprep.subr.mxu0 0.0
    %1873 = vmatpush2.msra.mxu0 0.0
    %1874 = vmatprep.subr.mxu0 0.0
    %1875 = vmatpush2.msra.mxu0 0.0
    %1876 = vmatprep.subr.mxu0 0.0
    %1877 = vmatpush2.msra.mxu0 0.0
    %1878 = vmatprep.subr.mxu0 0.0
    %1879 = vmatpush2.msra.mxu0 0.0
    %1880 = vmatprep.subr.mxu0 0.0
    %1881 = vmatpush2.msra.mxu0 0.0
    %1882 = vmatprep.subr.mxu0 0.0
    %1883 = vmatpush2.msra.mxu0 0.0
    %1884 = vmatprep.subr.mxu0 0.0
    %1885 = vmatpush2.msra.mxu0 0.0
    %1886 = vmatprep.subr.mxu0 0.0
    %1887 = vmatpush2.msra.mxu0 0.0
    %1888 = vmatprep.subr.mxu0 0.0
    %1889 = vmatpush2.msra.mxu0 0.0
    %1890 = vmatprep.subr.mxu0 0.0
    %1891 = vmatpush2.msra.mxu0 0.0
    %1892 = vmatprep.subr.mxu0 0.0
    %1893 = vmatpush2.msra.mxu0 0.0
    %1894 = vmatprep.subr.mxu0 0.0
    %1895 = vmatpush2.msra.mxu0 0.0
    %1896 = vmatprep.subr.mxu0 0.0
    %1897 = vmatpush2.msra.mxu0 0.0
    %1898 = vmatprep.mubr.f32.mxu0 0.0
    %1899 = vmatmul.mubr.f32.gmra.mxu0 %v1794
    %v1900 = vpop.f32.mrf.mxu0
    %v1901 = vadd.f32 0.0, %v1900
    %v1902 = vpop.f32.mrf.mxu0
    %v1903 = vadd.f32 0.0, %v1902
    %1904 = vmatprep.mubr.f32.mxu0 0.0
    %1905 = vmatmul.mubr.f32.gmra.mxu0 %v1795
    %v1906 = vpop.f32.mrf.mxu0
    %v1907 = vadd.f32 0.0, %v1906
    %v1908 = vpop.f32.mrf.mxu0
    %v1909 = vadd.f32 0.0, %v1908
    %1910 = vmatprep.mubr.f32.mxu0 0.0
    %1911 = vmatmul.mubr.f32.gmra.mxu0 %v1796
    %v1912 = vpop.f32.mrf.mxu0
    %v1913 = vadd.f32 0.0, %v1912
    %v1914 = vpop.f32.mrf.mxu0
    %v1915 = vadd.f32 0.0, %v1914
    %1916 = vmatprep.mubr.f32.mxu0 0.0
    %1917 = vmatmul.mubr.f32.gmra.mxu0 %v1797
    %v1918 = vpop.f32.mrf.mxu0
    %v1919 = vadd.f32 0.0, %v1918
    %v1920 = vpop.f32.mrf.mxu0
    %v1921 = vadd.f32 0.0, %v1920
    %1922 = vmatprep.mubr.f32.mxu0 0.0
    %1923 = vmatmul.mubr.f32.gmra.mxu0 %v1798
    %v1924 = vpop.f32.mrf.mxu0
    %v1925 = vadd.f32 0.0, %v1924
    %v1926 = vpop.f32.mrf.mxu0
    %v1927 = vadd.f32 0.0, %v1926
    %1928 = vmatprep.mubr.f32.mxu0 0.0
    %1929 = vmatmul.mubr.f32.gmra.mxu0 %v1799
    %v1930 = vpop.f32.mrf.mxu0
    %v1931 = vadd.f32 0.0, %v1930
    %v1932 = vpop.f32.mrf.mxu0
    %v1933 = vadd.f32 0.0, %v1932
    %1934 = vmatprep.mubr.f32.mxu0 0.0
    %1935 = vmatmul.mubr.f32.gmra.mxu0 %v1800
    %v1936 = vpop.f32.mrf.mxu0
    %v1937 = vadd.f32 0.0, %v1936
    %v1938 = vpop.f32.mrf.mxu0
    %v1939 = vadd.f32 0.0, %v1938
    %1940 = vdwg.mxu0
    %v1941 = vadd.f32 %v1766, %v1901
    %v1942 = vadd.f32 %v1767, %v1903
    %v1943 = vadd.f32 %v1768, %v1907
    %v1944 = vadd.f32 %v1769, %v1909
    %v1945 = vadd.f32 %v1770, %v1913
    %v1946 = vadd.f32 %v1771, %v1915
    %v1947 = vadd.f32 %v1772, %v1919
    %v1948 = vadd.f32 %v1773, %v1921
    %v1949 = vadd.f32 %v1774, %v1925
    %v1950 = vadd.f32 %v1775, %v1927
    %v1951 = vadd.f32 %v1776, %v1931
    %v1952 = vadd.f32 %v1777, %v1933
    %v1953 = vadd.f32 %v1778, %v1937
    %v1954 = vadd.f32 %v1779, %v1939
    %v1955 = vld [vmem:[#allocation2 + $0x8] sm:$0xff]
    %v1956 = vld [vmem:[#allocation2 + $0x10] sm:$0xff]
    %v1957 = vld [vmem:[#allocation2 + $0x18] sm:$0xff]
    %v1958 = vld [vmem:[#allocation2 + $0x20] sm:$0xff]
    %v1959 = vld [vmem:[#allocation2 + $0x28] sm:$0xff]
    %v1960 = vld [vmem:[#allocation2 + $0x30] sm:$0xff]
    %v1961 = vld [vmem:[#allocation2 + $0x38] sm:$0x7]
    %v1962 = vld [vmem:[#allocation2 + $0x9] sm:$0xff]
    %v1963 = vld [vmem:[#allocation2 + $0x11] sm:$0xff]
    %v1964 = vld [vmem:[#allocation2 + $0x19] sm:$0xff]
    %v1965 = vld [vmem:[#allocation2 + $0x21] sm:$0xff]
    %v1966 = vld [vmem:[#allocation2 + $0x29] sm:$0xff]
    %v1967 = vld [vmem:[#allocation2 + $0x31] sm:$0xff]
    %v1968 = vld [vmem:[#allocation2 + $0x39] sm:$0x7]
    %v1969 = vmax.f32 %v1955, %v1962
    %v1970 = vmax.f32 %v1956, %v1963
    %v1971 = vmax.f32 %v1957, %v1964
    %v1972 = vmax.f32 %v1958, %v1965
    %v1973 = vmax.f32 %v1959, %v1966
    %v1974 = vmax.f32 %v1960, %v1967
    %v1975 = vmax.f32 %v1961, %v1968
    %s1976 = scalar_lea.vmem %s4, 1024
    %v1977 = vld [vmem:[%s1976] sm:$0xff]
    %v1978 = vld [vmem:[%s1976 + $0x8] sm:$0xff]
    %v1979 = vld [vmem:[%s1976 + $0x10] sm:$0xff]
    %v1980 = vld [vmem:[%s1976 + $0x18] sm:$0xff]
    %v1981 = vld [vmem:[%s1976 + $0x20] sm:$0xff]
    %v1982 = vld [vmem:[%s1976 + $0x28] sm:$0xff]
    %v1983 = vld [vmem:[%s1976 + $0x30] sm:$0xff]
    %v1984 = vld [vmem:[%s1976 + $0x38] sm:$0xff]
    %v1985 = vld [vmem:[%s1976 + $0x40] sm:$0xff]
    %v1986 = vld [vmem:[%s1976 + $0x48] sm:$0xff]
    %v1987 = vld [vmem:[%s1976 + $0x50] sm:$0xff]
    %v1988 = vld [vmem:[%s1976 + $0x58] sm:$0xff]
    %v1989 = vld [vmem:[%s1976 + $0x60] sm:$0xff]
    %v1990 = vld [vmem:[%s1976 + $0x68] sm:$0xff]
    %v1991 = vld [vmem:[%s1976 + $0x70] sm:$0xff]
    %v1992 = vld [vmem:[%s1976 + $0x78] sm:$0xff]
    %v1993 = vld [vmem:[%s1976 + $0x80] sm:$0xff]
    %v1994 = vld [vmem:[%s1976 + $0x88] sm:$0xff]
    %v1995 = vld [vmem:[%s1976 + $0x90] sm:$0xff]
    %v1996 = vld [vmem:[%s1976 + $0x98] sm:$0xff]
    %v1997 = vld [vmem:[%s1976 + $0xa0] sm:$0xff]
    %v1998 = vld [vmem:[%s1976 + $0xa8] sm:$0xff]
    %v1999 = vld [vmem:[%s1976 + $0xb0] sm:$0xff]
    %v2000 = vld [vmem:[%s1976 + $0xb8] sm:$0xff]
    %v2001 = vld [vmem:[%s1976 + $0xc0] sm:$0xff]
    %v2002 = vld [vmem:[%s1976 + $0xc8] sm:$0xff]
    %v2003 = vld [vmem:[%s1976 + $0xd0] sm:$0xff]
    %v2004 = vld [vmem:[%s1976 + $0xd8] sm:$0xff]
    %v2005 = vld [vmem:[%s1976 + $0xe0] sm:$0xff]
    %v2006 = vld [vmem:[%s1976 + $0xe8] sm:$0xff]
    %v2007 = vld [vmem:[%s1976 + $0xf0] sm:$0xff]
    %v2008 = vld [vmem:[%s1976 + $0xf8] sm:$0xff]
    %2009 = vmatprep.subr.mxu0 %v2008
    %2010 = vmatpush1.msra.mxu0 %v2007
    %2011 = vmatprep.subr.mxu0 %v2006
    %2012 = vmatpush1.msra.mxu0 %v2005
    %2013 = vmatprep.subr.mxu0 %v2004
    %2014 = vmatpush1.msra.mxu0 %v2003
    %2015 = vmatprep.subr.mxu0 %v2002
    %2016 = vmatpush1.msra.mxu0 %v2001
    %2017 = vmatprep.subr.mxu0 %v2000
    %2018 = vmatpush1.msra.mxu0 %v1999
    %2019 = vmatprep.subr.mxu0 %v1998
    %2020 = vmatpush1.msra.mxu0 %v1997
    %2021 = vmatprep.subr.mxu0 %v1996
    %2022 = vmatpush1.msra.mxu0 %v1995
    %2023 = vmatprep.subr.mxu0 %v1994
    %2024 = vmatpush1.msra.mxu0 %v1993
    %2025 = vmatprep.subr.mxu0 %v1992
    %2026 = vmatpush1.msra.mxu0 %v1991
    %2027 = vmatprep.subr.mxu0 %v1990
    %2028 = vmatpush1.msra.mxu0 %v1989
    %2029 = vmatprep.subr.mxu0 %v1988
    %2030 = vmatpush1.msra.mxu0 %v1987
    %2031 = vmatprep.subr.mxu0 %v1986
    %2032 = vmatpush1.msra.mxu0 %v1985
    %2033 = vmatprep.subr.mxu0 %v1984
    %2034 = vmatpush1.msra.mxu0 %v1983
    %2035 = vmatprep.subr.mxu0 %v1982
    %2036 = vmatpush1.msra.mxu0 %v1981
    %2037 = vmatprep.subr.mxu0 %v1980
    %2038 = vmatpush1.msra.mxu0 %v1979
    %2039 = vmatprep.subr.mxu0 %v1978
    %2040 = vmatpush1.msra.mxu0 %v1977
    %2041 = vmatprep.subr.mxu0 0.0
    %2042 = vmatpush2.msra.mxu0 0.0
    %2043 = vmatprep.subr.mxu0 0.0
    %2044 = vmatpush2.msra.mxu0 0.0
    %2045 = vmatprep.subr.mxu0 0.0
    %2046 = vmatpush2.msra.mxu0 0.0
    %2047 = vmatprep.subr.mxu0 0.0
    %2048 = vmatpush2.msra.mxu0 0.0
    %2049 = vmatprep.subr.mxu0 0.0
    %2050 = vmatpush2.msra.mxu0 0.0
    %2051 = vmatprep.subr.mxu0 0.0
    %2052 = vmatpush2.msra.mxu0 0.0
    %2053 = vmatprep.subr.mxu0 0.0
    %2054 = vmatpush2.msra.mxu0 0.0
    %2055 = vmatprep.subr.mxu0 0.0
    %2056 = vmatpush2.msra.mxu0 0.0
    %2057 = vmatprep.subr.mxu0 0.0
    %2058 = vmatpush2.msra.mxu0 0.0
    %2059 = vmatprep.subr.mxu0 0.0
    %2060 = vmatpush2.msra.mxu0 0.0
    %2061 = vmatprep.subr.mxu0 0.0
    %2062 = vmatpush2.msra.mxu0 0.0
    %2063 = vmatprep.subr.mxu0 0.0
    %2064 = vmatpush2.msra.mxu0 0.0
    %2065 = vmatprep.subr.mxu0 0.0
    %2066 = vmatpush2.msra.mxu0 0.0
    %2067 = vmatprep.subr.mxu0 0.0
    %2068 = vmatpush2.msra.mxu0 0.0
    %2069 = vmatprep.subr.mxu0 0.0
    %2070 = vmatpush2.msra.mxu0 0.0
    %2071 = vmatprep.subr.mxu0 0.0
    %2072 = vmatpush2.msra.mxu0 0.0
    %2073 = vmatprep.mubr.f32.mxu0 0.0
    %2074 = vmatmul.mubr.f32.gmra.mxu0 %v1969
    %v2075 = vpop.f32.mrf.mxu0
    %v2076 = vadd.f32 0.0, %v2075
    %v2077 = vpop.f32.mrf.mxu0
    %v2078 = vadd.f32 0.0, %v2077
    %2079 = vmatprep.mubr.f32.mxu0 0.0
    %2080 = vmatmul.mubr.f32.gmra.mxu0 %v1970
    %v2081 = vpop.f32.mrf.mxu0
    %v2082 = vadd.f32 0.0, %v2081
    %v2083 = vpop.f32.mrf.mxu0
    %v2084 = vadd.f32 0.0, %v2083
    %2085 = vmatprep.mubr.f32.mxu0 0.0
    %2086 = vmatmul.mubr.f32.gmra.mxu0 %v1971
    %v2087 = vpop.f32.mrf.mxu0
    %v2088 = vadd.f32 0.0, %v2087
    %v2089 = vpop.f32.mrf.mxu0
    %v2090 = vadd.f32 0.0, %v2089
    %2091 = vmatprep.mubr.f32.mxu0 0.0
    %2092 = vmatmul.mubr.f32.gmra.mxu0 %v1972
    %v2093 = vpop.f32.mrf.mxu0
    %v2094 = vadd.f32 0.0, %v2093
    %v2095 = vpop.f32.mrf.mxu0
    %v2096 = vadd.f32 0.0, %v2095
    %2097 = vmatprep.mubr.f32.mxu0 0.0
    %2098 = vmatmul.mubr.f32.gmra.mxu0 %v1973
    %v2099 = vpop.f32.mrf.mxu0
    %v2100 = vadd.f32 0.0, %v2099
    %v2101 = vpop.f32.mrf.mxu0
    %v2102 = vadd.f32 0.0, %v2101
    %2103 = vmatprep.mubr.f32.mxu0 0.0
    %2104 = vmatmul.mubr.f32.gmra.mxu0 %v1974
    %v2105 = vpop.f32.mrf.mxu0
    %v2106 = vadd.f32 0.0, %v2105
    %v2107 = vpop.f32.mrf.mxu0
    %v2108 = vadd.f32 0.0, %v2107
    %2109 = vmatprep.mubr.f32.mxu0 0.0
    %2110 = vmatmul.mubr.f32.gmra.mxu0 %v1975
    %v2111 = vpop.f32.mrf.mxu0
    %v2112 = vadd.f32 0.0, %v2111
    %v2113 = vpop.f32.mrf.mxu0
    %v2114 = vadd.f32 0.0, %v2113
    %2115 = vdwg.mxu0
    %v2116 = vadd.f32 %v1941, %v2076
    %v2117 = vadd.f32 %v1942, %v2078
    %v2118 = vadd.f32 %v1943, %v2082
    %v2119 = vadd.f32 %v1944, %v2084
    %v2120 = vadd.f32 %v1945, %v2088
    %v2121 = vadd.f32 %v1946, %v2090
    %v2122 = vadd.f32 %v1947, %v2094
    %v2123 = vadd.f32 %v1948, %v2096
    %v2124 = vadd.f32 %v1949, %v2100
    %v2125 = vadd.f32 %v1950, %v2102
    %v2126 = vadd.f32 %v1951, %v2106
    %v2127 = vadd.f32 %v1952, %v2108
    %v2128 = vadd.f32 %v1953, %v2112
    %v2129 = vadd.f32 %v1954, %v2114
    %v2130 = vld [vmem:[%s5] sm:$0x3]
    %v2132 = vlaneseq
    %v2133 = vshrl.u32 %v2132, 7
    %v2134 = vsub.s32 0, %v2133
    %v2135 = vrot.slane %v2130, %v2134
    %v2136 = vlaneseq
    %v2137 = vshrl.u32 %v2136, 7
    %v2138 = vsub.s32 1, %v2137
    %v2139 = vrot.slane %v2130, %v2138
    %v2142 = vadd.f32 %v2116, %v2135
    %v2143 = vadd.f32 %v2117, %v2139
    %v2144 = vadd.f32 %v2118, %v2135
    %v2145 = vadd.f32 %v2119, %v2139
    %v2146 = vadd.f32 %v2120, %v2135
    %v2147 = vadd.f32 %v2121, %v2139
    %v2148 = vadd.f32 %v2122, %v2135
    %v2149 = vadd.f32 %v2123, %v2139
    %v2150 = vadd.f32 %v2124, %v2135
    %v2151 = vadd.f32 %v2125, %v2139
    %v2152 = vadd.f32 %v2126, %v2135
    %v2153 = vadd.f32 %v2127, %v2139
    %v2154 = vadd.f32 %v2128, %v2135
    %v2155 = vadd.f32 %v2129, %v2139
    %v2156 = vmax.f32 %v2142, 0.0
    %v2157 = vmax.f32 %v2143, 0.0
    %v2158 = vmax.f32 %v2144, 0.0
    %v2159 = vmax.f32 %v2145, 0.0
    %v2160 = vmax.f32 %v2146, 0.0
    %v2161 = vmax.f32 %v2147, 0.0
    %v2162 = vmax.f32 %v2148, 0.0
    %v2163 = vmax.f32 %v2149, 0.0
    %v2164 = vmax.f32 %v2150, 0.0
    %v2165 = vmax.f32 %v2151, 0.0
    %v2166 = vmax.f32 %v2152, 0.0
    %v2167 = vmax.f32 %v2153, 0.0
    %v2168 = vmax.f32 %v2154, 0.0
    %v2169 = vmax.f32 %v2155, 0.0
    %v2170 = vld [vmem:[%s6] sm:$0xff]
    %v2171 = vld [vmem:[%s6 + $0x8] sm:$0xff]
    %v2172 = vld [vmem:[%s6 + $0x10] sm:$0xff]
    %v2173 = vld [vmem:[%s6 + $0x18] sm:$0xff]
    %v2174 = vld [vmem:[%s6 + $0x20] sm:$0xff]
    %v2175 = vld [vmem:[%s6 + $0x28] sm:$0xff]
    %v2176 = vld [vmem:[%s6 + $0x30] sm:$0xff]
    %v2177 = vld [vmem:[%s6 + $0x38] sm:$0xff]
    %v2178 = vld [vmem:[%s6 + $0x40] sm:$0xff]
    %v2179 = vld [vmem:[%s6 + $0x48] sm:$0xff]
    %v2180 = vld [vmem:[%s6 + $0x50] sm:$0xff]
    %v2181 = vld [vmem:[%s6 + $0x58] sm:$0xff]
    %v2182 = vld [vmem:[%s6 + $0x60] sm:$0xff]
    %v2183 = vld [vmem:[%s6 + $0x68] sm:$0xff]
    %v2184 = vld [vmem:[%s6 + $0x70] sm:$0xff]
    %v2185 = vld [vmem:[%s6 + $0x78] sm:$0xff]
    %v2186 = vld [vmem:[%s6 + $0x80] sm:$0xff]
    %v2187 = vld [vmem:[%s6 + $0x88] sm:$0xff]
    %v2188 = vld [vmem:[%s6 + $0x90] sm:$0xff]
    %v2189 = vld [vmem:[%s6 + $0x98] sm:$0xff]
    %vm2190 = vcmask 261120
    %v2192 = vsel %vm2190, %v2157, 0
    %v2195 = vsel %vm2190, %v2159, 0
    %v2198 = vsel %vm2190, %v2161, 0
    %v2201 = vsel %vm2190, %v2163, 0
    %v2204 = vsel %vm2190, %v2165, 0
    %v2207 = vsel %vm2190, %v2167, 0
    %v2210 = vsel %vm2190, %v2169, 0
    %2212 = vmatprep.subr.mxu0 0.0
    %2213 = vmatpush1.msra.mxu0 %v2185
    %2214 = vmatprep.subr.mxu0 0.0
    %2215 = vmatpush1.msra.mxu0 %v2184
    %2216 = vmatprep.subr.mxu0 0.0
    %2217 = vmatpush1.msra.mxu0 %v2183
    %2218 = vmatprep.subr.mxu0 0.0
    %2219 = vmatpush1.msra.mxu0 %v2182
    %2220 = vmatprep.subr.mxu0 0.0
    %2221 = vmatpush1.msra.mxu0 %v2181
    %2222 = vmatprep.subr.mxu0 0.0
    %2223 = vmatpush1.msra.mxu0 %v2180
    %2224 = vmatprep.subr.mxu0 0.0
    %2225 = vmatpush1.msra.mxu0 %v2179
    %2226 = vmatprep.subr.mxu0 0.0
    %2227 = vmatpush1.msra.mxu0 %v2178
    %2228 = vmatprep.subr.mxu0 0.0
    %2229 = vmatpush1.msra.mxu0 %v2177
    %2230 = vmatprep.subr.mxu0 0.0
    %2231 = vmatpush1.msra.mxu0 %v2176
    %2232 = vmatprep.subr.mxu0 0.0
    %2233 = vmatpush1.msra.mxu0 %v2175
    %2234 = vmatprep.subr.mxu0 0.0
    %2235 = vmatpush1.msra.mxu0 %v2174
    %2236 = vmatprep.subr.mxu0 0.0
    %2237 = vmatpush1.msra.mxu0 %v2173
    %2238 = vmatprep.subr.mxu0 0.0
    %2239 = vmatpush1.msra.mxu0 %v2172
    %2240 = vmatprep.subr.mxu0 0.0
    %2241 = vmatpush1.msra.mxu0 %v2171
    %2242 = vmatprep.subr.mxu0 0.0
    %2243 = vmatpush1.msra.mxu0 %v2170
    %2244 = vmatprep.subr.mxu0 0.0
    %2245 = vmatpush2.msra.mxu0 0.0
    %2246 = vmatprep.subr.mxu0 0.0
    %2247 = vmatpush2.msra.mxu0 0.0
    %2248 = vmatprep.subr.mxu0 0.0
    %2249 = vmatpush2.msra.mxu0 0.0
    %2250 = vmatprep.subr.mxu0 0.0
    %2251 = vmatpush2.msra.mxu0 0.0
    %2252 = vmatprep.subr.mxu0 0.0
    %2253 = vmatpush2.msra.mxu0 0.0
    %2254 = vmatprep.subr.mxu0 0.0
    %2255 = vmatpush2.msra.mxu0 0.0
    %2256 = vmatprep.subr.mxu0 0.0
    %2257 = vmatpush2.msra.mxu0 0.0
    %2258 = vmatprep.subr.mxu0 0.0
    %2259 = vmatpush2.msra.mxu0 0.0
    %2260 = vmatprep.subr.mxu0 0.0
    %2261 = vmatpush2.msra.mxu0 0.0
    %2262 = vmatprep.subr.mxu0 0.0
    %2263 = vmatpush2.msra.mxu0 0.0
    %2264 = vmatprep.subr.mxu0 0.0
    %2265 = vmatpush2.msra.mxu0 0.0
    %2266 = vmatprep.subr.mxu0 0.0
    %2267 = vmatpush2.msra.mxu0 0.0
    %2268 = vmatprep.subr.mxu0 0.0
    %2269 = vmatpush2.msra.mxu0 %v2189
    %2270 = vmatprep.subr.mxu0 0.0
    %2271 = vmatpush2.msra.mxu0 %v2188
    %2272 = vmatprep.subr.mxu0 0.0
    %2273 = vmatpush2.msra.mxu0 %v2187
    %2274 = vmatprep.subr.mxu0 0.0
    %2275 = vmatpush2.msra.mxu0 %v2186
    %2276 = vmatprep.mubr.f32.mxu0 %v2192
    %2277 = vmatmul.mubr.f32.gmra.mxu0 %v2156
    %v2278 = vpop.f32.mrf.mxu0
    %v2279 = vadd.f32 0.0, %v2278
    %v2280 = vpop.f32.mrf.mxu0
    %2281 = vmatprep.mubr.f32.mxu0 %v2195
    %2282 = vmatmul.mubr.f32.gmra.mxu0 %v2158
    %v2283 = vpop.f32.mrf.mxu0
    %v2284 = vadd.f32 0.0, %v2283
    %v2285 = vpop.f32.mrf.mxu0
    %2286 = vmatprep.mubr.f32.mxu0 %v2198
    %2287 = vmatmul.mubr.f32.gmra.mxu0 %v2160
    %v2288 = vpop.f32.mrf.mxu0
    %v2289 = vadd.f32 0.0, %v2288
    %v2290 = vpop.f32.mrf.mxu0
    %2291 = vmatprep.mubr.f32.mxu0 %v2201
    %2292 = vmatmul.mubr.f32.gmra.mxu0 %v2162
    %v2293 = vpop.f32.mrf.mxu0
    %v2294 = vadd.f32 0.0, %v2293
    %v2295 = vpop.f32.mrf.mxu0
    %2296 = vmatprep.mubr.f32.mxu0 %v2204
    %2297 = vmatmul.mubr.f32.gmra.mxu0 %v2164
    %v2298 = vpop.f32.mrf.mxu0
    %v2299 = vadd.f32 0.0, %v2298
    %v2300 = vpop.f32.mrf.mxu0
    %2301 = vmatprep.mubr.f32.mxu0 %v2207
    %2302 = vmatmul.mubr.f32.gmra.mxu0 %v2166
    %v2303 = vpop.f32.mrf.mxu0
    %v2304 = vadd.f32 0.0, %v2303
    %v2305 = vpop.f32.mrf.mxu0
    %2306 = vmatprep.mubr.f32.mxu0 %v2210
    %2307 = vmatmul.mubr.f32.gmra.mxu0 %v2168
    %v2308 = vpop.f32.mrf.mxu0
    %v2309 = vadd.f32 0.0, %v2308
    %v2310 = vpop.f32.mrf.mxu0
    %2311 = vdwg.mxu0
    %s2312 = scalar_lea.vmem %s6, 160
    %v2313 = vld [vmem:[%s2312] sm:$0xff]
    %v2314 = vld [vmem:[%s2312 + $0x8] sm:$0xff]
    %v2315 = vld [vmem:[%s2312 + $0x10] sm:$0xff]
    %v2316 = vld [vmem:[%s2312 + $0x18] sm:$0xff]
    %v2317 = vld [vmem:[%s2312 + $0x20] sm:$0xff]
    %v2318 = vld [vmem:[%s2312 + $0x28] sm:$0xff]
    %v2319 = vld [vmem:[%s2312 + $0x30] sm:$0xff]
    %v2320 = vld [vmem:[%s2312 + $0x38] sm:$0xff]
    %v2321 = vld [vmem:[%s2312 + $0x40] sm:$0xff]
    %v2322 = vld [vmem:[%s2312 + $0x48] sm:$0xff]
    %v2323 = vld [vmem:[%s2312 + $0x50] sm:$0xff]
    %v2324 = vld [vmem:[%s2312 + $0x58] sm:$0xff]
    %v2325 = vld [vmem:[%s2312 + $0x60] sm:$0xff]
    %v2326 = vld [vmem:[%s2312 + $0x68] sm:$0xff]
    %v2327 = vld [vmem:[%s2312 + $0x70] sm:$0xff]
    %v2328 = vld [vmem:[%s2312 + $0x78] sm:$0xff]
    %v2329 = vld [vmem:[%s2312 + $0x80] sm:$0xff]
    %v2330 = vld [vmem:[%s2312 + $0x88] sm:$0xff]
    %v2331 = vld [vmem:[%s2312 + $0x90] sm:$0xff]
    %v2332 = vld [vmem:[%s2312 + $0x98] sm:$0xff]
    %2333 = vmatprep.subr.mxu0 0.0
    %2334 = vmatpush1.msra.mxu0 %v2328
    %2335 = vmatprep.subr.mxu0 0.0
    %2336 = vmatpush1.msra.mxu0 %v2327
    %2337 = vmatprep.subr.mxu0 0.0
    %2338 = vmatpush1.msra.mxu0 %v2326
    %2339 = vmatprep.subr.mxu0 0.0
    %2340 = vmatpush1.msra.mxu0 %v2325
    %2341 = vmatprep.subr.mxu0 0.0
    %2342 = vmatpush1.msra.mxu0 %v2324
    %2343 = vmatprep.subr.mxu0 0.0
    %2344 = vmatpush1.msra.mxu0 %v2323
    %2345 = vmatprep.subr.mxu0 0.0
    %2346 = vmatpush1.msra.mxu0 %v2322
    %2347 = vmatprep.subr.mxu0 0.0
    %2348 = vmatpush1.msra.mxu0 %v2321
    %2349 = vmatprep.subr.mxu0 0.0
    %2350 = vmatpush1.msra.mxu0 %v2320
    %2351 = vmatprep.subr.mxu0 0.0
    %2352 = vmatpush1.msra.mxu0 %v2319
    %2353 = vmatprep.subr.mxu0 0.0
    %2354 = vmatpush1.msra.mxu0 %v2318
    %2355 = vmatprep.subr.mxu0 0.0
    %2356 = vmatpush1.msra.mxu0 %v2317
    %2357 = vmatprep.subr.mxu0 0.0
    %2358 = vmatpush1.msra.mxu0 %v2316
    %2359 = vmatprep.subr.mxu0 0.0
    %2360 = vmatpush1.msra.mxu0 %v2315
    %2361 = vmatprep.subr.mxu0 0.0
    %2362 = vmatpush1.msra.mxu0 %v2314
    %2363 = vmatprep.subr.mxu0 0.0
    %2364 = vmatpush1.msra.mxu0 %v2313
    %2365 = vmatprep.subr.mxu0 0.0
    %2366 = vmatpush2.msra.mxu0 0.0
    %2367 = vmatprep.subr.mxu0 0.0
    %2368 = vmatpush2.msra.mxu0 0.0
    %2369 = vmatprep.subr.mxu0 0.0
    %2370 = vmatpush2.msra.mxu0 0.0
    %2371 = vmatprep.subr.mxu0 0.0
    %2372 = vmatpush2.msra.mxu0 0.0
    %2373 = vmatprep.subr.mxu0 0.0
    %2374 = vmatpush2.msra.mxu0 0.0
    %2375 = vmatprep.subr.mxu0 0.0
    %2376 = vmatpush2.msra.mxu0 0.0
    %2377 = vmatprep.subr.mxu0 0.0
    %2378 = vmatpush2.msra.mxu0 0.0
    %2379 = vmatprep.subr.mxu0 0.0
    %2380 = vmatpush2.msra.mxu0 0.0
    %2381 = vmatprep.subr.mxu0 0.0
    %2382 = vmatpush2.msra.mxu0 0.0
    %2383 = vmatprep.subr.mxu0 0.0
    %2384 = vmatpush2.msra.mxu0 0.0
    %2385 = vmatprep.subr.mxu0 0.0
    %2386 = vmatpush2.msra.mxu0 0.0
    %2387 = vmatprep.subr.mxu0 0.0
    %2388 = vmatpush2.msra.mxu0 0.0
    %2389 = vmatprep.subr.mxu0 0.0
    %2390 = vmatpush2.msra.mxu0 %v2332
    %2391 = vmatprep.subr.mxu0 0.0
    %2392 = vmatpush2.msra.mxu0 %v2331
    %2393 = vmatprep.subr.mxu0 0.0
    %2394 = vmatpush2.msra.mxu0 %v2330
    %2395 = vmatprep.subr.mxu0 0.0
    %2396 = vmatpush2.msra.mxu0 %v2329
    %2397 = vmatprep.mubr.f32.mxu0 %v2192
    %2398 = vmatmul.mubr.f32.gmra.mxu0 %v2156
    %v2399 = vpop.f32.mrf.mxu0
    %v2400 = vadd.f32 0.0, %v2399
    %v2401 = vpop.f32.mrf.mxu0
    %2402 = vmatprep.mubr.f32.mxu0 %v2195
    %2403 = vmatmul.mubr.f32.gmra.mxu0 %v2158
    %v2404 = vpop.f32.mrf.mxu0
    %v2405 = vadd.f32 0.0, %v2404
    %v2406 = vpop.f32.mrf.mxu0
    %2407 = vmatprep.mubr.f32.mxu0 %v2198
    %2408 = vmatmul.mubr.f32.gmra.mxu0 %v2160
    %v2409 = vpop.f32.mrf.mxu0
    %v2410 = vadd.f32 0.0, %v2409
    %v2411 = vpop.f32.mrf.mxu0
    %2412 = vmatprep.mubr.f32.mxu0 %v2201
    %2413 = vmatmul.mubr.f32.gmra.mxu0 %v2162
    %v2414 = vpop.f32.mrf.mxu0
    %v2415 = vadd.f32 0.0, %v2414
    %v2416 = vpop.f32.mrf.mxu0
    %2417 = vmatprep.mubr.f32.mxu0 %v2204
    %2418 = vmatmul.mubr.f32.gmra.mxu0 %v2164
    %v2419 = vpop.f32.mrf.mxu0
    %v2420 = vadd.f32 0.0, %v2419
    %v2421 = vpop.f32.mrf.mxu0
    %2422 = vmatprep.mubr.f32.mxu0 %v2207
    %2423 = vmatmul.mubr.f32.gmra.mxu0 %v2166
    %v2424 = vpop.f32.mrf.mxu0
    %v2425 = vadd.f32 0.0, %v2424
    %v2426 = vpop.f32.mrf.mxu0
    %2427 = vmatprep.mubr.f32.mxu0 %v2210
    %2428 = vmatmul.mubr.f32.gmra.mxu0 %v2168
    %v2429 = vpop.f32.mrf.mxu0
    %v2430 = vadd.f32 0.0, %v2429
    %v2431 = vpop.f32.mrf.mxu0
    %2432 = vdwg.mxu0
    %v2433 = vmax.f32 %v2279, %v2400
    %v2434 = vmax.f32 %v2284, %v2405
    %v2435 = vmax.f32 %v2289, %v2410
    %v2436 = vmax.f32 %v2294, %v2415
    %v2437 = vmax.f32 %v2299, %v2420
    %v2438 = vmax.f32 %v2304, %v2425
    %v2439 = vmax.f32 %v2309, %v2430
    %2440 = vst [vmem:[#allocation3] sm:$0xff] %v2433
    %2441 = vst [vmem:[#allocation3 + $0x8] sm:$0xff] %v2434
    %2442 = vst [vmem:[#allocation3 + $0x10] sm:$0xff] %v2435
    %2443 = vst [vmem:[#allocation3 + $0x18] sm:$0xff] %v2436
    %2444 = vst [vmem:[#allocation3 + $0x20] sm:$0xff] %v2437
    %2445 = vst [vmem:[#allocation3 + $0x28] sm:$0xff] %v2438
    %2446 = vst [vmem:[#allocation3 + $0x30] sm:$0x7] %v2439
    %v2447 = vld [vmem:[%s8] sm:$0x1]
    %v2448 = vld [vmem:[#allocation3] sm:$0xff]
    %v2449 = vld [vmem:[#allocation3 + $0x8] sm:$0xff]
    %v2450 = vld [vmem:[#allocation3 + $0x10] sm:$0xff]
    %v2451 = vld [vmem:[#allocation3 + $0x18] sm:$0xff]
    %v2452 = vld [vmem:[#allocation3 + $0x20] sm:$0x1]
    %v2453 = vld [vmem:[#allocation3 + $0x2] sm:$0xff]
    %v2454 = vld [vmem:[#allocation3 + $0xa] sm:$0xff]
    %v2455 = vld [vmem:[#allocation3 + $0x12] sm:$0xff]
    %v2456 = vld [vmem:[#allocation3 + $0x1a] sm:$0xff]
    %v2457 = vld [vmem:[#allocation3 + $0x22] sm:$0x1]
    %v2458 = vmax.f32 %v2448, %v2453
    %v2459 = vmax.f32 %v2449, %v2454
    %v2460 = vmax.f32 %v2450, %v2455
    %v2461 = vmax.f32 %v2451, %v2456
    %v2462 = vmax.f32 %v2452, %v2457
    %v2463 = vld [vmem:[%s13] sm:$0x3]
    %vm2464 = vcmask 269312
    %v2466 = vsel %vm2464, %v2463, 0
    %vm2468 = vcmask 1040384
    %v2470 = vsel %vm2468, %v2462, 0
    %2472 = vmatprep.subr.mxu0 0.0
    %2473 = vmatpush1.msra.mxu0 0.0
    %2474 = vmatprep.subr.mxu0 0.0
    %2475 = vmatpush1.msra.mxu0 0.0
    %2476 = vmatprep.subr.mxu0 0.0
    %2477 = vmatpush1.msra.mxu0 0.0
    %2478 = vmatprep.subr.mxu0 0.0
    %2479 = vmatpush1.msra.mxu0 0.0
    %2480 = vmatprep.subr.mxu0 0.0
    %2481 = vmatpush1.msra.mxu0 0.0
    %2482 = vmatprep.subr.mxu0 0.0
    %2483 = vmatpush1.msra.mxu0 0.0
    %2484 = vmatprep.subr.mxu0 0.0
    %2485 = vmatpush1.msra.mxu0 0.0
    %2486 = vmatprep.subr.mxu0 0.0
    %2487 = vmatpush1.msra.mxu0 0.0
    %2488 = vmatprep.subr.mxu0 0.0
    %2489 = vmatpush1.msra.mxu0 0.0
    %2490 = vmatprep.subr.mxu0 0.0
    %2491 = vmatpush1.msra.mxu0 0.0
    %2492 = vmatprep.subr.mxu0 0.0
    %2493 = vmatpush1.msra.mxu0 0.0
    %2494 = vmatprep.subr.mxu0 0.0
    %2495 = vmatpush1.msra.mxu0 %v2470
    %2496 = vmatprep.subr.mxu0 0.0
    %2497 = vmatpush1.msra.mxu0 %v2461
    %2498 = vmatprep.subr.mxu0 0.0
    %2499 = vmatpush1.msra.mxu0 %v2460
    %2500 = vmatprep.subr.mxu0 0.0
    %2501 = vmatpush1.msra.mxu0 %v2459
    %2502 = vmatprep.subr.mxu0 0.0
    %2503 = vmatpush1.msra.mxu0 %v2458
    %2504 = vmatprep.subr.mxu0 0.0
    %2505 = vmatpush2.msra.mxu0 0.0
    %2506 = vmatprep.subr.mxu0 0.0
    %2507 = vmatpush2.msra.mxu0 0.0
    %2508 = vmatprep.subr.mxu0 0.0
    %2509 = vmatpush2.msra.mxu0 0.0
    %2510 = vmatprep.subr.mxu0 0.0
    %2511 = vmatpush2.msra.mxu0 0.0
    %2512 = vmatprep.subr.mxu0 0.0
    %2513 = vmatpush2.msra.mxu0 0.0
    %2514 = vmatprep.subr.mxu0 0.0
    %2515 = vmatpush2.msra.mxu0 0.0
    %2516 = vmatprep.subr.mxu0 0.0
    %2517 = vmatpush2.msra.mxu0 0.0
    %2518 = vmatprep.subr.mxu0 0.0
    %2519 = vmatpush2.msra.mxu0 0.0
    %2520 = vmatprep.subr.mxu0 0.0
    %2521 = vmatpush2.msra.mxu0 0.0
    %2522 = vmatprep.subr.mxu0 0.0
    %2523 = vmatpush2.msra.mxu0 0.0
    %2524 = vmatprep.subr.mxu0 0.0
    %2525 = vmatpush2.msra.mxu0 0.0
    %2526 = vmatprep.subr.mxu0 0.0
    %2527 = vmatpush2.msra.mxu0 0.0
    %2528 = vmatprep.subr.mxu0 0.0
    %2529 = vmatpush2.msra.mxu0 0.0
    %2530 = vmatprep.subr.mxu0 0.0
    %2531 = vmatpush2.msra.mxu0 0.0
    %2532 = vmatprep.subr.mxu0 0.0
    %2533 = vmatpush2.msra.mxu0 0.0
    %2534 = vmatprep.subr.mxu0 0.0
    %2535 = vmatpush2.msra.mxu0 0.0
    %2536 = vmatprep.mubr.f32.mxu0 0.0
    %2537 = vmatmul.mubr.f32.gmra.mxu0 %v2466
    %v2538 = vpop.f32.mrf.mxu0
    %v2539 = vadd.f32 0.0, %v2538
    %v2540 = vpop.f32.mrf.mxu0
    %2541 = vdwg.mxu0
    %v2542 = vld [vmem:[%s7] sm:$0xff]
    %v2543 = vld [vmem:[%s7 + $0x8] sm:$0xff]
    %v2544 = vld [vmem:[%s7 + $0x10] sm:$0xff]
    %v2545 = vld [vmem:[%s7 + $0x18] sm:$0xff]
    %v2546 = vld [vmem:[%s7 + $0x20] sm:$0xff]
    %v2547 = vld [vmem:[%s7 + $0x28] sm:$0xff]
    %v2548 = vld [vmem:[%s7 + $0x30] sm:$0xff]
    %v2549 = vld [vmem:[%s7 + $0x38] sm:$0xff]
    %v2550 = vld [vmem:[%s7 + $0x40] sm:$0xff]
    %v2551 = vld [vmem:[%s7 + $0x48] sm:$0xff]
    %v2552 = vld [vmem:[%s7 + $0x50] sm:$0xff]
    %v2553 = vld [vmem:[%s7 + $0x58] sm:$0xff]
    %v2554 = vld [vmem:[%s7 + $0x60] sm:$0xff]
    %v2555 = vld [vmem:[%s7 + $0x68] sm:$0xff]
    %v2556 = vld [vmem:[%s7 + $0x70] sm:$0xff]
    %v2557 = vld [vmem:[%s7 + $0x78] sm:$0xff]
    %2558 = vmatprep.subr.mxu0 0.0
    %2559 = vmatpush1.msra.mxu0 %v2557
    %2560 = vmatprep.subr.mxu0 0.0
    %2561 = vmatpush1.msra.mxu0 %v2556
    %2562 = vmatprep.subr.mxu0 0.0
    %2563 = vmatpush1.msra.mxu0 %v2555
    %2564 = vmatprep.subr.mxu0 0.0
    %2565 = vmatpush1.msra.mxu0 %v2554
    %2566 = vmatprep.subr.mxu0 0.0
    %2567 = vmatpush1.msra.mxu0 %v2553
    %2568 = vmatprep.subr.mxu0 0.0
    %2569 = vmatpush1.msra.mxu0 %v2552
    %2570 = vmatprep.subr.mxu0 0.0
    %2571 = vmatpush1.msra.mxu0 %v2551
    %2572 = vmatprep.subr.mxu0 0.0
    %2573 = vmatpush1.msra.mxu0 %v2550
    %2574 = vmatprep.subr.mxu0 0.0
    %2575 = vmatpush1.msra.mxu0 %v2549
    %2576 = vmatprep.subr.mxu0 0.0
    %2577 = vmatpush1.msra.mxu0 %v2548
    %2578 = vmatprep.subr.mxu0 0.0
    %2579 = vmatpush1.msra.mxu0 %v2547
    %2580 = vmatprep.subr.mxu0 0.0
    %2581 = vmatpush1.msra.mxu0 %v2546
    %2582 = vmatprep.subr.mxu0 0.0
    %2583 = vmatpush1.msra.mxu0 %v2545
    %2584 = vmatprep.subr.mxu0 0.0
    %2585 = vmatpush1.msra.mxu0 %v2544
    %2586 = vmatprep.subr.mxu0 0.0
    %2587 = vmatpush1.msra.mxu0 %v2543
    %2588 = vmatprep.subr.mxu0 0.0
    %2589 = vmatpush1.msra.mxu0 %v2542
    %2590 = vmatprep.subr.mxu0 0.0
    %2591 = vmatpush2.msra.mxu0 0.0
    %2592 = vmatprep.subr.mxu0 0.0
    %2593 = vmatpush2.msra.mxu0 0.0
    %2594 = vmatprep.subr.mxu0 0.0
    %2595 = vmatpush2.msra.mxu0 0.0
    %2596 = vmatprep.subr.mxu0 0.0
    %2597 = vmatpush2.msra.mxu0 0.0
    %2598 = vmatprep.subr.mxu0 0.0
    %2599 = vmatpush2.msra.mxu0 0.0
    %2600 = vmatprep.subr.mxu0 0.0
    %2601 = vmatpush2.msra.mxu0 0.0
    %2602 = vmatprep.subr.mxu0 0.0
    %2603 = vmatpush2.msra.mxu0 0.0
    %2604 = vmatprep.subr.mxu0 0.0
    %2605 = vmatpush2.msra.mxu0 0.0
    %2606 = vmatprep.subr.mxu0 0.0
    %2607 = vmatpush2.msra.mxu0 0.0
    %2608 = vmatprep.subr.mxu0 0.0
    %2609 = vmatpush2.msra.mxu0 0.0
    %2610 = vmatprep.subr.mxu0 0.0
    %2611 = vmatpush2.msra.mxu0 0.0
    %2612 = vmatprep.subr.mxu0 0.0
    %2613 = vmatpush2.msra.mxu0 0.0
    %2614 = vmatprep.subr.mxu0 0.0
    %2615 = vmatpush2.msra.mxu0 0.0
    %2616 = vmatprep.subr.mxu0 0.0
    %2617 = vmatpush2.msra.mxu0 0.0
    %2618 = vmatprep.subr.mxu0 0.0
    %2619 = vmatpush2.msra.mxu0 0.0
    %2620 = vmatprep.subr.mxu0 0.0
    %2621 = vmatpush2.msra.mxu0 0.0
    %2622 = vmatprep.mubr.f32.mxu0 0.0
    %2623 = vmatmul.mubr.f32.gmra.mxu0 %v2539
    %v2624 = vpop.f32.mrf.mxu0
    %v2625 = vadd.f32 0.0, %v2624
    %v2626 = vpop.f32.mrf.mxu0
    %2627 = vdwg.mxu0
    %v2629 = vlaneseq
    %v2630 = vshrl.u32 %v2629, 7
    %v2631 = vsub.s32 0, %v2630
    %v2632 = vrot.slane %v2447, %v2631
    %v2634 = vadd.f32 %v2632, %v2625
    %v2635 = vld [vmem:[#allocation3 + $0x4] sm:$0xff]
    %v2636 = vld [vmem:[#allocation3 + $0xc] sm:$0xff]
    %v2637 = vld [vmem:[#allocation3 + $0x14] sm:$0xff]
    %v2638 = vld [vmem:[#allocation3 + $0x1c] sm:$0xff]
    %v2639 = vld [vmem:[#allocation3 + $0x24] sm:$0x1]
    %v2640 = vld [vmem:[#allocation3 + $0x6] sm:$0xff]
    %v2641 = vld [vmem:[#allocation3 + $0xe] sm:$0xff]
    %v2642 = vld [vmem:[#allocation3 + $0x16] sm:$0xff]
    %v2643 = vld [vmem:[#allocation3 + $0x1e] sm:$0xff]
    %v2644 = vld [vmem:[#allocation3 + $0x26] sm:$0x1]
    %v2645 = vmax.f32 %v2635, %v2640
    %v2646 = vmax.f32 %v2636, %v2641
    %v2647 = vmax.f32 %v2637, %v2642
    %v2648 = vmax.f32 %v2638, %v2643
    %v2649 = vmax.f32 %v2639, %v2644
    %v2651 = vsel %vm2468, %v2649, 0
    %2653 = vmatprep.subr.mxu0 0.0
    %2654 = vmatpush1.msra.mxu0 0.0
    %2655 = vmatprep.subr.mxu0 0.0
    %2656 = vmatpush1.msra.mxu0 0.0
    %2657 = vmatprep.subr.mxu0 0.0
    %2658 = vmatpush1.msra.mxu0 0.0
    %2659 = vmatprep.subr.mxu0 0.0
    %2660 = vmatpush1.msra.mxu0 0.0
    %2661 = vmatprep.subr.mxu0 0.0
    %2662 = vmatpush1.msra.mxu0 0.0
    %2663 = vmatprep.subr.mxu0 0.0
    %2664 = vmatpush1.msra.mxu0 0.0
    %2665 = vmatprep.subr.mxu0 0.0
    %2666 = vmatpush1.msra.mxu0 0.0
    %2667 = vmatprep.subr.mxu0 0.0
    %2668 = vmatpush1.msra.mxu0 0.0
    %2669 = vmatprep.subr.mxu0 0.0
    %2670 = vmatpush1.msra.mxu0 0.0
    %2671 = vmatprep.subr.mxu0 0.0
    %2672 = vmatpush1.msra.mxu0 0.0
    %2673 = vmatprep.subr.mxu0 0.0
    %2674 = vmatpush1.msra.mxu0 0.0
    %2675 = vmatprep.subr.mxu0 0.0
    %2676 = vmatpush1.msra.mxu0 %v2651
    %2677 = vmatprep.subr.mxu0 0.0
    %2678 = vmatpush1.msra.mxu0 %v2648
    %2679 = vmatprep.subr.mxu0 0.0
    %2680 = vmatpush1.msra.mxu0 %v2647
    %2681 = vmatprep.subr.mxu0 0.0
    %2682 = vmatpush1.msra.mxu0 %v2646
    %2683 = vmatprep.subr.mxu0 0.0
    %2684 = vmatpush1.msra.mxu0 %v2645
    %2685 = vmatprep.subr.mxu0 0.0
    %2686 = vmatpush2.msra.mxu0 0.0
    %2687 = vmatprep.subr.mxu0 0.0
    %2688 = vmatpush2.msra.mxu0 0.0
    %2689 = vmatprep.subr.mxu0 0.0
    %2690 = vmatpush2.msra.mxu0 0.0
    %2691 = vmatprep.subr.mxu0 0.0
    %2692 = vmatpush2.msra.mxu0 0.0
    %2693 = vmatprep.subr.mxu0 0.0
    %2694 = vmatpush2.msra.mxu0 0.0
    %2695 = vmatprep.subr.mxu0 0.0
    %2696 = vmatpush2.msra.mxu0 0.0
    %2697 = vmatprep.subr.mxu0 0.0
    %2698 = vmatpush2.msra.mxu0 0.0
    %2699 = vmatprep.subr.mxu0 0.0
    %2700 = vmatpush2.msra.mxu0 0.0
    %2701 = vmatprep.subr.mxu0 0.0
    %2702 = vmatpush2.msra.mxu0 0.0
    %2703 = vmatprep.subr.mxu0 0.0
    %2704 = vmatpush2.msra.mxu0 0.0
    %2705 = vmatprep.subr.mxu0 0.0
    %2706 = vmatpush2.msra.mxu0 0.0
    %2707 = vmatprep.subr.mxu0 0.0
    %2708 = vmatpush2.msra.mxu0 0.0
    %2709 = vmatprep.subr.mxu0 0.0
    %2710 = vmatpush2.msra.mxu0 0.0
    %2711 = vmatprep.subr.mxu0 0.0
    %2712 = vmatpush2.msra.mxu0 0.0
    %2713 = vmatprep.subr.mxu0 0.0
    %2714 = vmatpush2.msra.mxu0 0.0
    %2715 = vmatprep.subr.mxu0 0.0
    %2716 = vmatpush2.msra.mxu0 0.0
    %2717 = vmatprep.mubr.f32.mxu0 0.0
    %2718 = vmatmul.mubr.f32.gmra.mxu0 %v2466
    %v2719 = vpop.f32.mrf.mxu0
    %v2720 = vadd.f32 0.0, %v2719
    %v2721 = vpop.f32.mrf.mxu0
    %2722 = vdwg.mxu0
    %s2723 = scalar_lea.vmem %s7, 128
    %v2724 = vld [vmem:[%s2723] sm:$0xff]
    %v2725 = vld [vmem:[%s2723 + $0x8] sm:$0xff]
    %v2726 = vld [vmem:[%s2723 + $0x10] sm:$0xff]
    %v2727 = vld [vmem:[%s2723 + $0x18] sm:$0xff]
    %v2728 = vld [vmem:[%s2723 + $0x20] sm:$0xff]
    %v2729 = vld [vmem:[%s2723 + $0x28] sm:$0xff]
    %v2730 = vld [vmem:[%s2723 + $0x30] sm:$0xff]
    %v2731 = vld [vmem:[%s2723 + $0x38] sm:$0xff]
    %v2732 = vld [vmem:[%s2723 + $0x40] sm:$0xff]
    %v2733 = vld [vmem:[%s2723 + $0x48] sm:$0xff]
    %v2734 = vld [vmem:[%s2723 + $0x50] sm:$0xff]
    %v2735 = vld [vmem:[%s2723 + $0x58] sm:$0xff]
    %v2736 = vld [vmem:[%s2723 + $0x60] sm:$0xff]
    %v2737 = vld [vmem:[%s2723 + $0x68] sm:$0xff]
    %v2738 = vld [vmem:[%s2723 + $0x70] sm:$0xff]
    %v2739 = vld [vmem:[%s2723 + $0x78] sm:$0xff]
    %2740 = vmatprep.subr.mxu0 0.0
    %2741 = vmatpush1.msra.mxu0 %v2739
    %2742 = vmatprep.subr.mxu0 0.0
    %2743 = vmatpush1.msra.mxu0 %v2738
    %2744 = vmatprep.subr.mxu0 0.0
    %2745 = vmatpush1.msra.mxu0 %v2737
    %2746 = vmatprep.subr.mxu0 0.0
    %2747 = vmatpush1.msra.mxu0 %v2736
    %2748 = vmatprep.subr.mxu0 0.0
    %2749 = vmatpush1.msra.mxu0 %v2735
    %2750 = vmatprep.subr.mxu0 0.0
    %2751 = vmatpush1.msra.mxu0 %v2734
    %2752 = vmatprep.subr.mxu0 0.0
    %2753 = vmatpush1.msra.mxu0 %v2733
    %2754 = vmatprep.subr.mxu0 0.0
    %2755 = vmatpush1.msra.mxu0 %v2732
    %2756 = vmatprep.subr.mxu0 0.0
    %2757 = vmatpush1.msra.mxu0 %v2731
    %2758 = vmatprep.subr.mxu0 0.0
    %2759 = vmatpush1.msra.mxu0 %v2730
    %2760 = vmatprep.subr.mxu0 0.0
    %2761 = vmatpush1.msra.mxu0 %v2729
    %2762 = vmatprep.subr.mxu0 0.0
    %2763 = vmatpush1.msra.mxu0 %v2728
    %2764 = vmatprep.subr.mxu0 0.0
    %2765 = vmatpush1.msra.mxu0 %v2727
    %2766 = vmatprep.subr.mxu0 0.0
    %2767 = vmatpush1.msra.mxu0 %v2726
    %2768 = vmatprep.subr.mxu0 0.0
    %2769 = vmatpush1.msra.mxu0 %v2725
    %2770 = vmatprep.subr.mxu0 0.0
    %2771 = vmatpush1.msra.mxu0 %v2724
    %2772 = vmatprep.subr.mxu0 0.0
    %2773 = vmatpush2.msra.mxu0 0.0
    %2774 = vmatprep.subr.mxu0 0.0
    %2775 = vmatpush2.msra.mxu0 0.0
    %2776 = vmatprep.subr.mxu0 0.0
    %2777 = vmatpush2.msra.mxu0 0.0
    %2778 = vmatprep.subr.mxu0 0.0
    %2779 = vmatpush2.msra.mxu0 0.0
    %2780 = vmatprep.subr.mxu0 0.0
    %2781 = vmatpush2.msra.mxu0 0.0
    %2782 = vmatprep.subr.mxu0 0.0
    %2783 = vmatpush2.msra.mxu0 0.0
    %2784 = vmatprep.subr.mxu0 0.0
    %2785 = vmatpush2.msra.mxu0 0.0
    %2786 = vmatprep.subr.mxu0 0.0
    %2787 = vmatpush2.msra.mxu0 0.0
    %2788 = vmatprep.subr.mxu0 0.0
    %2789 = vmatpush2.msra.mxu0 0.0
    %2790 = vmatprep.subr.mxu0 0.0
    %2791 = vmatpush2.msra.mxu0 0.0
    %2792 = vmatprep.subr.mxu0 0.0
    %2793 = vmatpush2.msra.mxu0 0.0
    %2794 = vmatprep.subr.mxu0 0.0
    %2795 = vmatpush2.msra.mxu0 0.0
    %2796 = vmatprep.subr.mxu0 0.0
    %2797 = vmatpush2.msra.mxu0 0.0
    %2798 = vmatprep.subr.mxu0 0.0
    %2799 = vmatpush2.msra.mxu0 0.0
    %2800 = vmatprep.subr.mxu0 0.0
    %2801 = vmatpush2.msra.mxu0 0.0
    %2802 = vmatprep.subr.mxu0 0.0
    %2803 = vmatpush2.msra.mxu0 0.0
    %2804 = vmatprep.mubr.f32.mxu0 0.0
    %2805 = vmatmul.mubr.f32.gmra.mxu0 %v2720
    %v2806 = vpop.f32.mrf.mxu0
    %v2807 = vadd.f32 0.0, %v2806
    %v2808 = vpop.f32.mrf.mxu0
    %2809 = vdwg.mxu0
    %v2810 = vadd.f32 %v2634, %v2807
    %v2811 = vld [vmem:[#allocation3 + $0x8] sm:$0xff]
    %v2812 = vld [vmem:[#allocation3 + $0x10] sm:$0xff]
    %v2813 = vld [vmem:[#allocation3 + $0x18] sm:$0xff]
    %v2814 = vld [vmem:[#allocation3 + $0x20] sm:$0xff]
    %v2815 = vld [vmem:[#allocation3 + $0x28] sm:$0x1]
    %v2816 = vld [vmem:[#allocation3 + $0xa] sm:$0xff]
    %v2817 = vld [vmem:[#allocation3 + $0x12] sm:$0xff]
    %v2818 = vld [vmem:[#allocation3 + $0x1a] sm:$0xff]
    %v2819 = vld [vmem:[#allocation3 + $0x22] sm:$0xff]
    %v2820 = vld [vmem:[#allocation3 + $0x2a] sm:$0x1]
    %v2821 = vmax.f32 %v2811, %v2816
    %v2822 = vmax.f32 %v2812, %v2817
    %v2823 = vmax.f32 %v2813, %v2818
    %v2824 = vmax.f32 %v2814, %v2819
    %v2825 = vmax.f32 %v2815, %v2820
    %v2827 = vsel %vm2468, %v2825, 0
    %2829 = vmatprep.subr.mxu0 0.0
    %2830 = vmatpush1.msra.mxu0 0.0
    %2831 = vmatprep.subr.mxu0 0.0
    %2832 = vmatpush1.msra.mxu0 0.0
    %2833 = vmatprep.subr.mxu0 0.0
    %2834 = vmatpush1.msra.mxu0 0.0
    %2835 = vmatprep.subr.mxu0 0.0
    %2836 = vmatpush1.msra.mxu0 0.0
    %2837 = vmatprep.subr.mxu0 0.0
    %2838 = vmatpush1.msra.mxu0 0.0
    %2839 = vmatprep.subr.mxu0 0.0
    %2840 = vmatpush1.msra.mxu0 0.0
    %2841 = vmatprep.subr.mxu0 0.0
    %2842 = vmatpush1.msra.mxu0 0.0
    %2843 = vmatprep.subr.mxu0 0.0
    %2844 = vmatpush1.msra.mxu0 0.0
    %2845 = vmatprep.subr.mxu0 0.0
    %2846 = vmatpush1.msra.mxu0 0.0
    %2847 = vmatprep.subr.mxu0 0.0
    %2848 = vmatpush1.msra.mxu0 0.0
    %2849 = vmatprep.subr.mxu0 0.0
    %2850 = vmatpush1.msra.mxu0 0.0
    %2851 = vmatprep.subr.mxu0 0.0
    %2852 = vmatpush1.msra.mxu0 %v2827
    %2853 = vmatprep.subr.mxu0 0.0
    %2854 = vmatpush1.msra.mxu0 %v2824
    %2855 = vmatprep.subr.mxu0 0.0
    %2856 = vmatpush1.msra.mxu0 %v2823
    %2857 = vmatprep.subr.mxu0 0.0
    %2858 = vmatpush1.msra.mxu0 %v2822
    %2859 = vmatprep.subr.mxu0 0.0
    %2860 = vmatpush1.msra.mxu0 %v2821
    %2861 = vmatprep.subr.mxu0 0.0
    %2862 = vmatpush2.msra.mxu0 0.0
    %2863 = vmatprep.subr.mxu0 0.0
    %2864 = vmatpush2.msra.mxu0 0.0
    %2865 = vmatprep.subr.mxu0 0.0
    %2866 = vmatpush2.msra.mxu0 0.0
    %2867 = vmatprep.subr.mxu0 0.0
    %2868 = vmatpush2.msra.mxu0 0.0
    %2869 = vmatprep.subr.mxu0 0.0
    %2870 = vmatpush2.msra.mxu0 0.0
    %2871 = vmatprep.subr.mxu0 0.0
    %2872 = vmatpush2.msra.mxu0 0.0
    %2873 = vmatprep.subr.mxu0 0.0
    %2874 = vmatpush2.msra.mxu0 0.0
    %2875 = vmatprep.subr.mxu0 0.0
    %2876 = vmatpush2.msra.mxu0 0.0
    %2877 = vmatprep.subr.mxu0 0.0
    %2878 = vmatpush2.msra.mxu0 0.0
    %2879 = vmatprep.subr.mxu0 0.0
    %2880 = vmatpush2.msra.mxu0 0.0
    %2881 = vmatprep.subr.mxu0 0.0
    %2882 = vmatpush2.msra.mxu0 0.0
    %2883 = vmatprep.subr.mxu0 0.0
    %2884 = vmatpush2.msra.mxu0 0.0
    %2885 = vmatprep.subr.mxu0 0.0
    %2886 = vmatpush2.msra.mxu0 0.0
    %2887 = vmatprep.subr.mxu0 0.0
    %2888 = vmatpush2.msra.mxu0 0.0
    %2889 = vmatprep.subr.mxu0 0.0
    %2890 = vmatpush2.msra.mxu0 0.0
    %2891 = vmatprep.subr.mxu0 0.0
    %2892 = vmatpush2.msra.mxu0 0.0
    %2893 = vmatprep.mubr.f32.mxu0 0.0
    %2894 = vmatmul.mubr.f32.gmra.mxu0 %v2466
    %v2895 = vpop.f32.mrf.mxu0
    %v2896 = vadd.f32 0.0, %v2895
    %v2897 = vpop.f32.mrf.mxu0
    %2898 = vdwg.mxu0
    %s2899 = scalar_lea.vmem %s7, 256
    %v2900 = vld [vmem:[%s2899] sm:$0xff]
    %v2901 = vld [vmem:[%s2899 + $0x8] sm:$0xff]
    %v2902 = vld [vmem:[%s2899 + $0x10] sm:$0xff]
    %v2903 = vld [vmem:[%s2899 + $0x18] sm:$0xff]
    %v2904 = vld [vmem:[%s2899 + $0x20] sm:$0xff]
    %v2905 = vld [vmem:[%s2899 + $0x28] sm:$0xff]
    %v2906 = vld [vmem:[%s2899 + $0x30] sm:$0xff]
    %v2907 = vld [vmem:[%s2899 + $0x38] sm:$0xff]
    %v2908 = vld [vmem:[%s2899 + $0x40] sm:$0xff]
    %v2909 = vld [vmem:[%s2899 + $0x48] sm:$0xff]
    %v2910 = vld [vmem:[%s2899 + $0x50] sm:$0xff]
    %v2911 = vld [vmem:[%s2899 + $0x58] sm:$0xff]
    %v2912 = vld [vmem:[%s2899 + $0x60] sm:$0xff]
    %v2913 = vld [vmem:[%s2899 + $0x68] sm:$0xff]
    %v2914 = vld [vmem:[%s2899 + $0x70] sm:$0xff]
    %v2915 = vld [vmem:[%s2899 + $0x78] sm:$0xff]
    %2916 = vmatprep.subr.mxu0 0.0
    %2917 = vmatpush1.msra.mxu0 %v2915
    %2918 = vmatprep.subr.mxu0 0.0
    %2919 = vmatpush1.msra.mxu0 %v2914
    %2920 = vmatprep.subr.mxu0 0.0
    %2921 = vmatpush1.msra.mxu0 %v2913
    %2922 = vmatprep.subr.mxu0 0.0
    %2923 = vmatpush1.msra.mxu0 %v2912
    %2924 = vmatprep.subr.mxu0 0.0
    %2925 = vmatpush1.msra.mxu0 %v2911
    %2926 = vmatprep.subr.mxu0 0.0
    %2927 = vmatpush1.msra.mxu0 %v2910
    %2928 = vmatprep.subr.mxu0 0.0
    %2929 = vmatpush1.msra.mxu0 %v2909
    %2930 = vmatprep.subr.mxu0 0.0
    %2931 = vmatpush1.msra.mxu0 %v2908
    %2932 = vmatprep.subr.mxu0 0.0
    %2933 = vmatpush1.msra.mxu0 %v2907
    %2934 = vmatprep.subr.mxu0 0.0
    %2935 = vmatpush1.msra.mxu0 %v2906
    %2936 = vmatprep.subr.mxu0 0.0
    %2937 = vmatpush1.msra.mxu0 %v2905
    %2938 = vmatprep.subr.mxu0 0.0
    %2939 = vmatpush1.msra.mxu0 %v2904
    %2940 = vmatprep.subr.mxu0 0.0
    %2941 = vmatpush1.msra.mxu0 %v2903
    %2942 = vmatprep.subr.mxu0 0.0
    %2943 = vmatpush1.msra.mxu0 %v2902
    %2944 = vmatprep.subr.mxu0 0.0
    %2945 = vmatpush1.msra.mxu0 %v2901
    %2946 = vmatprep.subr.mxu0 0.0
    %2947 = vmatpush1.msra.mxu0 %v2900
    %2948 = vmatprep.subr.mxu0 0.0
    %2949 = vmatpush2.msra.mxu0 0.0
    %2950 = vmatprep.subr.mxu0 0.0
    %2951 = vmatpush2.msra.mxu0 0.0
    %2952 = vmatprep.subr.mxu0 0.0
    %2953 = vmatpush2.msra.mxu0 0.0
    %2954 = vmatprep.subr.mxu0 0.0
    %2955 = vmatpush2.msra.mxu0 0.0
    %2956 = vmatprep.subr.mxu0 0.0
    %2957 = vmatpush2.msra.mxu0 0.0
    %2958 = vmatprep.subr.mxu0 0.0
    %2959 = vmatpush2.msra.mxu0 0.0
    %2960 = vmatprep.subr.mxu0 0.0
    %2961 = vmatpush2.msra.mxu0 0.0
    %2962 = vmatprep.subr.mxu0 0.0
    %2963 = vmatpush2.msra.mxu0 0.0
    %2964 = vmatprep.subr.mxu0 0.0
    %2965 = vmatpush2.msra.mxu0 0.0
    %2966 = vmatprep.subr.mxu0 0.0
    %2967 = vmatpush2.msra.mxu0 0.0
    %2968 = vmatprep.subr.mxu0 0.0
    %2969 = vmatpush2.msra.mxu0 0.0
    %2970 = vmatprep.subr.mxu0 0.0
    %2971 = vmatpush2.msra.mxu0 0.0
    %2972 = vmatprep.subr.mxu0 0.0
    %2973 = vmatpush2.msra.mxu0 0.0
    %2974 = vmatprep.subr.mxu0 0.0
    %2975 = vmatpush2.msra.mxu0 0.0
    %2976 = vmatprep.subr.mxu0 0.0
    %2977 = vmatpush2.msra.mxu0 0.0
    %2978 = vmatprep.subr.mxu0 0.0
    %2979 = vmatpush2.msra.mxu0 0.0
    %2980 = vmatprep.mubr.f32.mxu0 0.0
    %2981 = vmatmul.mubr.f32.gmra.mxu0 %v2896
    %v2982 = vpop.f32.mrf.mxu0
    %v2983 = vadd.f32 0.0, %v2982
    %v2984 = vpop.f32.mrf.mxu0
    %2985 = vdwg.mxu0
    %v2986 = vadd.f32 %v2810, %v2983
    %v2987 = vld [vmem:[#allocation3 + $0xc] sm:$0xff]
    %v2988 = vld [vmem:[#allocation3 + $0x14] sm:$0xff]
    %v2989 = vld [vmem:[#allocation3 + $0x1c] sm:$0xff]
    %v2990 = vld [vmem:[#allocation3 + $0x24] sm:$0xff]
    %v2991 = vld [vmem:[#allocation3 + $0x2c] sm:$0x1]
    %v2992 = vld [vmem:[#allocation3 + $0xe] sm:$0xff]
    %v2993 = vld [vmem:[#allocation3 + $0x16] sm:$0xff]
    %v2994 = vld [vmem:[#allocation3 + $0x1e] sm:$0xff]
    %v2995 = vld [vmem:[#allocation3 + $0x26] sm:$0xff]
    %v2996 = vld [vmem:[#allocation3 + $0x2e] sm:$0x1]
    %v2997 = vmax.f32 %v2987, %v2992
    %v2998 = vmax.f32 %v2988, %v2993
    %v2999 = vmax.f32 %v2989, %v2994
    %v3000 = vmax.f32 %v2990, %v2995
    %v3001 = vmax.f32 %v2991, %v2996
    %v3003 = vsel %vm2468, %v3001, 0
    %3005 = vmatprep.subr.mxu0 0.0
    %3006 = vmatpush1.msra.mxu0 0.0
    %3007 = vmatprep.subr.mxu0 0.0
    %3008 = vmatpush1.msra.mxu0 0.0
    %3009 = vmatprep.subr.mxu0 0.0
    %3010 = vmatpush1.msra.mxu0 0.0
    %3011 = vmatprep.subr.mxu0 0.0
    %3012 = vmatpush1.msra.mxu0 0.0
    %3013 = vmatprep.subr.mxu0 0.0
    %3014 = vmatpush1.msra.mxu0 0.0
    %3015 = vmatprep.subr.mxu0 0.0
    %3016 = vmatpush1.msra.mxu0 0.0
    %3017 = vmatprep.subr.mxu0 0.0
    %3018 = vmatpush1.msra.mxu0 0.0
    %3019 = vmatprep.subr.mxu0 0.0
    %3020 = vmatpush1.msra.mxu0 0.0
    %3021 = vmatprep.subr.mxu0 0.0
    %3022 = vmatpush1.msra.mxu0 0.0
    %3023 = vmatprep.subr.mxu0 0.0
    %3024 = vmatpush1.msra.mxu0 0.0
    %3025 = vmatprep.subr.mxu0 0.0
    %3026 = vmatpush1.msra.mxu0 0.0
    %3027 = vmatprep.subr.mxu0 0.0
    %3028 = vmatpush1.msra.mxu0 %v3003
    %3029 = vmatprep.subr.mxu0 0.0
    %3030 = vmatpush1.msra.mxu0 %v3000
    %3031 = vmatprep.subr.mxu0 0.0
    %3032 = vmatpush1.msra.mxu0 %v2999
    %3033 = vmatprep.subr.mxu0 0.0
    %3034 = vmatpush1.msra.mxu0 %v2998
    %3035 = vmatprep.subr.mxu0 0.0
    %3036 = vmatpush1.msra.mxu0 %v2997
    %3037 = vmatprep.subr.mxu0 0.0
    %3038 = vmatpush2.msra.mxu0 0.0
    %3039 = vmatprep.subr.mxu0 0.0
    %3040 = vmatpush2.msra.mxu0 0.0
    %3041 = vmatprep.subr.mxu0 0.0
    %3042 = vmatpush2.msra.mxu0 0.0
    %3043 = vmatprep.subr.mxu0 0.0
    %3044 = vmatpush2.msra.mxu0 0.0
    %3045 = vmatprep.subr.mxu0 0.0
    %3046 = vmatpush2.msra.mxu0 0.0
    %3047 = vmatprep.subr.mxu0 0.0
    %3048 = vmatpush2.msra.mxu0 0.0
    %3049 = vmatprep.subr.mxu0 0.0
    %3050 = vmatpush2.msra.mxu0 0.0
    %3051 = vmatprep.subr.mxu0 0.0
    %3052 = vmatpush2.msra.mxu0 0.0
    %3053 = vmatprep.subr.mxu0 0.0
    %3054 = vmatpush2.msra.mxu0 0.0
    %3055 = vmatprep.subr.mxu0 0.0
    %3056 = vmatpush2.msra.mxu0 0.0
    %3057 = vmatprep.subr.mxu0 0.0
    %3058 = vmatpush2.msra.mxu0 0.0
    %3059 = vmatprep.subr.mxu0 0.0
    %3060 = vmatpush2.msra.mxu0 0.0
    %3061 = vmatprep.subr.mxu0 0.0
    %3062 = vmatpush2.msra.mxu0 0.0
    %3063 = vmatprep.subr.mxu0 0.0
    %3064 = vmatpush2.msra.mxu0 0.0
    %3065 = vmatprep.subr.mxu0 0.0
    %3066 = vmatpush2.msra.mxu0 0.0
    %3067 = vmatprep.subr.mxu0 0.0
    %3068 = vmatpush2.msra.mxu0 0.0
    %3069 = vmatprep.mubr.f32.mxu0 0.0
    %3070 = vmatmul.mubr.f32.gmra.mxu0 %v2466
    %v3071 = vpop.f32.mrf.mxu0
    %v3072 = vadd.f32 0.0, %v3071
    %v3073 = vpop.f32.mrf.mxu0
    %3074 = vdwg.mxu0
    %s3075 = scalar_lea.vmem %s7, 384
    %v3076 = vld [vmem:[%s3075] sm:$0xff]
    %v3077 = vld [vmem:[%s3075 + $0x8] sm:$0xff]
    %v3078 = vld [vmem:[%s3075 + $0x10] sm:$0xff]
    %v3079 = vld [vmem:[%s3075 + $0x18] sm:$0xff]
    %v3080 = vld [vmem:[%s3075 + $0x20] sm:$0xff]
    %v3081 = vld [vmem:[%s3075 + $0x28] sm:$0xff]
    %v3082 = vld [vmem:[%s3075 + $0x30] sm:$0xff]
    %v3083 = vld [vmem:[%s3075 + $0x38] sm:$0xff]
    %v3084 = vld [vmem:[%s3075 + $0x40] sm:$0xff]
    %v3085 = vld [vmem:[%s3075 + $0x48] sm:$0xff]
    %v3086 = vld [vmem:[%s3075 + $0x50] sm:$0xff]
    %v3087 = vld [vmem:[%s3075 + $0x58] sm:$0xff]
    %v3088 = vld [vmem:[%s3075 + $0x60] sm:$0xff]
    %v3089 = vld [vmem:[%s3075 + $0x68] sm:$0xff]
    %v3090 = vld [vmem:[%s3075 + $0x70] sm:$0xff]
    %v3091 = vld [vmem:[%s3075 + $0x78] sm:$0xff]
    %3092 = vmatprep.subr.mxu0 0.0
    %3093 = vmatpush1.msra.mxu0 %v3091
    %3094 = vmatprep.subr.mxu0 0.0
    %3095 = vmatpush1.msra.mxu0 %v3090
    %3096 = vmatprep.subr.mxu0 0.0
    %3097 = vmatpush1.msra.mxu0 %v3089
    %3098 = vmatprep.subr.mxu0 0.0
    %3099 = vmatpush1.msra.mxu0 %v3088
    %3100 = vmatprep.subr.mxu0 0.0
    %3101 = vmatpush1.msra.mxu0 %v3087
    %3102 = vmatprep.subr.mxu0 0.0
    %3103 = vmatpush1.msra.mxu0 %v3086
    %3104 = vmatprep.subr.mxu0 0.0
    %3105 = vmatpush1.msra.mxu0 %v3085
    %3106 = vmatprep.subr.mxu0 0.0
    %3107 = vmatpush1.msra.mxu0 %v3084
    %3108 = vmatprep.subr.mxu0 0.0
    %3109 = vmatpush1.msra.mxu0 %v3083
    %3110 = vmatprep.subr.mxu0 0.0
    %3111 = vmatpush1.msra.mxu0 %v3082
    %3112 = vmatprep.subr.mxu0 0.0
    %3113 = vmatpush1.msra.mxu0 %v3081
    %3114 = vmatprep.subr.mxu0 0.0
    %3115 = vmatpush1.msra.mxu0 %v3080
    %3116 = vmatprep.subr.mxu0 0.0
    %3117 = vmatpush1.msra.mxu0 %v3079
    %3118 = vmatprep.subr.mxu0 0.0
    %3119 = vmatpush1.msra.mxu0 %v3078
    %3120 = vmatprep.subr.mxu0 0.0
    %3121 = vmatpush1.msra.mxu0 %v3077
    %3122 = vmatprep.subr.mxu0 0.0
    %3123 = vmatpush1.msra.mxu0 %v3076
    %3124 = vmatprep.subr.mxu0 0.0
    %3125 = vmatpush2.msra.mxu0 0.0
    %3126 = vmatprep.subr.mxu0 0.0
    %3127 = vmatpush2.msra.mxu0 0.0
    %3128 = vmatprep.subr.mxu0 0.0
    %3129 = vmatpush2.msra.mxu0 0.0
    %3130 = vmatprep.subr.mxu0 0.0
    %3131 = vmatpush2.msra.mxu0 0.0
    %3132 = vmatprep.subr.mxu0 0.0
    %3133 = vmatpush2.msra.mxu0 0.0
    %3134 = vmatprep.subr.mxu0 0.0
    %3135 = vmatpush2.msra.mxu0 0.0
    %3136 = vmatprep.subr.mxu0 0.0
    %3137 = vmatpush2.msra.mxu0 0.0
    %3138 = vmatprep.subr.mxu0 0.0
    %3139 = vmatpush2.msra.mxu0 0.0
    %3140 = vmatprep.subr.mxu0 0.0
    %3141 = vmatpush2.msra.mxu0 0.0
    %3142 = vmatprep.subr.mxu0 0.0
    %3143 = vmatpush2.msra.mxu0 0.0
    %3144 = vmatprep.subr.mxu0 0.0
    %3145 = vmatpush2.msra.mxu0 0.0
    %3146 = vmatprep.subr.mxu0 0.0
    %3147 = vmatpush2.msra.mxu0 0.0
    %3148 = vmatprep.subr.mxu0 0.0
    %3149 = vmatpush2.msra.mxu0 0.0
    %3150 = vmatprep.subr.mxu0 0.0
    %3151 = vmatpush2.msra.mxu0 0.0
    %3152 = vmatprep.subr.mxu0 0.0
    %3153 = vmatpush2.msra.mxu0 0.0
    %3154 = vmatprep.subr.mxu0 0.0
    %3155 = vmatpush2.msra.mxu0 0.0
    %3156 = vmatprep.mubr.f32.mxu0 0.0
    %3157 = vmatmul.mubr.f32.gmra.mxu0 %v3072
    %v3158 = vpop.f32.mrf.mxu0
    %v3159 = vadd.f32 0.0, %v3158
    %v3160 = vpop.f32.mrf.mxu0
    %3161 = vdwg.mxu0
    %v3162 = vadd.f32 %v2986, %v3159
    %v3163 = vld [vmem:[#allocation3 + $0x10] sm:$0xff]
    %v3164 = vld [vmem:[#allocation3 + $0x18] sm:$0xff]
    %v3165 = vld [vmem:[#allocation3 + $0x20] sm:$0xff]
    %v3166 = vld [vmem:[#allocation3 + $0x28] sm:$0xff]
    %v3167 = vld [vmem:[#allocation3 + $0x30] sm:$0x1]
    %v3168 = vld [vmem:[#allocation3 + $0x12] sm:$0xff]
    %v3169 = vld [vmem:[#allocation3 + $0x1a] sm:$0xff]
    %v3170 = vld [vmem:[#allocation3 + $0x22] sm:$0xff]
    %v3171 = vld [vmem:[#allocation3 + $0x2a] sm:$0xff]
    %v3172 = vld [vmem:[#allocation3 + $0x32] sm:$0x1]
    %v3173 = vmax.f32 %v3163, %v3168
    %v3174 = vmax.f32 %v3164, %v3169
    %v3175 = vmax.f32 %v3165, %v3170
    %v3176 = vmax.f32 %v3166, %v3171
    %v3177 = vmax.f32 %v3167, %v3172
    %v3179 = vsel %vm2468, %v3177, 0
    %3181 = vmatprep.subr.mxu0 0.0
    %3182 = vmatpush1.msra.mxu0 0.0
    %3183 = vmatprep.subr.mxu0 0.0
    %3184 = vmatpush1.msra.mxu0 0.0
    %3185 = vmatprep.subr.mxu0 0.0
    %3186 = vmatpush1.msra.mxu0 0.0
    %3187 = vmatprep.subr.mxu0 0.0
    %3188 = vmatpush1.msra.mxu0 0.0
    %3189 = vmatprep.subr.mxu0 0.0
    %3190 = vmatpush1.msra.mxu0 0.0
    %3191 = vmatprep.subr.mxu0 0.0
    %3192 = vmatpush1.msra.mxu0 0.0
    %3193 = vmatprep.subr.mxu0 0.0
    %3194 = vmatpush1.msra.mxu0 0.0
    %3195 = vmatprep.subr.mxu0 0.0
    %3196 = vmatpush1.msra.mxu0 0.0
    %3197 = vmatprep.subr.mxu0 0.0
    %3198 = vmatpush1.msra.mxu0 0.0
    %3199 = vmatprep.subr.mxu0 0.0
    %3200 = vmatpush1.msra.mxu0 0.0
    %3201 = vmatprep.subr.mxu0 0.0
    %3202 = vmatpush1.msra.mxu0 0.0
    %3203 = vmatprep.subr.mxu0 0.0
    %3204 = vmatpush1.msra.mxu0 %v3179
    %3205 = vmatprep.subr.mxu0 0.0
    %3206 = vmatpush1.msra.mxu0 %v3176
    %3207 = vmatprep.subr.mxu0 0.0
    %3208 = vmatpush1.msra.mxu0 %v3175
    %3209 = vmatprep.subr.mxu0 0.0
    %3210 = vmatpush1.msra.mxu0 %v3174
    %3211 = vmatprep.subr.mxu0 0.0
    %3212 = vmatpush1.msra.mxu0 %v3173
    %3213 = vmatprep.subr.mxu0 0.0
    %3214 = vmatpush2.msra.mxu0 0.0
    %3215 = vmatprep.subr.mxu0 0.0
    %3216 = vmatpush2.msra.mxu0 0.0
    %3217 = vmatprep.subr.mxu0 0.0
    %3218 = vmatpush2.msra.mxu0 0.0
    %3219 = vmatprep.subr.mxu0 0.0
    %3220 = vmatpush2.msra.mxu0 0.0
    %3221 = vmatprep.subr.mxu0 0.0
    %3222 = vmatpush2.msra.mxu0 0.0
    %3223 = vmatprep.subr.mxu0 0.0
    %3224 = vmatpush2.msra.mxu0 0.0
    %3225 = vmatprep.subr.mxu0 0.0
    %3226 = vmatpush2.msra.mxu0 0.0
    %3227 = vmatprep.subr.mxu0 0.0
    %3228 = vmatpush2.msra.mxu0 0.0
    %3229 = vmatprep.subr.mxu0 0.0
    %3230 = vmatpush2.msra.mxu0 0.0
    %3231 = vmatprep.subr.mxu0 0.0
    %3232 = vmatpush2.msra.mxu0 0.0
    %3233 = vmatprep.subr.mxu0 0.0
    %3234 = vmatpush2.msra.mxu0 0.0
    %3235 = vmatprep.subr.mxu0 0.0
    %3236 = vmatpush2.msra.mxu0 0.0
    %3237 = vmatprep.subr.mxu0 0.0
    %3238 = vmatpush2.msra.mxu0 0.0
    %3239 = vmatprep.subr.mxu0 0.0
    %3240 = vmatpush2.msra.mxu0 0.0
    %3241 = vmatprep.subr.mxu0 0.0
    %3242 = vmatpush2.msra.mxu0 0.0
    %3243 = vmatprep.subr.mxu0 0.0
    %3244 = vmatpush2.msra.mxu0 0.0
    %3245 = vmatprep.mubr.f32.mxu0 0.0
    %3246 = vmatmul.mubr.f32.gmra.mxu0 %v2466
    %v3247 = vpop.f32.mrf.mxu0
    %v3248 = vadd.f32 0.0, %v3247
    %v3249 = vpop.f32.mrf.mxu0
    %3250 = vdwg.mxu0
    %s3251 = scalar_lea.vmem %s7, 512
    %v3252 = vld [vmem:[%s3251] sm:$0xff]
    %v3253 = vld [vmem:[%s3251 + $0x8] sm:$0xff]
    %v3254 = vld [vmem:[%s3251 + $0x10] sm:$0xff]
    %v3255 = vld [vmem:[%s3251 + $0x18] sm:$0xff]
    %v3256 = vld [vmem:[%s3251 + $0x20] sm:$0xff]
    %v3257 = vld [vmem:[%s3251 + $0x28] sm:$0xff]
    %v3258 = vld [vmem:[%s3251 + $0x30] sm:$0xff]
    %v3259 = vld [vmem:[%s3251 + $0x38] sm:$0xff]
    %v3260 = vld [vmem:[%s3251 + $0x40] sm:$0xff]
    %v3261 = vld [vmem:[%s3251 + $0x48] sm:$0xff]
    %v3262 = vld [vmem:[%s3251 + $0x50] sm:$0xff]
    %v3263 = vld [vmem:[%s3251 + $0x58] sm:$0xff]
    %v3264 = vld [vmem:[%s3251 + $0x60] sm:$0xff]
    %v3265 = vld [vmem:[%s3251 + $0x68] sm:$0xff]
    %v3266 = vld [vmem:[%s3251 + $0x70] sm:$0xff]
    %v3267 = vld [vmem:[%s3251 + $0x78] sm:$0xff]
    %3268 = vmatprep.subr.mxu0 0.0
    %3269 = vmatpush1.msra.mxu0 %v3267
    %3270 = vmatprep.subr.mxu0 0.0
    %3271 = vmatpush1.msra.mxu0 %v3266
    %3272 = vmatprep.subr.mxu0 0.0
    %3273 = vmatpush1.msra.mxu0 %v3265
    %3274 = vmatprep.subr.mxu0 0.0
    %3275 = vmatpush1.msra.mxu0 %v3264
    %3276 = vmatprep.subr.mxu0 0.0
    %3277 = vmatpush1.msra.mxu0 %v3263
    %3278 = vmatprep.subr.mxu0 0.0
    %3279 = vmatpush1.msra.mxu0 %v3262
    %3280 = vmatprep.subr.mxu0 0.0
    %3281 = vmatpush1.msra.mxu0 %v3261
    %3282 = vmatprep.subr.mxu0 0.0
    %3283 = vmatpush1.msra.mxu0 %v3260
    %3284 = vmatprep.subr.mxu0 0.0
    %3285 = vmatpush1.msra.mxu0 %v3259
    %3286 = vmatprep.subr.mxu0 0.0
    %3287 = vmatpush1.msra.mxu0 %v3258
    %3288 = vmatprep.subr.mxu0 0.0
    %3289 = vmatpush1.msra.mxu0 %v3257
    %3290 = vmatprep.subr.mxu0 0.0
    %3291 = vmatpush1.msra.mxu0 %v3256
    %3292 = vmatprep.subr.mxu0 0.0
    %3293 = vmatpush1.msra.mxu0 %v3255
    %3294 = vmatprep.subr.mxu0 0.0
    %3295 = vmatpush1.msra.mxu0 %v3254
    %3296 = vmatprep.subr.mxu0 0.0
    %3297 = vmatpush1.msra.mxu0 %v3253
    %3298 = vmatprep.subr.mxu0 0.0
    %3299 = vmatpush1.msra.mxu0 %v3252
    %3300 = vmatprep.subr.mxu0 0.0
    %3301 = vmatpush2.msra.mxu0 0.0
    %3302 = vmatprep.subr.mxu0 0.0
    %3303 = vmatpush2.msra.mxu0 0.0
    %3304 = vmatprep.subr.mxu0 0.0
    %3305 = vmatpush2.msra.mxu0 0.0
    %3306 = vmatprep.subr.mxu0 0.0
    %3307 = vmatpush2.msra.mxu0 0.0
    %3308 = vmatprep.subr.mxu0 0.0
    %3309 = vmatpush2.msra.mxu0 0.0
    %3310 = vmatprep.subr.mxu0 0.0
    %3311 = vmatpush2.msra.mxu0 0.0
    %3312 = vmatprep.subr.mxu0 0.0
    %3313 = vmatpush2.msra.mxu0 0.0
    %3314 = vmatprep.subr.mxu0 0.0
    %3315 = vmatpush2.msra.mxu0 0.0
    %3316 = vmatprep.subr.mxu0 0.0
    %3317 = vmatpush2.msra.mxu0 0.0
    %3318 = vmatprep.subr.mxu0 0.0
    %3319 = vmatpush2.msra.mxu0 0.0
    %3320 = vmatprep.subr.mxu0 0.0
    %3321 = vmatpush2.msra.mxu0 0.0
    %3322 = vmatprep.subr.mxu0 0.0
    %3323 = vmatpush2.msra.mxu0 0.0
    %3324 = vmatprep.subr.mxu0 0.0
    %3325 = vmatpush2.msra.mxu0 0.0
    %3326 = vmatprep.subr.mxu0 0.0
    %3327 = vmatpush2.msra.mxu0 0.0
    %3328 = vmatprep.subr.mxu0 0.0
    %3329 = vmatpush2.msra.mxu0 0.0
    %3330 = vmatprep.subr.mxu0 0.0
    %3331 = vmatpush2.msra.mxu0 0.0
    %3332 = vmatprep.mubr.f32.mxu0 0.0
    %3333 = vmatmul.mubr.f32.gmra.mxu0 %v3248
    %v3334 = vpop.f32.mrf.mxu0
    %v3335 = vadd.f32 0.0, %v3334
    %v3336 = vpop.f32.mrf.mxu0
    %3337 = vdwg.mxu0
    %v3338 = vadd.f32 %v3162, %v3335
    %v3339 = vmax.f32 %v3338, 0.0
    %v3340 = vld [vmem:[%s9] sm:$0xff]
    %v3341 = vld [vmem:[%s9 + $0x8] sm:$0xff]
    %v3342 = vld [vmem:[%s9 + $0x10] sm:$0xff]
    %v3343 = vld [vmem:[%s9 + $0x18] sm:$0xff]
    %v3344 = vld [vmem:[%s9 + $0x20] sm:$0xff]
    %v3345 = vld [vmem:[%s9 + $0x28] sm:$0xff]
    %v3346 = vld [vmem:[%s9 + $0x30] sm:$0xff]
    %v3347 = vld [vmem:[%s9 + $0x38] sm:$0xff]
    %v3348 = vld [vmem:[%s9 + $0x40] sm:$0xff]
    %v3349 = vld [vmem:[%s9 + $0x48] sm:$0xff]
    %v3350 = vld [vmem:[%s9 + $0x50] sm:$0xff]
    %v3351 = vld [vmem:[%s9 + $0x58] sm:$0xff]
    %v3352 = vld [vmem:[%s9 + $0x60] sm:$0xff]
    %v3353 = vld [vmem:[%s9 + $0x68] sm:$0xff]
    %v3354 = vld [vmem:[%s9 + $0x70] sm:$0xff]
    %v3355 = vld [vmem:[%s9 + $0x78] sm:$0xff]
    %v3356 = vld [vmem:[%s10] sm:$0x1]
    %v3358 = vlaneseq
    %v3359 = vshrl.u32 %v3358, 7
    %v3360 = vsub.s32 0, %v3359
    %v3361 = vrot.slane %v3356, %v3360
    %3363 = vmatprep.subr.mxu0 0.0
    %3364 = vmatpush1.msra.mxu0 %v3355
    %3365 = vmatprep.subr.mxu0 0.0
    %3366 = vmatpush1.msra.mxu0 %v3354
    %3367 = vmatprep.subr.mxu0 0.0
    %3368 = vmatpush1.msra.mxu0 %v3353
    %3369 = vmatprep.subr.mxu0 0.0
    %3370 = vmatpush1.msra.mxu0 %v3352
    %3371 = vmatprep.subr.mxu0 0.0
    %3372 = vmatpush1.msra.mxu0 %v3351
    %3373 = vmatprep.subr.mxu0 0.0
    %3374 = vmatpush1.msra.mxu0 %v3350
    %3375 = vmatprep.subr.mxu0 0.0
    %3376 = vmatpush1.msra.mxu0 %v3349
    %3377 = vmatprep.subr.mxu0 0.0
    %3378 = vmatpush1.msra.mxu0 %v3348
    %3379 = vmatprep.subr.mxu0 0.0
    %3380 = vmatpush1.msra.mxu0 %v3347
    %3381 = vmatprep.subr.mxu0 0.0
    %3382 = vmatpush1.msra.mxu0 %v3346
    %3383 = vmatprep.subr.mxu0 0.0
    %3384 = vmatpush1.msra.mxu0 %v3345
    %3385 = vmatprep.subr.mxu0 0.0
    %3386 = vmatpush1.msra.mxu0 %v3344
    %3387 = vmatprep.subr.mxu0 0.0
    %3388 = vmatpush1.msra.mxu0 %v3343
    %3389 = vmatprep.subr.mxu0 0.0
    %3390 = vmatpush1.msra.mxu0 %v3342
    %3391 = vmatprep.subr.mxu0 0.0
    %3392 = vmatpush1.msra.mxu0 %v3341
    %3393 = vmatprep.subr.mxu0 0.0
    %3394 = vmatpush1.msra.mxu0 %v3340
    %3395 = vmatprep.subr.mxu0 0.0
    %3396 = vmatpush2.msra.mxu0 0.0
    %3397 = vmatprep.subr.mxu0 0.0
    %3398 = vmatpush2.msra.mxu0 0.0
    %3399 = vmatprep.subr.mxu0 0.0
    %3400 = vmatpush2.msra.mxu0 0.0
    %3401 = vmatprep.subr.mxu0 0.0
    %3402 = vmatpush2.msra.mxu0 0.0
    %3403 = vmatprep.subr.mxu0 0.0
    %3404 = vmatpush2.msra.mxu0 0.0
    %3405 = vmatprep.subr.mxu0 0.0
    %3406 = vmatpush2.msra.mxu0 0.0
    %3407 = vmatprep.subr.mxu0 0.0
    %3408 = vmatpush2.msra.mxu0 0.0
    %3409 = vmatprep.subr.mxu0 0.0
    %3410 = vmatpush2.msra.mxu0 0.0
    %3411 = vmatprep.subr.mxu0 0.0
    %3412 = vmatpush2.msra.mxu0 0.0
    %3413 = vmatprep.subr.mxu0 0.0
    %3414 = vmatpush2.msra.mxu0 0.0
    %3415 = vmatprep.subr.mxu0 0.0
    %3416 = vmatpush2.msra.mxu0 0.0
    %3417 = vmatprep.subr.mxu0 0.0
    %3418 = vmatpush2.msra.mxu0 0.0
    %3419 = vmatprep.subr.mxu0 0.0
    %3420 = vmatpush2.msra.mxu0 0.0
    %3421 = vmatprep.subr.mxu0 0.0
    %3422 = vmatpush2.msra.mxu0 0.0
    %3423 = vmatprep.subr.mxu0 0.0
    %3424 = vmatpush2.msra.mxu0 0.0
    %3425 = vmatprep.subr.mxu0 0.0
    %3426 = vmatpush2.msra.mxu0 0.0
    %3427 = vmatprep.mubr.f32.mxu0 0.0
    %3428 = vmatmul.mubr.f32.gmra.mxu0 %v3339
    %v3429 = vpop.f32.mrf.mxu0
    %v3430 = vadd.f32 %v3361, %v3429
    %v3431 = vpop.f32.mrf.mxu0
    %3432 = vdwg.mxu0
    %v3433 = vmax.f32 %v3430, 0.0
    %v3434 = vld [vmem:[%s11] sm:$0xff]
    %v3435 = vld [vmem:[%s11 + $0x8] sm:$0xff]
    %v3436 = vld [vmem:[%s11 + $0x10] sm:$0xff]
    %v3437 = vld [vmem:[%s11 + $0x18] sm:$0xff]
    %v3438 = vld [vmem:[%s11 + $0x20] sm:$0xff]
    %v3439 = vld [vmem:[%s11 + $0x28] sm:$0xff]
    %v3440 = vld [vmem:[%s11 + $0x30] sm:$0xff]
    %v3441 = vld [vmem:[%s11 + $0x38] sm:$0xff]
    %v3442 = vld [vmem:[%s11 + $0x40] sm:$0xff]
    %v3443 = vld [vmem:[%s11 + $0x48] sm:$0xff]
    %v3444 = vld [vmem:[%s11 + $0x50] sm:$0xff]
    %v3445 = vld [vmem:[%s11 + $0x58] sm:$0xff]
    %v3446 = vld [vmem:[%s11 + $0x60] sm:$0xff]
    %v3447 = vld [vmem:[%s11 + $0x68] sm:$0xff]
    %v3448 = vld [vmem:[%s11 + $0x70] sm:$0xff]
    %v3449 = vld [vmem:[%s11 + $0x78] sm:$0xff]
    %v3450 = vld [vmem:[%s12] sm:$0x1]
    %v3452 = vlaneseq
    %v3453 = vshrl.u32 %v3452, 7
    %v3454 = vsub.s32 0, %v3453
    %v3455 = vrot.slane %v3450, %v3454
    %3457 = vmatprep.subr.mxu0 0.0
    %3458 = vmatpush1.msra.mxu0 %v3449
    %3459 = vmatprep.subr.mxu0 0.0
    %3460 = vmatpush1.msra.mxu0 %v3448
    %3461 = vmatprep.subr.mxu0 0.0
    %3462 = vmatpush1.msra.mxu0 %v3447
    %3463 = vmatprep.subr.mxu0 0.0
    %3464 = vmatpush1.msra.mxu0 %v3446
    %3465 = vmatprep.subr.mxu0 0.0
    %3466 = vmatpush1.msra.mxu0 %v3445
    %3467 = vmatprep.subr.mxu0 0.0
    %3468 = vmatpush1.msra.mxu0 %v3444
    %3469 = vmatprep.subr.mxu0 0.0
    %3470 = vmatpush1.msra.mxu0 %v3443
    %3471 = vmatprep.subr.mxu0 0.0
    %3472 = vmatpush1.msra.mxu0 %v3442
    %3473 = vmatprep.subr.mxu0 0.0
    %3474 = vmatpush1.msra.mxu0 %v3441
    %3475 = vmatprep.subr.mxu0 0.0
    %3476 = vmatpush1.msra.mxu0 %v3440
    %3477 = vmatprep.subr.mxu0 0.0
    %3478 = vmatpush1.msra.mxu0 %v3439
    %3479 = vmatprep.subr.mxu0 0.0
    %3480 = vmatpush1.msra.mxu0 %v3438
    %3481 = vmatprep.subr.mxu0 0.0
    %3482 = vmatpush1.msra.mxu0 %v3437
    %3483 = vmatprep.subr.mxu0 0.0
    %3484 = vmatpush1.msra.mxu0 %v3436
    %3485 = vmatprep.subr.mxu0 0.0
    %3486 = vmatpush1.msra.mxu0 %v3435
    %3487 = vmatprep.subr.mxu0 0.0
    %3488 = vmatpush1.msra.mxu0 %v3434
    %3489 = vmatprep.subr.mxu0 0.0
    %3490 = vmatpush2.msra.mxu0 0.0
    %3491 = vmatprep.subr.mxu0 0.0
    %3492 = vmatpush2.msra.mxu0 0.0
    %3493 = vmatprep.subr.mxu0 0.0
    %3494 = vmatpush2.msra.mxu0 0.0
    %3495 = vmatprep.subr.mxu0 0.0
    %3496 = vmatpush2.msra.mxu0 0.0
    %3497 = vmatprep.subr.mxu0 0.0
    %3498 = vmatpush2.msra.mxu0 0.0
    %3499 = vmatprep.subr.mxu0 0.0
    %3500 = vmatpush2.msra.mxu0 0.0
    %3501 = vmatprep.subr.mxu0 0.0
    %3502 = vmatpush2.msra.mxu0 0.0
    %3503 = vmatprep.subr.mxu0 0.0
    %3504 = vmatpush2.msra.mxu0 0.0
    %3505 = vmatprep.subr.mxu0 0.0
    %3506 = vmatpush2.msra.mxu0 0.0
    %3507 = vmatprep.subr.mxu0 0.0
    %3508 = vmatpush2.msra.mxu0 0.0
    %3509 = vmatprep.subr.mxu0 0.0
    %3510 = vmatpush2.msra.mxu0 0.0
    %3511 = vmatprep.subr.mxu0 0.0
    %3512 = vmatpush2.msra.mxu0 0.0
    %3513 = vmatprep.subr.mxu0 0.0
    %3514 = vmatpush2.msra.mxu0 0.0
    %3515 = vmatprep.subr.mxu0 0.0
    %3516 = vmatpush2.msra.mxu0 0.0
    %3517 = vmatprep.subr.mxu0 0.0
    %3518 = vmatpush2.msra.mxu0 0.0
    %3519 = vmatprep.subr.mxu0 0.0
    %3520 = vmatpush2.msra.mxu0 0.0
    %3521 = vmatprep.mubr.f32.mxu0 0.0
    %3522 = vmatmul.mubr.f32.gmra.mxu0 %v3433
    %v3523 = vpop.f32.mrf.mxu0
    %v3524 = vadd.f32 %v3455, %v3523
    %v3525 = vpop.f32.mrf.mxu0
    %3526 = vdwg.mxu0
    %3527 = vst [vmem:[#allocation4] sm:$0x3] %v3524
    // Predicated region
    $region58: #{fedavg_cnn_forward.1} parent=1 // pred_check
      _
    $region59: #{fedavg_cnn_forward.1} parent=1 // pred_check_branch
      %3529 = sbr.rel (0) target = $region61
    $region60: #{fedavg_cnn_forward.1} parent=1 // pred_region
      %s3531 = ssub.s32 32, 32
      %3532 = vsyncadd [#allocation5], %s3531
      %s3534 = sshll.u32 [#allocation4], 4
      %s3535 = int_to_ptr.vmem [resolvable:$true] %s3534
      %3537 = dma.vmem_to_hbm [thread:$0]  %s3535, 32, %s14, [#allocation5]
    $region61: #{fedavg_cnn_forward.1} parent=1 // pred_fallthru
      _
    // Predicated region
    $region62: #{fedavg_cnn_forward.1} parent=1 // pred_check
      _
    $region63: #{fedavg_cnn_forward.1} parent=1 // pred_check_branch
      %3539 = sbr.rel (0) target = $region65
    $region64: #{fedavg_cnn_forward.1} parent=1 // pred_region
      %3540 = dma.done [#allocation5], 32
    $region65: #{fedavg_cnn_forward.1} parent=1 // pred_fallthru
      _
    %3541 = vsyncpa [#allocation5], 1

</llo_original>
